<compile_context>
chip_gen: v5e
topology: v5e:2x2
jax: 0.10.0
libtpu: 0.0.40
codegen_flags: <defaults>
</compile_context>

<pallas_src>
import jax
import jax.numpy as jnp
from jax.experimental import pallas as pl
from jax.experimental.pallas import tpu as pltpu


# -----------------------------------------------------------------------------
# tiling helpers
# -----------------------------------------------------------------------------
def _pick_row_tile(n, target=256):
    """Largest multiple-of-8 divisor of n that is <= target (or n itself)."""
    if n <= target:
        return n
    t = (target // 8) * 8
    while t >= 8:
        if n % t == 0:
            return t
        t -= 8
    return n


def _pick_lane_tile(n, target=1024):
    """Largest multiple-of-128 divisor of n that is <= target (or n itself)."""
    if n <= target:
        return n
    t = (target // 128) * 128
    while t >= 128:
        if n % t == 0:
            return t
        t -= 128
    return n


# -----------------------------------------------------------------------------
# Encoder stand-in + fused AvgPool2d(2,2)
#   stride-2 3x3 stem conv (im2col GEMM) + swish, 1x1 head conv + swish,
#   then 2x2 average pool — all in one gridded kernel, channels-last output.
# -----------------------------------------------------------------------------
def encoder_pool_kernel(p_ref, ws_ref, bs_ref, wh_ref, bh_ref, o_ref):
    # p_ref: (4, TM, KP) bf16 -- the 4 pooling taps (2x2 window) of each pooled row.
    acc = jnp.zeros(o_ref.shape, jnp.float32)
    for t in range(4):  # static unroll over the 2x2 pool taps
        h = jnp.dot(p_ref[t], ws_ref[...], preferred_element_type=jnp.float32)
        h = h + bs_ref[...]
        h = h * jax.nn.sigmoid(h)                      # swish (f32)
        f = jnp.dot(h.astype(jnp.bfloat16), wh_ref[...],
                    preferred_element_type=jnp.float32) + bh_ref[...]
        acc = acc + f * jax.nn.sigmoid(f)              # swish (f32)
    o_ref[...] = 0.25 * acc                            # fused AvgPool2d(2, 2)


def encoder_forward(img, w_stem, b_stem, w_head, b_head, *, row_tile=256):
    """img: (B, 3, H, W) NCHW  ->  pooled, channels-last flattened features (B, sz)."""
    B, C, H, W = img.shape
    Ho, Wo = H // 2, W // 2        # encoder output spatial (stride-2 stem)
    Hp, Wp = Ho // 2, Wo // 2      # after the head's 2x2 average pool
    KP = w_stem.shape[0]           # patch size padded 27 -> 32
    C_feat = w_head.shape[1]

    # im2col for the stride-2 3x3 stem (XLA glue; the encoder is a stand-in).
    x_pad = jnp.pad(img, ((0, 0), (0, 0), (0, 1), (0, 1)))
    cols = [x_pad[:, :, ki:ki + 2 * Ho:2, kj:kj + 2 * Wo:2]
            for ki in range(3) for kj in range(3)]
    patches = jnp.stack(cols, axis=2)                   # (B, C, 9, Ho, Wo)
    patches = patches.transpose(0, 3, 4, 1, 2)          # (B, Ho, Wo, C, 9) channels-last
    patches = patches.reshape(B, Ho, Wo, C * 9)
    patches = jnp.pad(patches, ((0, 0), (0, 0), (0, 0), (0, KP - C * 9)))
    # tap-major layout: (4 taps, B*Hp*Wp pooled rows, KP) -- taps of one pooled slot
    # land in the same grid step so the 2x2 pool can be fused into the kernel.
    patches = patches.reshape(B, Hp, 2, Wp, 2, KP)
    patches = patches.transpose(2, 4, 0, 1, 3, 5).reshape(4, B * Hp * Wp, KP)
    patches = patches.astype(jnp.bfloat16)              # halve DMA bytes; MXU bf16

    Mp = B * Hp * Wp
    TM = _pick_row_tile(Mp, row_tile)
    grid = (Mp // TM,)

    pooled = pl.pallas_call(
        encoder_pool_kernel,
        out_shape=jax.ShapeDtypeStruct((Mp, C_feat), jnp.float32),
        grid_spec=pltpu.PrefetchScalarGridSpec(
            num_scalar_prefetch=0,
            grid=grid,
            in_specs=[
                pl.BlockSpec((4, TM, KP), lambda i: (0, i, 0)),
                pl.BlockSpec((KP, w_stem.shape[1]), lambda i: (0, 0)),
                pl.BlockSpec((1, b_stem.shape[1]), lambda i: (0, 0)),
                pl.BlockSpec((w_head.shape[0], C_feat), lambda i: (0, 0)),
                pl.BlockSpec((1, C_feat), lambda i: (0, 0)),
            ],
            out_specs=pl.BlockSpec((TM, C_feat), lambda i: (i, 0)),
        ),
        compiler_params=pltpu.CompilerParams(
            dimension_semantics=("parallel",)),
    )(patches, w_stem, b_stem, w_head, b_head)

    # channels-last flatten: rows already ordered (b, hp, wp), channel fastest.
    return pooled.reshape(B, Hp * Wp * C_feat)


# -----------------------------------------------------------------------------
# Binary head: [Dropout(id) -> SEBlock(sz, r=8) -> Linear(sz,16)] -> Linear(16,2)
#              -> sigmoid.  Two weight-streaming kernels over sz tiles.
# -----------------------------------------------------------------------------
def se_squeeze_kernel(x_ref, w1_ref, b1_ref, h_ref, acc_ref):
    # h = relu(x @ w1 + b1), reduction over sz streamed in K tiles.
    k = pl.program_id(0)

    @pl.when(k == 0)
    def _init():
        acc_ref[...] = jnp.zeros_like(acc_ref)

    acc_ref[...] += jnp.dot(x_ref[...].astype(jnp.bfloat16), w1_ref[...],
                            preferred_element_type=jnp.float32)

    @pl.when(k == pl.num_programs(0) - 1)
    def _fin():
        h_ref[...] = jnp.maximum(acc_ref[...] + b1_ref[...], 0.0)  # ReLU (f32)


def se_excite_fc_kernel(x_ref, h_ref, w2_ref, b2_ref, w3_ref, b3_ref,
                        w4_ref, b4_ref, o_ref, acc_ref):
    # Per sz tile j: s_j = sigmoid(h @ w2[:, j] + b2[j]);  y += (x_j * s_j) @ w3[j, :]
    # Finalize: z = (y + b3) @ w4 + b4; out = sigmoid(z).
    j = pl.program_id(0)

    @pl.when(j == 0)
    def _init():
        acc_ref[...] = jnp.zeros_like(acc_ref)

    s = jnp.dot(h_ref[...].astype(jnp.bfloat16), w2_ref[...],
                preferred_element_type=jnp.float32) + b2_ref[...]
    s = jax.nn.sigmoid(s)                      # SE gate (f32)
    xs = x_ref[...] * s                        # SE scaling (f32)
    acc_ref[...] += jnp.dot(xs.astype(jnp.bfloat16), w3_ref[...],
                            preferred_element_type=jnp.float32)

    @pl.when(j == pl.num_programs(0) - 1)
    def _fin():
        y = acc_ref[...] + b3_ref[...]         # Linear(sz, 16)
        z = jnp.dot(y.astype(jnp.bfloat16), w4_ref[...],
                    preferred_element_type=jnp.float32) + b4_ref[...]
        o_ref[...] = jax.nn.sigmoid(z)         # fc2 + sigmoid

def binary_head_forward(x, w1, b1, w2, b2, w3, b3, w4, b4, *, lane_tile=1024):
    """x: (B, sz) pooled + flattened features -> (B, num_defect_tp) probabilities."""
    B, sz = x.shape
    szr = w1.shape[1]                 # sz // 8
    nout = w4.shape[1]
    T = _pick_lane_tile(sz, lane_tile)
    grid = (sz // T,)
    cparams = pltpu.CompilerParams(
        dimension_semantics=("arbitrary",),        # reduction over sz tiles
        vmem_limit_bytes=48 * 1024 * 1024)         # safe on v5e/v6e/v7x

    # Dropout(0.7): identity at inference.

    # --- SE squeeze: h = relu(x @ w1 + b1), bf16 weight streaming over K tiles ---
    h = pl.pallas_call(
        se_squeeze_kernel,
        out_shape=jax.ShapeDtypeStruct((B, szr), jnp.float32),
        grid_spec=pltpu.PrefetchScalarGridSpec(
            num_scalar_prefetch=0,
            grid=grid,
            in_specs=[
                pl.BlockSpec((B, T), lambda k: (0, k)),
                pl.BlockSpec((T, szr), lambda k: (k, 0)),
                pl.BlockSpec((1, szr), lambda k: (0, 0)),
            ],
            out_specs=pl.BlockSpec((B, szr), lambda k: (0, 0)),
            scratch_shapes=[pltpu.VMEM((B, szr), jnp.float32)],
        ),
        compiler_params=cparams,
    )(x, w1, b1)

    # --- SE excite + Linear(sz,16) + Linear(16,2) + sigmoid, streamed over sz tiles ---
    out = pl.pallas_call(
        se_excite_fc_kernel,
        out_shape=jax.ShapeDtypeStruct((B, nout), jnp.float32),
        grid_spec=pltpu.PrefetchScalarGridSpec(
            num_scalar_prefetch=0,
            grid=grid,
            in_specs=[
                pl.BlockSpec((B, T), lambda j: (0, j)),
                pl.BlockSpec((B, szr), lambda j: (0, 0)),
                pl.BlockSpec((szr, T), lambda j: (0, j)),
                pl.BlockSpec((1, T), lambda j: (0, j)),
                pl.BlockSpec((T, w3.shape[1]), lambda j: (j, 0)),
                pl.BlockSpec((1, w3.shape[1]), lambda j: (0, 0)),
                pl.BlockSpec(w4.shape, lambda j: (0, 0)),
                pl.BlockSpec((1, nout), lambda j: (0, 0)),
            ],
            out_specs=pl.BlockSpec((B, nout), lambda j: (0, 0)),
            scratch_shapes=[pltpu.VMEM((B, w3.shape[1]), jnp.float32)],
        ),
        compiler_params=cparams,
    )(x, h, w2, b2, w3, b3, w4, b4)
    return out


# -----------------------------------------------------------------------------
# Full model
# -----------------------------------------------------------------------------
def init_params(key, c_feat, feat_hw, r=8):
    hp = feat_hw // 2
    sz = c_feat * hp * hp
    szr = sz // r
    ks = jax.random.split(key, 6)

    def dense(k, fan_in, fan_out):
        w = jax.random.normal(k, (fan_in, fan_out), jnp.float32) / jnp.sqrt(fan_in)
        return w.astype(jnp.bfloat16)   # GEMM weights streamed in bf16

    return dict(
        w_stem=dense(ks[0], 32, 32),      b_stem=jnp.zeros((1, 32), jnp.float32),
        w_head=dense(ks[1], 32, c_feat),  b_head=jnp.zeros((1, c_feat), jnp.float32),
        w1=dense(ks[2], sz, szr),         b1=0.01 * jnp.ones((1, szr), jnp.float32),
        w2=dense(ks[3], szr, sz),         b2=0.01 * jnp.ones((1, sz), jnp.float32),
        w3=dense(ks[4], sz, 16),          b3=0.01 * jnp.ones((1, 16), jnp.float32),
        w4=dense(ks[5], 16, 2),           b4=0.01 * jnp.ones((1, 2), jnp.float32),
    )


@jax.jit
def pair_img_classifier_deepface(pre_img, post_img, params):
    # The original forward only uses pre_img; post_img is ignored.
    del post_img
    x = encoder_forward(pre_img, params["w_stem"], params["b_stem"],
                        params["w_head"], params["b_head"])
    return binary_head_forward(x, params["w1"], params["b1"],
                               params["w2"], params["b2"],
                               params["w3"], params["b3"],
                               params["w4"], params["b4"])


# -----------------------------------------------------------------------------
# Pure-JAX (f32) reference for correctness checking
# -----------------------------------------------------------------------------
def _reference(pre_img, params):
    B, C, H, W = pre_img.shape
    Ho, Wo = H // 2, W // 2
    Hp, Wp = Ho // 2, Wo // 2
    KP = params["w_stem"].shape[0]
    x_pad = jnp.pad(pre_img, ((0, 0), (0, 0), (0, 1), (0, 1)))
    cols = [x_pad[:, :, ki:ki + 2 * Ho:2, kj:kj + 2 * Wo:2]
            for ki in range(3) for kj in range(3)]
    p = jnp.stack(cols, axis=2).transpose(0, 3, 4, 1, 2).reshape(B, Ho, Wo, C * 9)
    p = jnp.pad(p, ((0, 0), (0, 0), (0, 0), (0, KP - C * 9)))
    h = p @ params["w_stem"].astype(jnp.float32) + params["b_stem"]
    h = h * jax.nn.sigmoid(h)
    f = h @ params["w_head"].astype(jnp.float32) + params["b_head"]
    f = f * jax.nn.sigmoid(f)                                    # (B, Ho, Wo, C)
    f = f.reshape(B, Hp, 2, Wp, 2, -1).mean(axis=(2, 4))          # AvgPool2d(2,2)
    x = f.reshape(B, -1)                                          # channels-last flatten
    w1 = params["w1"].astype(jnp.float32); w2 = params["w2"].astype(jnp.float32)
    w3 = params["w3"].astype(jnp.float32); w4 = params["w4"].astype(jnp.float32)
    hh = jnp.maximum(x @ w1 + params["b1"], 0.0)
    s = jax.nn.sigmoid(hh @ w2 + params["b2"])
    y = (x * s) @ w3 + params["b3"]
    z = y @ w4 + params["b4"]
    return jax.nn.sigmoid(z)


if __name__ == "__main__":
    key = jax.random.PRNGKey(0)
    k_pre, k_post, k_par = jax.random.split(key, 3)

    # Small shapes: B=2, RGB 16x16 images -> encoder features (2, 128, 8, 8)
    # -> pooled/flattened sz = 128*4*4 = 2048 (stand-in for the hardcoded 20480),
    # which exercises a 2-step weight-streaming grid in the head kernels.
    B, H, W = 2, 16, 16
    C_FEAT = 128

    pre_img = jax.random.normal(k_pre, (B, 3, H, W), jnp.float32)
    post_img = jax.random.normal(k_post, (B, 3, H, W), jnp.float32)
    params = init_params(k_par, C_FEAT, H // 2)

    out = pair_img_classifier_deepface(pre_img, post_img, params)
    out = jax.block_until_ready(out)
    ref = _reference(pre_img, params)

    assert out.shape == (B, 2)
    assert bool(jnp.all((out >= 0.0) & (out <= 1.0)))
    assert bool(jnp.allclose(out, ref, atol=5e-2)), (out, ref)
    print("KERNEL_OK")
</pallas_src>

<mosaic_0001>
module attributes {stable_mosaic.version = 11 : i64} {
  func.func @se_squeeze_kernel(%arg0: i32, %arg1: memref<2x1024xf32, #tpu.memory_space<vmem>>, %arg2: memref<1024x256xbf16, #tpu.memory_space<vmem>>, %arg3: memref<1x256xf32, #tpu.memory_space<vmem>>, %arg4: memref<2x256xf32, #tpu.memory_space<vmem>>, %arg5: memref<2x256xf32, #tpu.memory_space<vmem>>) attributes {dimension_semantics = [#tpu.dimension_semantics<arbitrary>], iteration_bounds = array<i64: 2>, scalar_prefetch = 0 : i64, scratch_operands = 1 : i64, tpu.core_type = #tpu.core_type<tc>, window_params = [{transform_indices = @transform_0, window_bounds = array<i64: 2, 1024>}, {transform_indices = @transform_1, window_bounds = array<i64: 1024, 256>}, {pipeline_mode = #tpu.pipeline_mode<synchronous>, transform_indices = @transform_2, window_bounds = array<i64: 1, 256>}, {pipeline_mode = #tpu.pipeline_mode<synchronous>, transform_indices = @transform_3, window_bounds = array<i64: 2, 256>}]} {
    %c0_i32 = arith.constant 0 : i32
    %0 = arith.cmpi eq, %arg0, %c0_i32 : i32
    %1 = arith.extui %0 : i1 to i32
    %c0_i32_0 = arith.constant 0 : i32
    %2 = arith.cmpi ne, %1, %c0_i32_0 : i32
    scf.if %2 {
      %cst_9 = arith.constant 0.000000e+00 : f32
      %13 = vector.broadcast %cst_9 : f32 to vector<2x256xf32>
      %c0_10 = arith.constant 0 : index
      %c0_11 = arith.constant 0 : index
      %14 = vector.load %arg5[%c0_10, %c0_11] : memref<2x256xf32, #tpu.memory_space<vmem>>, vector<2x256xf32>
      tpu.vector_store %arg5[%c0_10, %c0_11], %13 {strides = array<i32>} : memref<2x256xf32, #tpu.memory_space<vmem>>, vector<2x256xf32>,
    } else {
    }
    %c0 = arith.constant 0 : index
    %c0_1 = arith.constant 0 : index
    %3 = vector.load %arg5[%c0, %c0_1] : memref<2x256xf32, #tpu.memory_space<vmem>>, vector<2x256xf32>
    %c0_2 = arith.constant 0 : index
    %c0_3 = arith.constant 0 : index
    %4 = vector.load %arg1[%c0_2, %c0_3] : memref<2x1024xf32, #tpu.memory_space<vmem>>, vector<2x1024xf32>
    %5 = arith.truncf %4 : vector<2x1024xf32> to vector<2x1024xbf16>
    %c0_4 = arith.constant 0 : index
    %c0_5 = arith.constant 0 : index
    %6 = vector.load %arg2[%c0_4, %c0_5] : memref<1024x256xbf16, #tpu.memory_space<vmem>>, vector<1024x256xbf16>
    %cst = arith.constant dense<0.000000e+00> : vector<2x256xf32>
    %7 = tpu.matmul %5, %6, %cst {dimension_numbers = #tpu.dot_dimension_numbers<[1], [0], [0], [1], [0, 0, 1, 1], [], []>} : vector<2x1024xbf16>, vector<1024x256xbf16>, vector<2x256xf32> -> vector<2x256xf32>
    %8 = arith.addf %3, %7 : vector<2x256xf32>
    %c0_6 = arith.constant 0 : index
    %c0_7 = arith.constant 0 : index
    %9 = vector.load %arg5[%c0_6, %c0_7] : memref<2x256xf32, #tpu.memory_space<vmem>>, vector<2x256xf32>
    tpu.vector_store %arg5[%c0_6, %c0_7], %8 {strides = array<i32>} : memref<2x256xf32, #tpu.memory_space<vmem>>, vector<2x256xf32>,
    %c1_i32 = arith.constant 1 : i32
    %10 = arith.cmpi eq, %arg0, %c1_i32 : i32
    %11 = arith.extui %10 : i1 to i32
    %c0_i32_8 = arith.constant 0 : i32
    %12 = arith.cmpi ne, %11, %c0_i32_8 : i32
    scf.if %12 {
      %c0_9 = arith.constant 0 : index
      %c0_10 = arith.constant 0 : index
      %13 = vector.load %arg5[%c0_9, %c0_10] : memref<2x256xf32, #tpu.memory_space<vmem>>, vector<2x256xf32>
      %c0_11 = arith.constant 0 : index
      %c0_12 = arith.constant 0 : index
      %14 = vector.load %arg3[%c0_11, %c0_12] : memref<1x256xf32, #tpu.memory_space<vmem>>, vector<1x256xf32>
      %15 = vector.broadcast %14 : vector<1x256xf32> to vector<2x256xf32>
      %16 = arith.addf %13, %15 : vector<2x256xf32>
      %cst_13 = arith.constant 0.000000e+00 : f32
      %17 = vector.broadcast %cst_13 : f32 to vector<2x256xf32>
      %18 = arith.maximumf %16, %17 : vector<2x256xf32>
      %c0_14 = arith.constant 0 : index
      %c0_15 = arith.constant 0 : index
      %19 = vector.load %arg4[%c0_14, %c0_15] : memref<2x256xf32, #tpu.memory_space<vmem>>, vector<2x256xf32>
      tpu.vector_store %arg4[%c0_14, %c0_15], %18 {strides = array<i32>} : memref<2x256xf32, #tpu.memory_space<vmem>>, vector<2x256xf32>,
    } else {
    }
    return
  }
  func.func @transform_0(%arg0: i32) -> (i32, i32) {
    %c0_i32 = arith.constant 0 : i32
    %c0_i32_0 = arith.constant 0 : i32
    return %c0_i32, %arg0 : i32, i32
  }
  func.func @transform_1(%arg0: i32) -> (i32, i32) {
    %c0_i32 = arith.constant 0 : i32
    %c0_i32_0 = arith.constant 0 : i32
    return %arg0, %c0_i32 : i32, i32
  }
  func.func @transform_2(%arg0: i32) -> (i32, i32) {
    %c0_i32 = arith.constant 0 : i32
    %c0_i32_0 = arith.constant 0 : i32
    %c0_i32_1 = arith.constant 0 : i32
    return %c0_i32, %c0_i32_0 : i32, i32
  }
  func.func @transform_3(%arg0: i32) -> (i32, i32) {
    %c0_i32 = arith.constant 0 : i32
    %c0_i32_0 = arith.constant 0 : i32
    %c0_i32_1 = arith.constant 0 : i32
    return %c0_i32, %c0_i32_0 : i32, i32
  }
}

module attributes {stable_mosaic.version = 11 : i64} {
  func.func @encoder_pool_kernel(%arg0: i32, %arg1: memref<4x32x32xbf16, #tpu.memory_space<vmem>>, %arg2: memref<32x32xbf16, #tpu.memory_space<vmem>>, %arg3: memref<1x32xf32, #tpu.memory_space<vmem>>, %arg4: memref<32x128xbf16, #tpu.memory_space<vmem>>, %arg5: memref<1x128xf32, #tpu.memory_space<vmem>>, %arg6: memref<32x128xf32, #tpu.memory_space<vmem>>) attributes {dimension_semantics = [#tpu.dimension_semantics<parallel>], iteration_bounds = array<i64: 1>, scalar_prefetch = 0 : i64, scratch_operands = 0 : i64, tpu.core_type = #tpu.core_type<tc>, window_params = [{transform_indices = @transform_0, window_bounds = array<i64: 4, 32, 32>}, {pipeline_mode = #tpu.pipeline_mode<synchronous>, transform_indices = @transform_1, window_bounds = array<i64: 32, 32>}, {pipeline_mode = #tpu.pipeline_mode<synchronous>, transform_indices = @transform_2, window_bounds = array<i64: 1, 32>}, {pipeline_mode = #tpu.pipeline_mode<synchronous>, transform_indices = @transform_3, window_bounds = array<i64: 32, 128>}, {pipeline_mode = #tpu.pipeline_mode<synchronous>, transform_indices = @transform_4, window_bounds = array<i64: 1, 128>}, {transform_indices = @transform_5, window_bounds = array<i64: 32, 128>}]} {
    %cst = arith.constant 0.000000e+00 : f32
    %0 = vector.broadcast %cst : f32 to vector<32x128xf32>
    %c0 = arith.constant 0 : index
    %c0_0 = arith.constant 0 : index
    %c0_1 = arith.constant 0 : index
    %1 = vector.load %arg1[%c0, %c0_0, %c0_1] : memref<4x32x32xbf16, #tpu.memory_space<vmem>>, vector<1x32x32xbf16>
    %2 = vector.shape_cast %1 : vector<1x32x32xbf16> to vector<32x32xbf16>
    %c0_2 = arith.constant 0 : index
    %c0_3 = arith.constant 0 : index
    %3 = vector.load %arg2[%c0_2, %c0_3] : memref<32x32xbf16, #tpu.memory_space<vmem>>, vector<32x32xbf16>
    %cst_4 = arith.constant dense<0.000000e+00> : vector<32x32xf32>
    %4 = tpu.matmul %2, %3, %cst_4 {dimension_numbers = #tpu.dot_dimension_numbers<[1], [0], [0], [1], [0, 0, 1, 1], [], []>} : vector<32x32xbf16>, vector<32x32xbf16>, vector<32x32xf32> -> vector<32x32xf32>
    %c0_5 = arith.constant 0 : index
    %c0_6 = arith.constant 0 : index
    %5 = vector.load %arg3[%c0_5, %c0_6] : memref<1x32xf32, #tpu.memory_space<vmem>>, vector<1x32xf32>
    %6 = vector.broadcast %5 : vector<1x32xf32> to vector<32x32xf32>
    %7 = arith.addf %4, %6 : vector<32x32xf32>
    %8 = arith.negf %7 : vector<32x32xf32>
    %9 = math.exp %8 : vector<32x32xf32>
    %cst_7 = arith.constant 1.000000e+00 : f32
    %10 = vector.broadcast %cst_7 : f32 to vector<32x32xf32>
    %11 = arith.addf %10, %9 : vector<32x32xf32>
    %12 = arith.divf %10, %11 : vector<32x32xf32>
    %13 = arith.mulf %7, %12 : vector<32x32xf32>
    %14 = arith.truncf %13 : vector<32x32xf32> to vector<32x32xbf16>
    %c0_8 = arith.constant 0 : index
    %c0_9 = arith.constant 0 : index
    %15 = vector.load %arg4[%c0_8, %c0_9] : memref<32x128xbf16, #tpu.memory_space<vmem>>, vector<32x128xbf16>
    %cst_10 = arith.constant dense<0.000000e+00> : vector<32x128xf32>
    %16 = tpu.matmul %14, %15, %cst_10 {dimension_numbers = #tpu.dot_dimension_numbers<[1], [0], [0], [1], [0, 0, 1, 1], [], []>} : vector<32x32xbf16>, vector<32x128xbf16>, vector<32x128xf32> -> vector<32x128xf32>
    %c0_11 = arith.constant 0 : index
    %c0_12 = arith.constant 0 : index
    %17 = vector.load %arg5[%c0_11, %c0_12] : memref<1x128xf32, #tpu.memory_space<vmem>>, vector<1x128xf32>
    %18 = vector.broadcast %17 : vector<1x128xf32> to vector<32x128xf32>
    %19 = arith.addf %16, %18 : vector<32x128xf32>
    %20 = arith.negf %19 : vector<32x128xf32>
    %21 = math.exp %20 : vector<32x128xf32>
    %cst_13 = arith.constant 1.000000e+00 : f32
    %22 = vector.broadcast %cst_13 : f32 to vector<32x128xf32>
    %23 = arith.addf %22, %21 : vector<32x128xf32>
    %24 = arith.divf %22, %23 : vector<32x128xf32>
    %25 = arith.mulf %19, %24 : vector<32x128xf32>
    %26 = arith.addf %0, %25 : vector<32x128xf32>
    %c1 = arith.constant 1 : index
    %c0_14 = arith.constant 0 : index
    %c0_15 = arith.constant 0 : index
    %27 = vector.load %arg1[%c1, %c0_14, %c0_15] : memref<4x32x32xbf16, #tpu.memory_space<vmem>>, vector<1x32x32xbf16>
    %28 = vector.shape_cast %27 : vector<1x32x32xbf16> to vector<32x32xbf16>
    %c0_16 = arith.constant 0 : index
    %c0_17 = arith.constant 0 : index
    %29 = vector.load %arg2[%c0_16, %c0_17] : memref<32x32xbf16, #tpu.memory_space<vmem>>, vector<32x32xbf16>
    %cst_18 = arith.constant dense<0.000000e+00> : vector<32x32xf32>
    %30 = tpu.matmul %28, %29, %cst_18 {dimension_numbers = #tpu.dot_dimension_numbers<[1], [0], [0], [1], [0, 0, 1, 1], [], []>} : vector<32x32xbf16>, vector<32x32xbf16>, vector<32x32xf32> -> vector<32x32xf32>
    %c0_19 = arith.constant 0 : index
    %c0_20 = arith.constant 0 : index
    %31 = vector.load %arg3[%c0_19, %c0_20] : memref<1x32xf32, #tpu.memory_space<vmem>>, vector<1x32xf32>
    %32 = vector.broadcast %31 : vector<1x32xf32> to vector<32x32xf32>
    %33 = arith.addf %30, %32 : vector<32x32xf32>
    %34 = arith.negf %33 : vector<32x32xf32>
    %35 = math.exp %34 : vector<32x32xf32>
    %cst_21 = arith.constant 1.000000e+00 : f32
    %36 = vector.broadcast %cst_21 : f32 to vector<32x32xf32>
    %37 = arith.addf %36, %35 : vector<32x32xf32>
    %38 = arith.divf %36, %37 : vector<32x32xf32>
    %39 = arith.mulf %33, %38 : vector<32x32xf32>
    %40 = arith.truncf %39 : vector<32x32xf32> to vector<32x32xbf16>
    %c0_22 = arith.constant 0 : index
    %c0_23 = arith.constant 0 : index
    %41 = vector.load %arg4[%c0_22, %c0_23] : memref<32x128xbf16, #tpu.memory_space<vmem>>, vector<32x128xbf16>
    %cst_24 = arith.constant dense<0.000000e+00> : vector<32x128xf32>
    %42 = tpu.matmul %40, %41, %cst_24 {dimension_numbers = #tpu.dot_dimension_numbers<[1], [0], [0], [1], [0, 0, 1, 1], [], []>} : vector<32x32xbf16>, vector<32x128xbf16>, vector<32x128xf32> -> vector<32x128xf32>
    %c0_25 = arith.constant 0 : index
    %c0_26 = arith.constant 0 : index
    %43 = vector.load %arg5[%c0_25, %c0_26] : memref<1x128xf32, #tpu.memory_space<vmem>>, vector<1x128xf32>
    %44 = vector.broadcast %43 : vector<1x128xf32> to vector<32x128xf32>
    %45 = arith.addf %42, %44 : vector<32x128xf32>
    %46 = arith.negf %45 : vector<32x128xf32>
    %47 = math.exp %46 : vector<32x128xf32>
    %cst_27 = arith.constant 1.000000e+00 : f32
    %48 = vector.broadcast %cst_27 : f32 to vector<32x128xf32>
    %49 = arith.addf %48, %47 : vector<32x128xf32>
    %50 = arith.divf %48, %49 : vector<32x128xf32>
    %51 = arith.mulf %45, %50 : vector<32x128xf32>
    %52 = arith.addf %26, %51 : vector<32x128xf32>
    %c2 = arith.constant 2 : index
    %c0_28 = arith.constant 0 : index
    %c0_29 = arith.constant 0 : index
    %53 = vector.load %arg1[%c2, %c0_28, %c0_29] : memref<4x32x32xbf16, #tpu.memory_space<vmem>>, vector<1x32x32xbf16>
    %54 = vector.shape_cast %53 : vector<1x32x32xbf16> to vector<32x32xbf16>
    %c0_30 = arith.constant 0 : index
    %c0_31 = arith.constant 0 : index
    %55 = vector.load %arg2[%c0_30, %c0_31] : memref<32x32xbf16, #tpu.memory_space<vmem>>, vector<32x32xbf16>
    %cst_32 = arith.constant dense<0.000000e+00> : vector<32x32xf32>
    %56 = tpu.matmul %54, %55, %cst_32 {dimension_numbers = #tpu.dot_dimension_numbers<[1], [0], [0], [1], [0, 0, 1, 1], [], []>} : vector<32x32xbf16>, vector<32x32xbf16>, vector<32x32xf32> -> vector<32x32xf32>
    %c0_33 = arith.constant 0 : index
    %c0_34 = arith.constant 0 : index
    %57 = vector.load %arg3[%c0_33, %c0_34] : memref<1x32xf32, #tpu.memory_space<vmem>>, vector<1x32xf32>
    %58 = vector.broadcast %57 : vector<1x32xf32> to vector<32x32xf32>
    %59 = arith.addf %56, %58 : vector<32x32xf32>
    %60 = arith.negf %59 : vector<32x32xf32>
    %61 = math.exp %60 : vector<32x32xf32>
    %cst_35 = arith.constant 1.000000e+00 : f32
    %62 = vector.broadcast %cst_35 : f32 to vector<32x32xf32>
    %63 = arith.addf %62, %61 : vector<32x32xf32>
    %64 = arith.divf %62, %63 : vector<32x32xf32>
    %65 = arith.mulf %59, %64 : vector<32x32xf32>
    %66 = arith.truncf %65 : vector<32x32xf32> to vector<32x32xbf16>
    %c0_36 = arith.constant 0 : index
    %c0_37 = arith.constant 0 : index
    %67 = vector.load %arg4[%c0_36, %c0_37] : memref<32x128xbf16, #tpu.memory_space<vmem>>, vector<32x128xbf16>
    %cst_38 = arith.constant dense<0.000000e+00> : vector<32x128xf32>
    %68 = tpu.matmul %66, %67, %cst_38 {dimension_numbers = #tpu.dot_dimension_numbers<[1], [0], [0], [1], [0, 0, 1, 1], [], []>} : vector<32x32xbf16>, vector<32x128xbf16>, vector<32x128xf32> -> vector<32x128xf32>
    %c0_39 = arith.constant 0 : index
    %c0_40 = arith.constant 0 : index
    %69 = vector.load %arg5[%c0_39, %c0_40] : memref<1x128xf32, #tpu.memory_space<vmem>>, vector<1x128xf32>
    %70 = vector.broadcast %69 : vector<1x128xf32> to vector<32x128xf32>
    %71 = arith.addf %68, %70 : vector<32x128xf32>
    %72 = arith.negf %71 : vector<32x128xf32>
    %73 = math.exp %72 : vector<32x128xf32>
    %cst_41 = arith.constant 1.000000e+00 : f32
    %74 = vector.broadcast %cst_41 : f32 to vector<32x128xf32>
    %75 = arith.addf %74, %73 : vector<32x128xf32>
    %76 = arith.divf %74, %75 : vector<32x128xf32>
    %77 = arith.mulf %71, %76 : vector<32x128xf32>
    %78 = arith.addf %52, %77 : vector<32x128xf32>
    %c3 = arith.constant 3 : index
    %c0_42 = arith.constant 0 : index
    %c0_43 = arith.constant 0 : index
    %79 = vector.load %arg1[%c3, %c0_42, %c0_43] : memref<4x32x32xbf16, #tpu.memory_space<vmem>>, vector<1x32x32xbf16>
    %80 = vector.shape_cast %79 : vector<1x32x32xbf16> to vector<32x32xbf16>
    %c0_44 = arith.constant 0 : index
    %c0_45 = arith.constant 0 : index
    %81 = vector.load %arg2[%c0_44, %c0_45] : memref<32x32xbf16, #tpu.memory_space<vmem>>, vector<32x32xbf16>
    %cst_46 = arith.constant dense<0.000000e+00> : vector<32x32xf32>
    %82 = tpu.matmul %80, %81, %cst_46 {dimension_numbers = #tpu.dot_dimension_numbers<[1], [0], [0], [1], [0, 0, 1, 1], [], []>} : vector<32x32xbf16>, vector<32x32xbf16>, vector<32x32xf32> -> vector<32x32xf32>
    %c0_47 = arith.constant 0 : index
    %c0_48 = arith.constant 0 : index
    %83 = vector.load %arg3[%c0_47, %c0_48] : memref<1x32xf32, #tpu.memory_space<vmem>>, vector<1x32xf32>
    %84 = vector.broadcast %83 : vector<1x32xf32> to vector<32x32xf32>
    %85 = arith.addf %82, %84 : vector<32x32xf32>
    %86 = arith.negf %85 : vector<32x32xf32>
    %87 = math.exp %86 : vector<32x32xf32>
    %cst_49 = arith.constant 1.000000e+00 : f32
    %88 = vector.broadcast %cst_49 : f32 to vector<32x32xf32>
    %89 = arith.addf %88, %87 : vector<32x32xf32>
    %90 = arith.divf %88, %89 : vector<32x32xf32>
    %91 = arith.mulf %85, %90 : vector<32x32xf32>
    %92 = arith.truncf %91 : vector<32x32xf32> to vector<32x32xbf16>
    %c0_50 = arith.constant 0 : index
    %c0_51 = arith.constant 0 : index
    %93 = vector.load %arg4[%c0_50, %c0_51] : memref<32x128xbf16, #tpu.memory_space<vmem>>, vector<32x128xbf16>
    %cst_52 = arith.constant dense<0.000000e+00> : vector<32x128xf32>
    %94 = tpu.matmul %92, %93, %cst_52 {dimension_numbers = #tpu.dot_dimension_numbers<[1], [0], [0], [1], [0, 0, 1, 1], [], []>} : vector<32x32xbf16>, vector<32x128xbf16>, vector<32x128xf32> -> vector<32x128xf32>
    %c0_53 = arith.constant 0 : index
    %c0_54 = arith.constant 0 : index
    %95 = vector.load %arg5[%c0_53, %c0_54] : memref<1x128xf32, #tpu.memory_space<vmem>>, vector<1x128xf32>
    %96 = vector.broadcast %95 : vector<1x128xf32> to vector<32x128xf32>
    %97 = arith.addf %94, %96 : vector<32x128xf32>
    %98 = arith.negf %97 : vector<32x128xf32>
    %99 = math.exp %98 : vector<32x128xf32>
    %cst_55 = arith.constant 1.000000e+00 : f32
    %100 = vector.broadcast %cst_55 : f32 to vector<32x128xf32>
    %101 = arith.addf %100, %99 : vector<32x128xf32>
    %102 = arith.divf %100, %101 : vector<32x128xf32>
    %103 = arith.mulf %97, %102 : vector<32x128xf32>
    %104 = arith.addf %78, %103 : vector<32x128xf32>
    %cst_56 = arith.constant 2.500000e-01 : f32
    %105 = vector.broadcast %cst_56 : f32 to vector<32x128xf32>
    %106 = arith.mulf %105, %104 : vector<32x128xf32>
    %c0_57 = arith.constant 0 : index
    %c0_58 = arith.constant 0 : index
    %107 = vector.load %arg6[%c0_57, %c0_58] : memref<32x128xf32, #tpu.memory_space<vmem>>, vector<32x128xf32>
    tpu.vector_store %arg6[%c0_57, %c0_58], %106 {strides = array<i32>} : memref<32x128xf32, #tpu.memory_space<vmem>>, vector<32x128xf32>,
    return
  }
  func.func @transform_0(%arg0: i32) -> (i32, i32, i32) {
    %c0_i32 = arith.constant 0 : i32
    %c0_i32_0 = arith.constant 0 : i32
    %c0_i32_1 = arith.constant 0 : i32
    return %c0_i32, %arg0, %c0_i32_0 : i32, i32, i32
  }
  func.func @transform_1(%arg0: i32) -> (i32, i32) {
    %c0_i32 = arith.constant 0 : i32
    %c0_i32_0 = arith.constant 0 : i32
    %c0_i32_1 = arith.constant 0 : i32
    return %c0_i32, %c0_i32_0 : i32, i32
  }
  func.func @transform_2(%arg0: i32) -> (i32, i32) {
    %c0_i32 = arith.constant 0 : i32
    %c0_i32_0 = arith.constant 0 : i32
    %c0_i32_1 = arith.constant 0 : i32
    return %c0_i32, %c0_i32_0 : i32, i32
  }
  func.func @transform_3(%arg0: i32) -> (i32, i32) {
    %c0_i32 = arith.constant 0 : i32
    %c0_i32_0 = arith.constant 0 : i32
    %c0_i32_1 = arith.constant 0 : i32
    return %c0_i32, %c0_i32_0 : i32, i32
  }
  func.func @transform_4(%arg0: i32) -> (i32, i32) {
    %c0_i32 = arith.constant 0 : i32
    %c0_i32_0 = arith.constant 0 : i32
    %c0_i32_1 = arith.constant 0 : i32
    return %c0_i32, %c0_i32_0 : i32, i32
  }
  func.func @transform_5(%arg0: i32) -> (i32, i32) {
    %c0_i32 = arith.constant 0 : i32
    %c0_i32_0 = arith.constant 0 : i32
    return %arg0, %c0_i32 : i32, i32
  }
}

module attributes {stable_mosaic.version = 11 : i64} {
  func.func @se_excite_fc_kernel(%arg0: i32, %arg1: memref<2x1024xf32, #tpu.memory_space<vmem>>, %arg2: memref<2x256xf32, #tpu.memory_space<vmem>>, %arg3: memref<256x1024xbf16, #tpu.memory_space<vmem>>, %arg4: memref<1x1024xf32, #tpu.memory_space<vmem>>, %arg5: memref<1024x16xbf16, #tpu.memory_space<vmem>>, %arg6: memref<1x16xf32, #tpu.memory_space<vmem>>, %arg7: memref<16x2xbf16, #tpu.memory_space<vmem>>, %arg8: memref<1x2xf32, #tpu.memory_space<vmem>>, %arg9: memref<2x2xf32, #tpu.memory_space<vmem>>, %arg10: memref<2x16xf32, #tpu.memory_space<vmem>>) attributes {dimension_semantics = [#tpu.dimension_semantics<arbitrary>], iteration_bounds = array<i64: 2>, scalar_prefetch = 0 : i64, scratch_operands = 1 : i64, tpu.core_type = #tpu.core_type<tc>, window_params = [{transform_indices = @transform_0, window_bounds = array<i64: 2, 1024>}, {pipeline_mode = #tpu.pipeline_mode<synchronous>, transform_indices = @transform_1, window_bounds = array<i64: 2, 256>}, {transform_indices = @transform_2, window_bounds = array<i64: 256, 1024>}, {transform_indices = @transform_3, window_bounds = array<i64: 1, 1024>}, {transform_indices = @transform_4, window_bounds = array<i64: 1024, 16>}, {pipeline_mode = #tpu.pipeline_mode<synchronous>, transform_indices = @transform_5, window_bounds = array<i64: 1, 16>}, {pipeline_mode = #tpu.pipeline_mode<synchronous>, transform_indices = @transform_6, window_bounds = array<i64: 16, 2>}, {pipeline_mode = #tpu.pipeline_mode<synchronous>, transform_indices = @transform_7, window_bounds = array<i64: 1, 2>}, {pipeline_mode = #tpu.pipeline_mode<synchronous>, transform_indices = @transform_8, window_bounds = array<i64: 2, 2>}]} {
    %c0_i32 = arith.constant 0 : i32
    %0 = arith.cmpi eq, %arg0, %c0_i32 : i32
    %1 = arith.extui %0 : i1 to i32
    %c0_i32_0 = arith.constant 0 : i32
    %2 = arith.cmpi ne, %1, %c0_i32_0 : i32
    scf.if %2 {
      %cst_17 = arith.constant 0.000000e+00 : f32
      %26 = vector.broadcast %cst_17 : f32 to vector<2x16xf32>
      %c0_18 = arith.constant 0 : index
      %c0_19 = arith.constant 0 : index
      %27 = vector.load %arg10[%c0_18, %c0_19] : memref<2x16xf32, #tpu.memory_space<vmem>>, vector<2x16xf32>
      tpu.vector_store %arg10[%c0_18, %c0_19], %26 {strides = array<i32>} : memref<2x16xf32, #tpu.memory_space<vmem>>, vector<2x16xf32>,
    } else {
    }
    %c0 = arith.constant 0 : index
    %c0_1 = arith.constant 0 : index
    %3 = vector.load %arg2[%c0, %c0_1] : memref<2x256xf32, #tpu.memory_space<vmem>>, vector<2x256xf32>
    %4 = arith.truncf %3 : vector<2x256xf32> to vector<2x256xbf16>
    %c0_2 = arith.constant 0 : index
    %c0_3 = arith.constant 0 : index
    %5 = vector.load %arg3[%c0_2, %c0_3] : memref<256x1024xbf16, #tpu.memory_space<vmem>>, vector<256x1024xbf16>
    %cst = arith.constant dense<0.000000e+00> : vector<2x1024xf32>
    %6 = tpu.matmul %4, %5, %cst {dimension_numbers = #tpu.dot_dimension_numbers<[1], [0], [0], [1], [0, 0, 1, 1], [], []>} : vector<2x256xbf16>, vector<256x1024xbf16>, vector<2x1024xf32> -> vector<2x1024xf32>
    %c0_4 = arith.constant 0 : index
    %c0_5 = arith.constant 0 : index
    %7 = vector.load %arg4[%c0_4, %c0_5] : memref<1x1024xf32, #tpu.memory_space<vmem>>, vector<1x1024xf32>
    %8 = vector.broadcast %7 : vector<1x1024xf32> to vector<2x1024xf32>
    %9 = arith.addf %6, %8 : vector<2x1024xf32>
    %10 = arith.negf %9 : vector<2x1024xf32>
    %11 = math.exp %10 : vector<2x1024xf32>
    %cst_6 = arith.constant 1.000000e+00 : f32
    %12 = vector.broadcast %cst_6 : f32 to vector<2x1024xf32>
    %13 = arith.addf %12, %11 : vector<2x1024xf32>
    %14 = arith.divf %12, %13 : vector<2x1024xf32>
    %c0_7 = arith.constant 0 : index
    %c0_8 = arith.constant 0 : index
    %15 = vector.load %arg1[%c0_7, %c0_8] : memref<2x1024xf32, #tpu.memory_space<vmem>>, vector<2x1024xf32>
    %16 = arith.mulf %15, %14 : vector<2x1024xf32>
    %c0_9 = arith.constant 0 : index
    %c0_10 = arith.constant 0 : index
    %17 = vector.load %arg10[%c0_9, %c0_10] : memref<2x16xf32, #tpu.memory_space<vmem>>, vector<2x16xf32>
    %18 = arith.truncf %16 : vector<2x1024xf32> to vector<2x1024xbf16>
    %c0_11 = arith.constant 0 : index
    %c0_12 = arith.constant 0 : index
    %19 = vector.load %arg5[%c0_11, %c0_12] : memref<1024x16xbf16, #tpu.memory_space<vmem>>, vector<1024x16xbf16>
    %cst_13 = arith.constant dense<0.000000e+00> : vector<2x16xf32>
    %20 = tpu.matmul %18, %19, %cst_13 {dimension_numbers = #tpu.dot_dimension_numbers<[1], [0], [0], [1], [0, 0, 1, 1], [], []>} : vector<2x1024xbf16>, vector<1024x16xbf16>, vector<2x16xf32> -> vector<2x16xf32>
    %21 = arith.addf %17, %20 : vector<2x16xf32>
    %c0_14 = arith.constant 0 : index
    %c0_15 = arith.constant 0 : index
    %22 = vector.load %arg10[%c0_14, %c0_15] : memref<2x16xf32, #tpu.memory_space<vmem>>, vector<2x16xf32>
    tpu.vector_store %arg10[%c0_14, %c0_15], %21 {strides = array<i32>} : memref<2x16xf32, #tpu.memory_space<vmem>>, vector<2x16xf32>,
    %c1_i32 = arith.constant 1 : i32
    %23 = arith.cmpi eq, %arg0, %c1_i32 : i32
    %24 = arith.extui %23 : i1 to i32
    %c0_i32_16 = arith.constant 0 : i32
    %25 = arith.cmpi ne, %24, %c0_i32_16 : i32
    scf.if %25 {
      %c0_17 = arith.constant 0 : index
      %c0_18 = arith.constant 0 : index
      %26 = vector.load %arg10[%c0_17, %c0_18] : memref<2x16xf32, #tpu.memory_space<vmem>>, vector<2x16xf32>
      %c0_19 = arith.constant 0 : index
      %c0_20 = arith.constant 0 : index
      %27 = vector.load %arg6[%c0_19, %c0_20] : memref<1x16xf32, #tpu.memory_space<vmem>>, vector<1x16xf32>
      %28 = vector.broadcast %27 : vector<1x16xf32> to vector<2x16xf32>
      %29 = arith.addf %26, %28 : vector<2x16xf32>
      %30 = arith.truncf %29 : vector<2x16xf32> to vector<2x16xbf16>
      %c0_21 = arith.constant 0 : index
      %c0_22 = arith.constant 0 : index
      %31 = vector.load %arg7[%c0_21, %c0_22] : memref<16x2xbf16, #tpu.memory_space<vmem>>, vector<16x2xbf16>
      %cst_23 = arith.constant dense<0.000000e+00> : vector<2x2xf32>
      %32 = tpu.matmul %30, %31, %cst_23 {dimension_numbers = #tpu.dot_dimension_numbers<[1], [0], [0], [1], [0, 0, 1, 1], [], []>} : vector<2x16xbf16>, vector<16x2xbf16>, vector<2x2xf32> -> vector<2x2xf32>
      %c0_24 = arith.constant 0 : index
      %c0_25 = arith.constant 0 : index
      %33 = vector.load %arg8[%c0_24, %c0_25] : memref<1x2xf32, #tpu.memory_space<vmem>>, vector<1x2xf32>
      %34 = vector.broadcast %33 : vector<1x2xf32> to vector<2x2xf32>
      %35 = arith.addf %32, %34 : vector<2x2xf32>
      %36 = arith.negf %35 : vector<2x2xf32>
      %37 = math.exp %36 : vector<2x2xf32>
      %cst_26 = arith.constant 1.000000e+00 : f32
      %38 = vector.broadcast %cst_26 : f32 to vector<2x2xf32>
      %39 = arith.addf %38, %37 : vector<2x2xf32>
      %40 = arith.divf %38, %39 : vector<2x2xf32>
      %c0_27 = arith.constant 0 : index
      %c0_28 = arith.constant 0 : index
      %41 = vector.load %arg9[%c0_27, %c0_28] : memref<2x2xf32, #tpu.memory_space<vmem>>, vector<2x2xf32>
      tpu.vector_store %arg9[%c0_27, %c0_28], %40 {strides = array<i32>} : memref<2x2xf32, #tpu.memory_space<vmem>>, vector<2x2xf32>,
    } else {
    }
    return
  }
  func.func @transform_0(%arg0: i32) -> (i32, i32) {
    %c0_i32 = arith.constant 0 : i32
    %c0_i32_0 = arith.constant 0 : i32
    return %c0_i32, %arg0 : i32, i32
  }
  func.func @transform_1(%arg0: i32) -> (i32, i32) {
    %c0_i32 = arith.constant 0 : i32
    %c0_i32_0 = arith.constant 0 : i32
    %c0_i32_1 = arith.constant 0 : i32
    return %c0_i32, %c0_i32_0 : i32, i32
  }
  func.func @transform_2(%arg0: i32) -> (i32, i32) {
    %c0_i32 = arith.constant 0 : i32
    %c0_i32_0 = arith.constant 0 : i32
    return %c0_i32, %arg0 : i32, i32
  }
  func.func @transform_3(%arg0: i32) -> (i32, i32) {
    %c0_i32 = arith.constant 0 : i32
    %c0_i32_0 = arith.constant 0 : i32
    return %c0_i32, %arg0 : i32, i32
  }
  func.func @transform_4(%arg0: i32) -> (i32, i32) {
    %c0_i32 = arith.constant 0 : i32
    %c0_i32_0 = arith.constant 0 : i32
    return %arg0, %c0_i32 : i32, i32
  }
  func.func @transform_5(%arg0: i32) -> (i32, i32) {
    %c0_i32 = arith.constant 0 : i32
    %c0_i32_0 = arith.constant 0 : i32
    %c0_i32_1 = arith.constant 0 : i32
    return %c0_i32, %c0_i32_0 : i32, i32
  }
  func.func @transform_6(%arg0: i32) -> (i32, i32) {
    %c0_i32 = arith.constant 0 : i32
    %c0_i32_0 = arith.constant 0 : i32
    %c0_i32_1 = arith.constant 0 : i32
    return %c0_i32, %c0_i32_0 : i32, i32
  }
  func.func @transform_7(%arg0: i32) -> (i32, i32) {
    %c0_i32 = arith.constant 0 : i32
    %c0_i32_0 = arith.constant 0 : i32
    %c0_i32_1 = arith.constant 0 : i32
    return %c0_i32, %c0_i32_0 : i32, i32
  }
  func.func @transform_8(%arg0: i32) -> (i32, i32) {
    %c0_i32 = arith.constant 0 : i32
    %c0_i32_0 = arith.constant 0 : i32
    %c0_i32_1 = arith.constant 0 : i32
    return %c0_i32, %c0_i32_0 : i32, i32
  }
}

</mosaic_0001>

<llo_original>
// kernel: pair_img_classifier_deepface.3
$region0: #{pair_img_classifier_deepface.3}
  #allocation0 [shape = 'u32[]', space=smem, size = 0x4, offset = 0x4, fixed_abs, tag = 'smem constant byte address 0x4 - core index']
  #allocation1 [shape = 'u32[72,128]{1,0:T(1,128)}', space=vmem, size = 0x9000, scoped, tag = 'internal scratch']
  %s0 = inlined_call_operand.vmem [shape: bf16[4,32,32], index: 0, kind: input, shape index: {}]
  %s1 = inlined_call_operand.vmem [shape: bf16[32,32], index: 1, kind: input, shape index: {}]
  %s2 = inlined_call_operand.vmem [shape: f32[1,32], index: 2, kind: input, shape index: {}]
  %s3 = inlined_call_operand.vmem [shape: bf16[32,128], index: 3, kind: input, shape index: {}]
  %s4 = inlined_call_operand.vmem [shape: f32[1,128], index: 4, kind: input, shape index: {}]
  %s5 = inlined_call_operand.vmem [shape: f32[32,128], index: 5, kind: output, shape index: {}]
  %s6 = sld [smem:[#allocation0]]
  $region30: #{pair_img_classifier_deepface.3} parent=0
    _
  %s8 = ssub.s32 1, %s6
  %s9 = scalar_select 0, %s8, %s6
  // Predicated region
  $region2: #{pair_img_classifier_deepface.3} parent=0 // pred_check
    _
  $region3: #{pair_img_classifier_deepface.3} parent=0 // pred_check_branch
    %11 = sbr.rel (0) target = $region5
  $region4: #{pair_img_classifier_deepface.3} parent=0 // pred_region
    _
  $region5: #{pair_img_classifier_deepface.3} parent=0 // pred_fallthru
    _
  // Predicated region
  $region6: #{pair_img_classifier_deepface.3} parent=0 // pred_check
    _
  $region7: #{pair_img_classifier_deepface.3} parent=0 // pred_check_branch
    %13 = sbr.rel (0) target = $region9
  $region8: #{pair_img_classifier_deepface.3} parent=0 // pred_region
    _
  $region9: #{pair_img_classifier_deepface.3} parent=0 // pred_fallthru
    _
  // Predicated region
  $region10: #{pair_img_classifier_deepface.3} parent=0 // pred_check
    _
  $region11: #{pair_img_classifier_deepface.3} parent=0 // pred_check_branch
    %15 = sbr.rel (0) target = $region13
  $region12: #{pair_img_classifier_deepface.3} parent=0 // pred_region
    _
  $region13: #{pair_img_classifier_deepface.3} parent=0 // pred_fallthru
    _
  // Predicated region
  $region14: #{pair_img_classifier_deepface.3} parent=0 // pred_check
    _
  $region15: #{pair_img_classifier_deepface.3} parent=0 // pred_check_branch
    %17 = sbr.rel (0) target = $region17
  $region16: #{pair_img_classifier_deepface.3} parent=0 // pred_region
    _
  $region17: #{pair_img_classifier_deepface.3} parent=0 // pred_fallthru
    _
  // Predicated region
  $region18: #{pair_img_classifier_deepface.3} parent=0 // pred_check
    _
  $region19: #{pair_img_classifier_deepface.3} parent=0 // pred_check_branch
    %19 = sbr.rel (0) target = $region21
  $region20: #{pair_img_classifier_deepface.3} parent=0 // pred_region
    _
  $region21: #{pair_img_classifier_deepface.3} parent=0 // pred_fallthru
    _
  %v21 = vld [vmem:[%s0] sm:$0xf]
  %v22 = vld [vmem:[%s0 + $0x4] sm:$0xf]
  %v23 = vld [vmem:[%s0 + $0x8] sm:$0xf]
  %v24 = vld [vmem:[%s0 + $0xc] sm:$0xf]
  %v25 = vld [vmem:[%s1] sm:$0xf]
  %v26 = vld [vmem:[%s1 + $0x4] sm:$0xf]
  %v27 = vld [vmem:[%s1 + $0x8] sm:$0xf]
  %v28 = vld [vmem:[%s1 + $0xc] sm:$0xf]
  %v29 = vld [vmem:[%s2] sm:$0x1]
  %v31 = vperm.slane %v29, 0
  %v37 = vunpack.c.l.b16 %v21
  %v38 = vunpack.c.l.b16 %v22
  %v39 = vunpack.c.l.b16 %v23
  %v40 = vunpack.c.l.b16 %v24
  %v41 = vpack.c.b16 %v38, %v37
  %v42 = vpack.c.b16 %v40, %v39
  %v47 = vunpack.c.l.b16 %v25
  %v48 = vunpack.c.l.b16 %v26
  %v49 = vunpack.c.l.b16 %v27
  %v50 = vunpack.c.l.b16 %v28
  %v51 = vpack.c.b16 %v48, %v47
  %v52 = vpack.c.b16 %v50, %v49
  %vm55 = vcmask 261120
  %v57 = vsel %vm55, %v41, 0
  %v60 = vsel %vm55, %v42, 0
  %62 = vmatpush.bf16.msra.mxu0 0
  %63 = vmatpush.bf16.msra.mxu0 0
  %64 = vmatpush.bf16.msra.mxu0 0
  %65 = vmatpush.bf16.msra.mxu0 0
  %66 = vmatpush.bf16.msra.mxu0 0
  %67 = vmatpush.bf16.msra.mxu0 0
  %68 = vmatpush.bf16.msra.mxu0 %v52
  %69 = vmatpush.bf16.msra.mxu0 %v51
  %70 = vmatmul.bf16.gmra.mxu0 %v57
  %v71 = vpop.f32.mrf.mxu0
  %v72 = vadd.f32 %v31, %v71
  %v73 = vpop.f32.mrf.mxu0
  %v74 = vadd.f32 %v31, %v73
  %75 = vmatmul.bf16.gmra.mxu0 %v60
  %v76 = vpop.f32.mrf.mxu0
  %v77 = vadd.f32 %v31, %v76
  %v78 = vpop.f32.mrf.mxu0
  %v79 = vadd.f32 %v31, %v78
  %80 = vdwg.mxu0
  %v81 = vxor.u32 %v72, 2147483648
  %v82 = vxor.u32 %v74, 2147483648
  %v83 = vxor.u32 %v77, 2147483648
  %v84 = vxor.u32 %v79, 2147483648
  %v85 = vmul.f32 %v81, 1.442695
  %v86 = vpow.pop %v85
  %v87 = vmul.f32 %v82, 1.442695
  %v88 = vpow.pop %v87
  %v89 = vmul.f32 %v83, 1.442695
  %v90 = vpow.pop %v89
  %v91 = vmul.f32 %v84, 1.442695
  %v92 = vpow.pop %v91
  %v93 = vadd.f32 %v86, 1.0
  %v94 = vadd.f32 %v88, 1.0
  %v95 = vadd.f32 %v90, 1.0
  %v96 = vadd.f32 %v92, 1.0
  %v97 = vrcp.pop %v93
  %v98 = vmul.f32 %v93, %v97
  %v99 = vsub.f32 1.0, %v98
  %v100 = vmul.f32 %v97, %v99
  %v101 = vadd.f32 %v97, %v100
  %vm102 = vweird.f32 %v93
  %vm103 = vweird.f32 %v97
  %vm104 = vmor %vm102, %vm103
  %v105 = vsel %vm104, %v97, %v101
  %v106 = vand.u32 2147483647, %v93
  %vm107 = vcmp.eq.f32.partialorder %v106, 8.507059e+37
  %v108 = vand.u32 %v93, 2147483648
  %v109 = vor.u32 1.1754944e-38, %v108
  %v110 = vsel %vm107, %v109, %v105
  %v111 = vmul.f32 1.0, %v110
  %v112 = vrcp.pop %v94
  %v113 = vmul.f32 %v94, %v112
  %v114 = vsub.f32 1.0, %v113
  %v115 = vmul.f32 %v112, %v114
  %v116 = vadd.f32 %v112, %v115
  %vm117 = vweird.f32 %v94
  %vm118 = vweird.f32 %v112
  %vm119 = vmor %vm117, %vm118
  %v120 = vsel %vm119, %v112, %v116
  %v121 = vand.u32 2147483647, %v94
  %vm122 = vcmp.eq.f32.partialorder %v121, 8.507059e+37
  %v123 = vand.u32 %v94, 2147483648
  %v124 = vor.u32 1.1754944e-38, %v123
  %v125 = vsel %vm122, %v124, %v120
  %v126 = vmul.f32 1.0, %v125
  %v127 = vrcp.pop %v95
  %v128 = vmul.f32 %v95, %v127
  %v129 = vsub.f32 1.0, %v128
  %v130 = vmul.f32 %v127, %v129
  %v131 = vadd.f32 %v127, %v130
  %vm132 = vweird.f32 %v95
  %vm133 = vweird.f32 %v127
  %vm134 = vmor %vm132, %vm133
  %v135 = vsel %vm134, %v127, %v131
  %v136 = vand.u32 2147483647, %v95
  %vm137 = vcmp.eq.f32.partialorder %v136, 8.507059e+37
  %v138 = vand.u32 %v95, 2147483648
  %v139 = vor.u32 1.1754944e-38, %v138
  %v140 = vsel %vm137, %v139, %v135
  %v141 = vmul.f32 1.0, %v140
  %v142 = vrcp.pop %v96
  %v143 = vmul.f32 %v96, %v142
  %v144 = vsub.f32 1.0, %v143
  %v145 = vmul.f32 %v142, %v144
  %v146 = vadd.f32 %v142, %v145
  %vm147 = vweird.f32 %v96
  %vm148 = vweird.f32 %v142
  %vm149 = vmor %vm147, %vm148
  %v150 = vsel %vm149, %v142, %v146
  %v151 = vand.u32 2147483647, %v96
  %vm152 = vcmp.eq.f32.partialorder %v151, 8.507059e+37
  %v153 = vand.u32 %v96, 2147483648
  %v154 = vor.u32 1.1754944e-38, %v153
  %v155 = vsel %vm152, %v154, %v150
  %v156 = vmul.f32 1.0, %v155
  %v157 = vmul.f32 %v72, %v111
  %v158 = vmul.f32 %v74, %v126
  %v159 = vmul.f32 %v77, %v141
  %v160 = vmul.f32 %v79, %v156
  %v161 = vpack.c.bf16 %v158, %v157
  %v162 = vpack.c.bf16 %v160, %v159
  %v163 = vld [vmem:[%s3] sm:$0xf]
  %v164 = vld [vmem:[%s3 + $0x4] sm:$0xf]
  %v165 = vld [vmem:[%s3 + $0x8] sm:$0xf]
  %v166 = vld [vmem:[%s3 + $0xc] sm:$0xf]
  %v167 = vld [vmem:[%s4] sm:$0x1]
  %v169 = vperm.slane %v167, 0
  %v175 = vunpack.c.l.b16 %v163
  %v176 = vunpack.c.l.b16 %v164
  %v177 = vunpack.c.l.b16 %v165
  %v178 = vunpack.c.l.b16 %v166
  %v179 = vpack.c.b16 %v176, %v175
  %v180 = vpack.c.b16 %v178, %v177
  %v184 = vsel %vm55, %v161, 0
  %v187 = vsel %vm55, %v162, 0
  %189 = vmatpush.bf16.msra.mxu0 0
  %190 = vmatpush.bf16.msra.mxu0 0
  %191 = vmatpush.bf16.msra.mxu0 0
  %192 = vmatpush.bf16.msra.mxu0 0
  %193 = vmatpush.bf16.msra.mxu0 0
  %194 = vmatpush.bf16.msra.mxu0 0
  %195 = vmatpush.bf16.msra.mxu0 %v180
  %196 = vmatpush.bf16.msra.mxu0 %v179
  %197 = vmatmul.bf16.gmra.mxu0 %v184
  %v198 = vpop.f32.mrf.mxu0
  %v199 = vadd.f32 %v169, %v198
  %v200 = vpop.f32.mrf.mxu0
  %v201 = vadd.f32 %v169, %v200
  %202 = vmatmul.bf16.gmra.mxu0 %v187
  %v203 = vpop.f32.mrf.mxu0
  %v204 = vadd.f32 %v169, %v203
  %v205 = vpop.f32.mrf.mxu0
  %v206 = vadd.f32 %v169, %v205
  %207 = vdwg.mxu0
  %v208 = vxor.u32 %v199, 2147483648
  %v209 = vxor.u32 %v201, 2147483648
  %v210 = vxor.u32 %v204, 2147483648
  %v211 = vxor.u32 %v206, 2147483648
  %v212 = vmul.f32 %v208, 1.442695
  %v213 = vpow.pop %v212
  %v214 = vmul.f32 %v209, 1.442695
  %v215 = vpow.pop %v214
  %v216 = vmul.f32 %v210, 1.442695
  %v217 = vpow.pop %v216
  %v218 = vmul.f32 %v211, 1.442695
  %v219 = vpow.pop %v218
  %v220 = vadd.f32 %v213, 1.0
  %v221 = vadd.f32 %v215, 1.0
  %v222 = vadd.f32 %v217, 1.0
  %v223 = vadd.f32 %v219, 1.0
  %v224 = vrcp.pop %v220
  %v225 = vmul.f32 %v220, %v224
  %v226 = vsub.f32 1.0, %v225
  %v227 = vmul.f32 %v224, %v226
  %v228 = vadd.f32 %v224, %v227
  %vm229 = vweird.f32 %v220
  %vm230 = vweird.f32 %v224
  %vm231 = vmor %vm229, %vm230
  %v232 = vsel %vm231, %v224, %v228
  %v233 = vand.u32 2147483647, %v220
  %vm234 = vcmp.eq.f32.partialorder %v233, 8.507059e+37
  %v235 = vand.u32 %v220, 2147483648
  %v236 = vor.u32 1.1754944e-38, %v235
  %v237 = vsel %vm234, %v236, %v232
  %v238 = vmul.f32 1.0, %v237
  %v239 = vrcp.pop %v221
  %v240 = vmul.f32 %v221, %v239
  %v241 = vsub.f32 1.0, %v240
  %v242 = vmul.f32 %v239, %v241
  %v243 = vadd.f32 %v239, %v242
  %vm244 = vweird.f32 %v221
  %vm245 = vweird.f32 %v239
  %vm246 = vmor %vm244, %vm245
  %v247 = vsel %vm246, %v239, %v243
  %v248 = vand.u32 2147483647, %v221
  %vm249 = vcmp.eq.f32.partialorder %v248, 8.507059e+37
  %v250 = vand.u32 %v221, 2147483648
  %v251 = vor.u32 1.1754944e-38, %v250
  %v252 = vsel %vm249, %v251, %v247
  %v253 = vmul.f32 1.0, %v252
  %v254 = vrcp.pop %v222
  %v255 = vmul.f32 %v222, %v254
  %v256 = vsub.f32 1.0, %v255
  %v257 = vmul.f32 %v254, %v256
  %v258 = vadd.f32 %v254, %v257
  %vm259 = vweird.f32 %v222
  %vm260 = vweird.f32 %v254
  %vm261 = vmor %vm259, %vm260
  %v262 = vsel %vm261, %v254, %v258
  %v263 = vand.u32 2147483647, %v222
  %vm264 = vcmp.eq.f32.partialorder %v263, 8.507059e+37
  %v265 = vand.u32 %v222, 2147483648
  %v266 = vor.u32 1.1754944e-38, %v265
  %v267 = vsel %vm264, %v266, %v262
  %v268 = vmul.f32 1.0, %v267
  %v269 = vrcp.pop %v223
  %v270 = vmul.f32 %v223, %v269
  %v271 = vsub.f32 1.0, %v270
  %v272 = vmul.f32 %v269, %v271
  %v273 = vadd.f32 %v269, %v272
  %vm274 = vweird.f32 %v223
  %vm275 = vweird.f32 %v269
  %vm276 = vmor %vm274, %vm275
  %v277 = vsel %vm276, %v269, %v273
  %v278 = vand.u32 2147483647, %v223
  %vm279 = vcmp.eq.f32.partialorder %v278, 8.507059e+37
  %v280 = vand.u32 %v223, 2147483648
  %v281 = vor.u32 1.1754944e-38, %v280
  %v282 = vsel %vm279, %v281, %v277
  %v283 = vmul.f32 1.0, %v282
  %v284 = vmul.f32 %v199, %v238
  %v285 = vmul.f32 %v201, %v253
  %v286 = vmul.f32 %v204, %v268
  %v287 = vmul.f32 %v206, %v283
  %v288 = vadd.f32 %v284, 0.0
  %v289 = vadd.f32 %v285, 0.0
  %v290 = vadd.f32 %v286, 0.0
  %v291 = vadd.f32 %v287, 0.0
  %s292 = scalar_lea.vmem %s0, 16
  %v293 = vld [vmem:[%s292] sm:$0xf]
  %v294 = vld [vmem:[%s292 + $0x4] sm:$0xf]
  %v295 = vld [vmem:[%s292 + $0x8] sm:$0xf]
  %v296 = vld [vmem:[%s292 + $0xc] sm:$0xf]
  %v301 = vunpack.c.l.b16 %v293
  %v302 = vunpack.c.l.b16 %v294
  %v303 = vunpack.c.l.b16 %v295
  %v304 = vunpack.c.l.b16 %v296
  %v305 = vpack.c.b16 %v302, %v301
  %v306 = vpack.c.b16 %v304, %v303
  %v308 = vsel %vm55, %v305, 0
  %v311 = vsel %vm55, %v306, 0
  %313 = vmatpush.bf16.msra.mxu0 0
  %314 = vmatpush.bf16.msra.mxu0 0
  %315 = vmatpush.bf16.msra.mxu0 0
  %316 = vmatpush.bf16.msra.mxu0 0
  %317 = vmatpush.bf16.msra.mxu0 0
  %318 = vmatpush.bf16.msra.mxu0 0
  %319 = vmatpush.bf16.msra.mxu0 %v52
  %320 = vmatpush.bf16.msra.mxu0 %v51
  %321 = vmatmul.bf16.gmra.mxu0 %v308
  %v322 = vpop.f32.mrf.mxu0
  %v323 = vadd.f32 %v31, %v322
  %v324 = vpop.f32.mrf.mxu0
  %v325 = vadd.f32 %v31, %v324
  %326 = vmatmul.bf16.gmra.mxu0 %v311
  %v327 = vpop.f32.mrf.mxu0
  %v328 = vadd.f32 %v31, %v327
  %v329 = vpop.f32.mrf.mxu0
  %v330 = vadd.f32 %v31, %v329
  %331 = vdwg.mxu0
  %v332 = vxor.u32 %v323, 2147483648
  %v333 = vxor.u32 %v325, 2147483648
  %v334 = vxor.u32 %v328, 2147483648
  %v335 = vxor.u32 %v330, 2147483648
  %v336 = vmul.f32 %v332, 1.442695
  %v337 = vpow.pop %v336
  %v338 = vmul.f32 %v333, 1.442695
  %v339 = vpow.pop %v338
  %v340 = vmul.f32 %v334, 1.442695
  %v341 = vpow.pop %v340
  %v342 = vmul.f32 %v335, 1.442695
  %v343 = vpow.pop %v342
  %v344 = vadd.f32 %v337, 1.0
  %v345 = vadd.f32 %v339, 1.0
  %v346 = vadd.f32 %v341, 1.0
  %v347 = vadd.f32 %v343, 1.0
  %v348 = vrcp.pop %v344
  %v349 = vmul.f32 %v344, %v348
  %v350 = vsub.f32 1.0, %v349
  %v351 = vmul.f32 %v348, %v350
  %v352 = vadd.f32 %v348, %v351
  %vm353 = vweird.f32 %v344
  %vm354 = vweird.f32 %v348
  %vm355 = vmor %vm353, %vm354
  %v356 = vsel %vm355, %v348, %v352
  %v357 = vand.u32 2147483647, %v344
  %vm358 = vcmp.eq.f32.partialorder %v357, 8.507059e+37
  %v359 = vand.u32 %v344, 2147483648
  %v360 = vor.u32 1.1754944e-38, %v359
  %v361 = vsel %vm358, %v360, %v356
  %v362 = vmul.f32 1.0, %v361
  %v363 = vrcp.pop %v345
  %v364 = vmul.f32 %v345, %v363
  %v365 = vsub.f32 1.0, %v364
  %v366 = vmul.f32 %v363, %v365
  %v367 = vadd.f32 %v363, %v366
  %vm368 = vweird.f32 %v345
  %vm369 = vweird.f32 %v363
  %vm370 = vmor %vm368, %vm369
  %v371 = vsel %vm370, %v363, %v367
  %v372 = vand.u32 2147483647, %v345
  %vm373 = vcmp.eq.f32.partialorder %v372, 8.507059e+37
  %v374 = vand.u32 %v345, 2147483648
  %v375 = vor.u32 1.1754944e-38, %v374
  %v376 = vsel %vm373, %v375, %v371
  %v377 = vmul.f32 1.0, %v376
  %v378 = vrcp.pop %v346
  %v379 = vmul.f32 %v346, %v378
  %v380 = vsub.f32 1.0, %v379
  %v381 = vmul.f32 %v378, %v380
  %v382 = vadd.f32 %v378, %v381
  %vm383 = vweird.f32 %v346
  %vm384 = vweird.f32 %v378
  %vm385 = vmor %vm383, %vm384
  %v386 = vsel %vm385, %v378, %v382
  %v387 = vand.u32 2147483647, %v346
  %vm388 = vcmp.eq.f32.partialorder %v387, 8.507059e+37
  %v389 = vand.u32 %v346, 2147483648
  %v390 = vor.u32 1.1754944e-38, %v389
  %v391 = vsel %vm388, %v390, %v386
  %v392 = vmul.f32 1.0, %v391
  %v393 = vrcp.pop %v347
  %v394 = vmul.f32 %v347, %v393
  %v395 = vsub.f32 1.0, %v394
  %v396 = vmul.f32 %v393, %v395
  %v397 = vadd.f32 %v393, %v396
  %vm398 = vweird.f32 %v347
  %vm399 = vweird.f32 %v393
  %vm400 = vmor %vm398, %vm399
  %v401 = vsel %vm400, %v393, %v397
  %v402 = vand.u32 2147483647, %v347
  %vm403 = vcmp.eq.f32.partialorder %v402, 8.507059e+37
  %v404 = vand.u32 %v347, 2147483648
  %v405 = vor.u32 1.1754944e-38, %v404
  %v406 = vsel %vm403, %v405, %v401
  %v407 = vmul.f32 1.0, %v406
  %v408 = vmul.f32 %v323, %v362
  %v409 = vmul.f32 %v325, %v377
  %v410 = vmul.f32 %v328, %v392
  %v411 = vmul.f32 %v330, %v407
  %v412 = vpack.c.bf16 %v409, %v408
  %v413 = vpack.c.bf16 %v411, %v410
  %v415 = vsel %vm55, %v412, 0
  %v418 = vsel %vm55, %v413, 0
  %420 = vmatpush.bf16.msra.mxu0 0
  %421 = vmatpush.bf16.msra.mxu0 0
  %422 = vmatpush.bf16.msra.mxu0 0
  %423 = vmatpush.bf16.msra.mxu0 0
  %424 = vmatpush.bf16.msra.mxu0 0
  %425 = vmatpush.bf16.msra.mxu0 0
  %426 = vmatpush.bf16.msra.mxu0 %v180
  %427 = vmatpush.bf16.msra.mxu0 %v179
  %428 = vmatmul.bf16.gmra.mxu0 %v415
  %v429 = vpop.f32.mrf.mxu0
  %v430 = vadd.f32 %v169, %v429
  %v431 = vpop.f32.mrf.mxu0
  %v432 = vadd.f32 %v169, %v431
  %433 = vmatmul.bf16.gmra.mxu0 %v418
  %v434 = vpop.f32.mrf.mxu0
  %v435 = vadd.f32 %v169, %v434
  %v436 = vpop.f32.mrf.mxu0
  %v437 = vadd.f32 %v169, %v436
  %438 = vdwg.mxu0
  %v439 = vxor.u32 %v430, 2147483648
  %v440 = vxor.u32 %v432, 2147483648
  %v441 = vxor.u32 %v435, 2147483648
  %v442 = vxor.u32 %v437, 2147483648
  %v443 = vmul.f32 %v439, 1.442695
  %v444 = vpow.pop %v443
  %v445 = vmul.f32 %v440, 1.442695
  %v446 = vpow.pop %v445
  %v447 = vmul.f32 %v441, 1.442695
  %v448 = vpow.pop %v447
  %v449 = vmul.f32 %v442, 1.442695
  %v450 = vpow.pop %v449
  %v451 = vadd.f32 %v444, 1.0
  %v452 = vadd.f32 %v446, 1.0
  %v453 = vadd.f32 %v448, 1.0
  %v454 = vadd.f32 %v450, 1.0
  %v455 = vrcp.pop %v451
  %v456 = vmul.f32 %v451, %v455
  %v457 = vsub.f32 1.0, %v456
  %v458 = vmul.f32 %v455, %v457
  %v459 = vadd.f32 %v455, %v458
  %vm460 = vweird.f32 %v451
  %vm461 = vweird.f32 %v455
  %vm462 = vmor %vm460, %vm461
  %v463 = vsel %vm462, %v455, %v459
  %v464 = vand.u32 2147483647, %v451
  %vm465 = vcmp.eq.f32.partialorder %v464, 8.507059e+37
  %v466 = vand.u32 %v451, 2147483648
  %v467 = vor.u32 1.1754944e-38, %v466
  %v468 = vsel %vm465, %v467, %v463
  %v469 = vmul.f32 1.0, %v468
  %v470 = vrcp.pop %v452
  %v471 = vmul.f32 %v452, %v470
  %v472 = vsub.f32 1.0, %v471
  %v473 = vmul.f32 %v470, %v472
  %v474 = vadd.f32 %v470, %v473
  %vm475 = vweird.f32 %v452
  %vm476 = vweird.f32 %v470
  %vm477 = vmor %vm475, %vm476
  %v478 = vsel %vm477, %v470, %v474
  %v479 = vand.u32 2147483647, %v452
  %vm480 = vcmp.eq.f32.partialorder %v479, 8.507059e+37
  %v481 = vand.u32 %v452, 2147483648
  %v482 = vor.u32 1.1754944e-38, %v481
  %v483 = vsel %vm480, %v482, %v478
  %v484 = vmul.f32 1.0, %v483
  %v485 = vrcp.pop %v453
  %v486 = vmul.f32 %v453, %v485
  %v487 = vsub.f32 1.0, %v486
  %v488 = vmul.f32 %v485, %v487
  %v489 = vadd.f32 %v485, %v488
  %vm490 = vweird.f32 %v453
  %vm491 = vweird.f32 %v485
  %vm492 = vmor %vm490, %vm491
  %v493 = vsel %vm492, %v485, %v489
  %v494 = vand.u32 2147483647, %v453
  %vm495 = vcmp.eq.f32.partialorder %v494, 8.507059e+37
  %v496 = vand.u32 %v453, 2147483648
  %v497 = vor.u32 1.1754944e-38, %v496
  %v498 = vsel %vm495, %v497, %v493
  %v499 = vmul.f32 1.0, %v498
  %v500 = vrcp.pop %v454
  %v501 = vmul.f32 %v454, %v500
  %v502 = vsub.f32 1.0, %v501
  %v503 = vmul.f32 %v500, %v502
  %v504 = vadd.f32 %v500, %v503
  %vm505 = vweird.f32 %v454
  %vm506 = vweird.f32 %v500
  %vm507 = vmor %vm505, %vm506
  %v508 = vsel %vm507, %v500, %v504
  %v509 = vand.u32 2147483647, %v454
  %vm510 = vcmp.eq.f32.partialorder %v509, 8.507059e+37
  %v511 = vand.u32 %v454, 2147483648
  %v512 = vor.u32 1.1754944e-38, %v511
  %v513 = vsel %vm510, %v512, %v508
  %v514 = vmul.f32 1.0, %v513
  %v515 = vmul.f32 %v430, %v469
  %v516 = vmul.f32 %v432, %v484
  %v517 = vmul.f32 %v435, %v499
  %v518 = vmul.f32 %v437, %v514
  %v519 = vadd.f32 %v288, %v515
  %v520 = vadd.f32 %v289, %v516
  %v521 = vadd.f32 %v290, %v517
  %v522 = vadd.f32 %v291, %v518
  %s523 = scalar_lea.vmem %s0, 32
  %v524 = vld [vmem:[%s523] sm:$0xf]
  %v525 = vld [vmem:[%s523 + $0x4] sm:$0xf]
  %v526 = vld [vmem:[%s523 + $0x8] sm:$0xf]
  %v527 = vld [vmem:[%s523 + $0xc] sm:$0xf]
  %v532 = vunpack.c.l.b16 %v524
  %v533 = vunpack.c.l.b16 %v525
  %v534 = vunpack.c.l.b16 %v526
  %v535 = vunpack.c.l.b16 %v527
  %v536 = vpack.c.b16 %v533, %v532
  %v537 = vpack.c.b16 %v535, %v534
  %v539 = vsel %vm55, %v536, 0
  %v542 = vsel %vm55, %v537, 0
  %544 = vmatpush.bf16.msra.mxu0 0
  %545 = vmatpush.bf16.msra.mxu0 0
  %546 = vmatpush.bf16.msra.mxu0 0
  %547 = vmatpush.bf16.msra.mxu0 0
  %548 = vmatpush.bf16.msra.mxu0 0
  %549 = vmatpush.bf16.msra.mxu0 0
  %550 = vmatpush.bf16.msra.mxu0 %v52
  %551 = vmatpush.bf16.msra.mxu0 %v51
  %552 = vmatmul.bf16.gmra.mxu0 %v539
  %v553 = vpop.f32.mrf.mxu0
  %v554 = vadd.f32 %v31, %v553
  %v555 = vpop.f32.mrf.mxu0
  %v556 = vadd.f32 %v31, %v555
  %557 = vmatmul.bf16.gmra.mxu0 %v542
  %v558 = vpop.f32.mrf.mxu0
  %v559 = vadd.f32 %v31, %v558
  %v560 = vpop.f32.mrf.mxu0
  %v561 = vadd.f32 %v31, %v560
  %562 = vdwg.mxu0
  %v563 = vxor.u32 %v554, 2147483648
  %v564 = vxor.u32 %v556, 2147483648
  %v565 = vxor.u32 %v559, 2147483648
  %v566 = vxor.u32 %v561, 2147483648
  %v567 = vmul.f32 %v563, 1.442695
  %v568 = vpow.pop %v567
  %v569 = vmul.f32 %v564, 1.442695
  %v570 = vpow.pop %v569
  %v571 = vmul.f32 %v565, 1.442695
  %v572 = vpow.pop %v571
  %v573 = vmul.f32 %v566, 1.442695
  %v574 = vpow.pop %v573
  %v575 = vadd.f32 %v568, 1.0
  %v576 = vadd.f32 %v570, 1.0
  %v577 = vadd.f32 %v572, 1.0
  %v578 = vadd.f32 %v574, 1.0
  %v579 = vrcp.pop %v575
  %v580 = vmul.f32 %v575, %v579
  %v581 = vsub.f32 1.0, %v580
  %v582 = vmul.f32 %v579, %v581
  %v583 = vadd.f32 %v579, %v582
  %vm584 = vweird.f32 %v575
  %vm585 = vweird.f32 %v579
  %vm586 = vmor %vm584, %vm585
  %v587 = vsel %vm586, %v579, %v583
  %v588 = vand.u32 2147483647, %v575
  %vm589 = vcmp.eq.f32.partialorder %v588, 8.507059e+37
  %v590 = vand.u32 %v575, 2147483648
  %v591 = vor.u32 1.1754944e-38, %v590
  %v592 = vsel %vm589, %v591, %v587
  %v593 = vmul.f32 1.0, %v592
  %v594 = vrcp.pop %v576
  %v595 = vmul.f32 %v576, %v594
  %v596 = vsub.f32 1.0, %v595
  %v597 = vmul.f32 %v594, %v596
  %v598 = vadd.f32 %v594, %v597
  %vm599 = vweird.f32 %v576
  %vm600 = vweird.f32 %v594
  %vm601 = vmor %vm599, %vm600
  %v602 = vsel %vm601, %v594, %v598
  %v603 = vand.u32 2147483647, %v576
  %vm604 = vcmp.eq.f32.partialorder %v603, 8.507059e+37
  %v605 = vand.u32 %v576, 2147483648
  %v606 = vor.u32 1.1754944e-38, %v605
  %v607 = vsel %vm604, %v606, %v602
  %v608 = vmul.f32 1.0, %v607
  %v609 = vrcp.pop %v577
  %v610 = vmul.f32 %v577, %v609
  %v611 = vsub.f32 1.0, %v610
  %v612 = vmul.f32 %v609, %v611
  %v613 = vadd.f32 %v609, %v612
  %vm614 = vweird.f32 %v577
  %vm615 = vweird.f32 %v609
  %vm616 = vmor %vm614, %vm615
  %v617 = vsel %vm616, %v609, %v613
  %v618 = vand.u32 2147483647, %v577
  %vm619 = vcmp.eq.f32.partialorder %v618, 8.507059e+37
  %v620 = vand.u32 %v577, 2147483648
  %v621 = vor.u32 1.1754944e-38, %v620
  %v622 = vsel %vm619, %v621, %v617
  %v623 = vmul.f32 1.0, %v622
  %v624 = vrcp.pop %v578
  %v625 = vmul.f32 %v578, %v624
  %v626 = vsub.f32 1.0, %v625
  %v627 = vmul.f32 %v624, %v626
  %v628 = vadd.f32 %v624, %v627
  %vm629 = vweird.f32 %v578
  %vm630 = vweird.f32 %v624
  %vm631 = vmor %vm629, %vm630
  %v632 = vsel %vm631, %v624, %v628
  %v633 = vand.u32 2147483647, %v578
  %vm634 = vcmp.eq.f32.partialorder %v633, 8.507059e+37
  %v635 = vand.u32 %v578, 2147483648
  %v636 = vor.u32 1.1754944e-38, %v635
  %v637 = vsel %vm634, %v636, %v632
  %v638 = vmul.f32 1.0, %v637
  %v639 = vmul.f32 %v554, %v593
  %v640 = vmul.f32 %v556, %v608
  %v641 = vmul.f32 %v559, %v623
  %v642 = vmul.f32 %v561, %v638
  %v643 = vpack.c.bf16 %v640, %v639
  %v644 = vpack.c.bf16 %v642, %v641
  %v646 = vsel %vm55, %v643, 0
  %v649 = vsel %vm55, %v644, 0
  %651 = vmatpush.bf16.msra.mxu0 0
  %652 = vmatpush.bf16.msra.mxu0 0
  %653 = vmatpush.bf16.msra.mxu0 0
  %654 = vmatpush.bf16.msra.mxu0 0
  %655 = vmatpush.bf16.msra.mxu0 0
  %656 = vmatpush.bf16.msra.mxu0 0
  %657 = vmatpush.bf16.msra.mxu0 %v180
  %658 = vmatpush.bf16.msra.mxu0 %v179
  %659 = vmatmul.bf16.gmra.mxu0 %v646
  %v660 = vpop.f32.mrf.mxu0
  %v661 = vadd.f32 %v169, %v660
  %v662 = vpop.f32.mrf.mxu0
  %v663 = vadd.f32 %v169, %v662
  %664 = vmatmul.bf16.gmra.mxu0 %v649
  %v665 = vpop.f32.mrf.mxu0
  %v666 = vadd.f32 %v169, %v665
  %v667 = vpop.f32.mrf.mxu0
  %v668 = vadd.f32 %v169, %v667
  %669 = vdwg.mxu0
  %v670 = vxor.u32 %v661, 2147483648
  %v671 = vxor.u32 %v663, 2147483648
  %v672 = vxor.u32 %v666, 2147483648
  %v673 = vxor.u32 %v668, 2147483648
  %v674 = vmul.f32 %v670, 1.442695
  %v675 = vpow.pop %v674
  %v676 = vmul.f32 %v671, 1.442695
  %v677 = vpow.pop %v676
  %v678 = vmul.f32 %v672, 1.442695
  %v679 = vpow.pop %v678
  %v680 = vmul.f32 %v673, 1.442695
  %v681 = vpow.pop %v680
  %v682 = vadd.f32 %v675, 1.0
  %v683 = vadd.f32 %v677, 1.0
  %v684 = vadd.f32 %v679, 1.0
  %v685 = vadd.f32 %v681, 1.0
  %v686 = vrcp.pop %v682
  %v687 = vmul.f32 %v682, %v686
  %v688 = vsub.f32 1.0, %v687
  %v689 = vmul.f32 %v686, %v688
  %v690 = vadd.f32 %v686, %v689
  %vm691 = vweird.f32 %v682
  %vm692 = vweird.f32 %v686
  %vm693 = vmor %vm691, %vm692
  %v694 = vsel %vm693, %v686, %v690
  %v695 = vand.u32 2147483647, %v682
  %vm696 = vcmp.eq.f32.partialorder %v695, 8.507059e+37
  %v697 = vand.u32 %v682, 2147483648
  %v698 = vor.u32 1.1754944e-38, %v697
  %v699 = vsel %vm696, %v698, %v694
  %v700 = vmul.f32 1.0, %v699
  %v701 = vrcp.pop %v683
  %v702 = vmul.f32 %v683, %v701
  %v703 = vsub.f32 1.0, %v702
  %v704 = vmul.f32 %v701, %v703
  %v705 = vadd.f32 %v701, %v704
  %vm706 = vweird.f32 %v683
  %vm707 = vweird.f32 %v701
  %vm708 = vmor %vm706, %vm707
  %v709 = vsel %vm708, %v701, %v705
  %v710 = vand.u32 2147483647, %v683
  %vm711 = vcmp.eq.f32.partialorder %v710, 8.507059e+37
  %v712 = vand.u32 %v683, 2147483648
  %v713 = vor.u32 1.1754944e-38, %v712
  %v714 = vsel %vm711, %v713, %v709
  %v715 = vmul.f32 1.0, %v714
  %v716 = vrcp.pop %v684
  %v717 = vmul.f32 %v684, %v716
  %v718 = vsub.f32 1.0, %v717
  %v719 = vmul.f32 %v716, %v718
  %v720 = vadd.f32 %v716, %v719
  %vm721 = vweird.f32 %v684
  %vm722 = vweird.f32 %v716
  %vm723 = vmor %vm721, %vm722
  %v724 = vsel %vm723, %v716, %v720
  %v725 = vand.u32 2147483647, %v684
  %vm726 = vcmp.eq.f32.partialorder %v725, 8.507059e+37
  %v727 = vand.u32 %v684, 2147483648
  %v728 = vor.u32 1.1754944e-38, %v727
  %v729 = vsel %vm726, %v728, %v724
  %v730 = vmul.f32 1.0, %v729
  %v731 = vrcp.pop %v685
  %v732 = vmul.f32 %v685, %v731
  %v733 = vsub.f32 1.0, %v732
  %v734 = vmul.f32 %v731, %v733
  %v735 = vadd.f32 %v731, %v734
  %vm736 = vweird.f32 %v685
  %vm737 = vweird.f32 %v731
  %vm738 = vmor %vm736, %vm737
  %v739 = vsel %vm738, %v731, %v735
  %v740 = vand.u32 2147483647, %v685
  %vm741 = vcmp.eq.f32.partialorder %v740, 8.507059e+37
  %v742 = vand.u32 %v685, 2147483648
  %v743 = vor.u32 1.1754944e-38, %v742
  %v744 = vsel %vm741, %v743, %v739
  %v745 = vmul.f32 1.0, %v744
  %v746 = vmul.f32 %v661, %v700
  %v747 = vmul.f32 %v663, %v715
  %v748 = vmul.f32 %v666, %v730
  %v749 = vmul.f32 %v668, %v745
  %v750 = vadd.f32 %v519, %v746
  %v751 = vadd.f32 %v520, %v747
  %v752 = vadd.f32 %v521, %v748
  %v753 = vadd.f32 %v522, %v749
  %s754 = scalar_lea.vmem %s0, 48
  %v755 = vld [vmem:[%s754] sm:$0xf]
  %v756 = vld [vmem:[%s754 + $0x4] sm:$0xf]
  %v757 = vld [vmem:[%s754 + $0x8] sm:$0xf]
  %v758 = vld [vmem:[%s754 + $0xc] sm:$0xf]
  %v763 = vunpack.c.l.b16 %v755
  %v764 = vunpack.c.l.b16 %v756
  %v765 = vunpack.c.l.b16 %v757
  %v766 = vunpack.c.l.b16 %v758
  %v767 = vpack.c.b16 %v764, %v763
  %v768 = vpack.c.b16 %v766, %v765
  %v770 = vsel %vm55, %v767, 0
  %v773 = vsel %vm55, %v768, 0
  %775 = vmatpush.bf16.msra.mxu0 0
  %776 = vmatpush.bf16.msra.mxu0 0
  %777 = vmatpush.bf16.msra.mxu0 0
  %778 = vmatpush.bf16.msra.mxu0 0
  %779 = vmatpush.bf16.msra.mxu0 0
  %780 = vmatpush.bf16.msra.mxu0 0
  %781 = vmatpush.bf16.msra.mxu0 %v52
  %782 = vmatpush.bf16.msra.mxu0 %v51
  %783 = vmatmul.bf16.gmra.mxu0 %v770
  %v784 = vpop.f32.mrf.mxu0
  %v785 = vadd.f32 %v31, %v784
  %v786 = vpop.f32.mrf.mxu0
  %v787 = vadd.f32 %v31, %v786
  %788 = vmatmul.bf16.gmra.mxu0 %v773
  %v789 = vpop.f32.mrf.mxu0
  %v790 = vadd.f32 %v31, %v789
  %v791 = vpop.f32.mrf.mxu0
  %v792 = vadd.f32 %v31, %v791
  %793 = vdwg.mxu0
  %v794 = vxor.u32 %v785, 2147483648
  %v795 = vxor.u32 %v787, 2147483648
  %v796 = vxor.u32 %v790, 2147483648
  %v797 = vxor.u32 %v792, 2147483648
  %v798 = vmul.f32 %v794, 1.442695
  %v799 = vpow.pop %v798
  %v800 = vmul.f32 %v795, 1.442695
  %v801 = vpow.pop %v800
  %v802 = vmul.f32 %v796, 1.442695
  %v803 = vpow.pop %v802
  %v804 = vmul.f32 %v797, 1.442695
  %v805 = vpow.pop %v804
  %v806 = vadd.f32 %v799, 1.0
  %v807 = vadd.f32 %v801, 1.0
  %v808 = vadd.f32 %v803, 1.0
  %v809 = vadd.f32 %v805, 1.0
  %v810 = vrcp.pop %v806
  %v811 = vmul.f32 %v806, %v810
  %v812 = vsub.f32 1.0, %v811
  %v813 = vmul.f32 %v810, %v812
  %v814 = vadd.f32 %v810, %v813
  %vm815 = vweird.f32 %v806
  %vm816 = vweird.f32 %v810
  %vm817 = vmor %vm815, %vm816
  %v818 = vsel %vm817, %v810, %v814
  %v819 = vand.u32 2147483647, %v806
  %vm820 = vcmp.eq.f32.partialorder %v819, 8.507059e+37
  %v821 = vand.u32 %v806, 2147483648
  %v822 = vor.u32 1.1754944e-38, %v821
  %v823 = vsel %vm820, %v822, %v818
  %v824 = vmul.f32 1.0, %v823
  %v825 = vrcp.pop %v807
  %v826 = vmul.f32 %v807, %v825
  %v827 = vsub.f32 1.0, %v826
  %v828 = vmul.f32 %v825, %v827
  %v829 = vadd.f32 %v825, %v828
  %vm830 = vweird.f32 %v807
  %vm831 = vweird.f32 %v825
  %vm832 = vmor %vm830, %vm831
  %v833 = vsel %vm832, %v825, %v829
  %v834 = vand.u32 2147483647, %v807
  %vm835 = vcmp.eq.f32.partialorder %v834, 8.507059e+37
  %v836 = vand.u32 %v807, 2147483648
  %v837 = vor.u32 1.1754944e-38, %v836
  %v838 = vsel %vm835, %v837, %v833
  %v839 = vmul.f32 1.0, %v838
  %v840 = vrcp.pop %v808
  %v841 = vmul.f32 %v808, %v840
  %v842 = vsub.f32 1.0, %v841
  %v843 = vmul.f32 %v840, %v842
  %v844 = vadd.f32 %v840, %v843
  %vm845 = vweird.f32 %v808
  %vm846 = vweird.f32 %v840
  %vm847 = vmor %vm845, %vm846
  %v848 = vsel %vm847, %v840, %v844
  %v849 = vand.u32 2147483647, %v808
  %vm850 = vcmp.eq.f32.partialorder %v849, 8.507059e+37
  %v851 = vand.u32 %v808, 2147483648
  %v852 = vor.u32 1.1754944e-38, %v851
  %v853 = vsel %vm850, %v852, %v848
  %v854 = vmul.f32 1.0, %v853
  %v855 = vrcp.pop %v809
  %v856 = vmul.f32 %v809, %v855
  %v857 = vsub.f32 1.0, %v856
  %v858 = vmul.f32 %v855, %v857
  %v859 = vadd.f32 %v855, %v858
  %vm860 = vweird.f32 %v809
  %vm861 = vweird.f32 %v855
  %vm862 = vmor %vm860, %vm861
  %v863 = vsel %vm862, %v855, %v859
  %v864 = vand.u32 2147483647, %v809
  %vm865 = vcmp.eq.f32.partialorder %v864, 8.507059e+37
  %v866 = vand.u32 %v809, 2147483648
  %v867 = vor.u32 1.1754944e-38, %v866
  %v868 = vsel %vm865, %v867, %v863
  %v869 = vmul.f32 1.0, %v868
  %v870 = vmul.f32 %v785, %v824
  %v871 = vmul.f32 %v787, %v839
  %v872 = vmul.f32 %v790, %v854
  %v873 = vmul.f32 %v792, %v869
  %v874 = vpack.c.bf16 %v871, %v870
  %v875 = vpack.c.bf16 %v873, %v872
  %v877 = vsel %vm55, %v874, 0
  %v880 = vsel %vm55, %v875, 0
  %882 = vmatpush.bf16.msra.mxu0 0
  %883 = vmatpush.bf16.msra.mxu0 0
  %884 = vmatpush.bf16.msra.mxu0 0
  %885 = vmatpush.bf16.msra.mxu0 0
  %886 = vmatpush.bf16.msra.mxu0 0
  %887 = vmatpush.bf16.msra.mxu0 0
  %888 = vmatpush.bf16.msra.mxu0 %v180
  %889 = vmatpush.bf16.msra.mxu0 %v179
  %890 = vmatmul.bf16.gmra.mxu0 %v877
  %v891 = vpop.f32.mrf.mxu0
  %v892 = vadd.f32 %v169, %v891
  %v893 = vpop.f32.mrf.mxu0
  %v894 = vadd.f32 %v169, %v893
  %895 = vmatmul.bf16.gmra.mxu0 %v880
  %v896 = vpop.f32.mrf.mxu0
  %v897 = vadd.f32 %v169, %v896
  %v898 = vpop.f32.mrf.mxu0
  %v899 = vadd.f32 %v169, %v898
  %900 = vdwg.mxu0
  %v901 = vxor.u32 %v892, 2147483648
  %v902 = vxor.u32 %v894, 2147483648
  %v903 = vxor.u32 %v897, 2147483648
  %v904 = vxor.u32 %v899, 2147483648
  %v905 = vmul.f32 %v901, 1.442695
  %v906 = vpow.pop %v905
  %v907 = vmul.f32 %v902, 1.442695
  %v908 = vpow.pop %v907
  %v909 = vmul.f32 %v903, 1.442695
  %v910 = vpow.pop %v909
  %v911 = vmul.f32 %v904, 1.442695
  %v912 = vpow.pop %v911
  %v913 = vadd.f32 %v906, 1.0
  %v914 = vadd.f32 %v908, 1.0
  %v915 = vadd.f32 %v910, 1.0
  %v916 = vadd.f32 %v912, 1.0
  %v917 = vrcp.pop %v913
  %v918 = vmul.f32 %v913, %v917
  %v919 = vsub.f32 1.0, %v918
  %v920 = vmul.f32 %v917, %v919
  %v921 = vadd.f32 %v917, %v920
  %vm922 = vweird.f32 %v913
  %vm923 = vweird.f32 %v917
  %vm924 = vmor %vm922, %vm923
  %v925 = vsel %vm924, %v917, %v921
  %v926 = vand.u32 2147483647, %v913
  %vm927 = vcmp.eq.f32.partialorder %v926, 8.507059e+37
  %v928 = vand.u32 %v913, 2147483648
  %v929 = vor.u32 1.1754944e-38, %v928
  %v930 = vsel %vm927, %v929, %v925
  %v931 = vmul.f32 1.0, %v930
  %v932 = vrcp.pop %v914
  %v933 = vmul.f32 %v914, %v932
  %v934 = vsub.f32 1.0, %v933
  %v935 = vmul.f32 %v932, %v934
  %v936 = vadd.f32 %v932, %v935
  %vm937 = vweird.f32 %v914
  %vm938 = vweird.f32 %v932
  %vm939 = vmor %vm937, %vm938
  %v940 = vsel %vm939, %v932, %v936
  %v941 = vand.u32 2147483647, %v914
  %vm942 = vcmp.eq.f32.partialorder %v941, 8.507059e+37
  %v943 = vand.u32 %v914, 2147483648
  %v944 = vor.u32 1.1754944e-38, %v943
  %v945 = vsel %vm942, %v944, %v940
  %v946 = vmul.f32 1.0, %v945
  %v947 = vrcp.pop %v915
  %v948 = vmul.f32 %v915, %v947
  %v949 = vsub.f32 1.0, %v948
  %v950 = vmul.f32 %v947, %v949
  %v951 = vadd.f32 %v947, %v950
  %vm952 = vweird.f32 %v915
  %vm953 = vweird.f32 %v947
  %vm954 = vmor %vm952, %vm953
  %v955 = vsel %vm954, %v947, %v951
  %v956 = vand.u32 2147483647, %v915
  %vm957 = vcmp.eq.f32.partialorder %v956, 8.507059e+37
  %v958 = vand.u32 %v915, 2147483648
  %v959 = vor.u32 1.1754944e-38, %v958
  %v960 = vsel %vm957, %v959, %v955
  %v961 = vmul.f32 1.0, %v960
  %v962 = vrcp.pop %v916
  %v963 = vmul.f32 %v916, %v962
  %v964 = vsub.f32 1.0, %v963
  %v965 = vmul.f32 %v962, %v964
  %v966 = vadd.f32 %v962, %v965
  %vm967 = vweird.f32 %v916
  %vm968 = vweird.f32 %v962
  %vm969 = vmor %vm967, %vm968
  %v970 = vsel %vm969, %v962, %v966
  %v971 = vand.u32 2147483647, %v916
  %vm972 = vcmp.eq.f32.partialorder %v971, 8.507059e+37
  %v973 = vand.u32 %v916, 2147483648
  %v974 = vor.u32 1.1754944e-38, %v973
  %v975 = vsel %vm972, %v974, %v970
  %v976 = vmul.f32 1.0, %v975
  %v977 = vmul.f32 %v892, %v931
  %v978 = vmul.f32 %v894, %v946
  %v979 = vmul.f32 %v897, %v961
  %v980 = vmul.f32 %v899, %v976
  %v981 = vadd.f32 %v750, %v977
  %v982 = vadd.f32 %v751, %v978
  %v983 = vadd.f32 %v752, %v979
  %v984 = vadd.f32 %v753, %v980
  %v985 = vmul.f32 %v981, 0.25
  %v986 = vmul.f32 %v982, 0.25
  %v987 = vmul.f32 %v983, 0.25
  %v988 = vmul.f32 %v984, 0.25
  %989 = vst [vmem:[%s5] sm:$0xff] %v985
  %990 = vst [vmem:[%s5 + $0x8] sm:$0xff] %v986
  %991 = vst [vmem:[%s5 + $0x10] sm:$0xff] %v987
  %992 = vst [vmem:[%s5 + $0x18] sm:$0xff] %v988
  // Predicated region
  $region22: #{pair_img_classifier_deepface.3} parent=0 // pred_check
    _
  $region23: #{pair_img_classifier_deepface.3} parent=0 // pred_check_branch
    %994 = sbr.rel (0) target = $region25
  $region24: #{pair_img_classifier_deepface.3} parent=0 // pred_region
    _
  $region25: #{pair_img_classifier_deepface.3} parent=0 // pred_fallthru
    _
  // Predicated region
  $region26: #{pair_img_classifier_deepface.3} parent=0 // pred_check
    _
  $region27: #{pair_img_classifier_deepface.3} parent=0 // pred_check_branch
    %996 = sbr.rel (0) target = $region29
  $region28: #{pair_img_classifier_deepface.3} parent=0 // pred_region
    _
  $region29: #{pair_img_classifier_deepface.3} parent=0 // pred_fallthru
    _

// kernel: pair_img_classifier_deepface.4
$region0: #{pair_img_classifier_deepface.4}
  #allocation0 [shape = 'u32[]', space=smem, size = 0x4, offset = 0x4, fixed_abs, tag = 'smem constant byte address 0x4 - core index']
  #allocation1 [shape = 'u32[72,128]{1,0:T(1,128)}', space=vmem, size = 0x9000, scoped, tag = 'internal scratch']
  #allocation2 [shape = 'f32[2,256]{1,0:T(2,128)}', space=vmem, size = 0x800, scoped, tag = 'scratch operand']
  %s0 = inlined_call_operand.vmem [shape: f32[2,2048], index: 0, kind: input, shape index: {}]
  %s1 = inlined_call_operand.hbm [shape: bf16[2048,256], index: 1, kind: input, shape index: {}]
  %s2 = inlined_call_operand.vmem [shape: f32[1,256], index: 2, kind: input, shape index: {}]
  %s3 = inlined_call_operand.vmem [shape: f32[2,256], index: 3, kind: output, shape index: {}]
  %s4 = sld [smem:[#allocation0]]
  $region57: #{pair_img_classifier_deepface.4} parent=0
    _
  %s6 = ssub.s32 1, %s4
  %s7 = scalar_select 0, %s6, %s4
  $region1: #{pair_img_classifier_deepface.4} parent=0
    #allocation3 [shape = 'u8[1048576]{0}', space=vmem, size = 0x100000, scoped, tag = 'input window, operand 1']
    #allocation4 [shape = 's32[2]{0}', space=sflag, size = 0x8, scoped, tag = 'scoped memory for pair_img_classifier_deepface.4']
    %8 = vsyncpa [#allocation4], 0
    %s9 = scalar_lea.sflag [#allocation4], 1
    %10 = vsyncpa %s9, 0
    loop: start=0, step=1, limit=4
    $region2: #{pair_img_classifier_deepface.4} parent=1 // loop_pre_header
      _
    $region3: #{pair_img_classifier_deepface.4} parent=1 // loop_header
      %s12 = sphi 0, %s16
      %p13 = scmp.ge.s32.totalorder %s12, 4
      %s22 = sphi 0, %s24
      %s25 = sphi 0, %s22
      %s26 = sphi 0, %s25
      %s42 = sphi 0, %s26
      %s48 = sphi 0, %s50
      %s51 = sphi 0, %s48
      %s52 = sphi 0, %s51
      %s68 = sphi 0, %s52
      %s72 = sphi 0, %s72
      %s74 = sphi 0, %s72
      %s75 = sphi 0, %s74
      %s89 = sphi 0, %s75
      %s93 = sphi 0, %s93
      %s95 = sphi 0, %s93
      %s96 = sphi 0, %s95
      %s110 = sphi 0, %s96
    $region4: #{pair_img_classifier_deepface.4} parent=1 // loop_header_branch
      %15 = sbr.rel (%p13) target = $region8
    $region5: #{pair_img_classifier_deepface.4} parent=1 // loop_body
      %s17 = ssub.s32 %s12, 1
      %s18 = ssub.s32 %s12, 2
      %s19 = sadd.s32 %s12, 1
      %s20 = ssub.s32 %s12, %s19
      %p21 = scmp.eq.s32.totalorder %s20, 0
      %s23 = sadd.s32 %s22, 1
      %s24 = scalar_select %p21, %s22, %s23
      %p27 = pneg %p21
      %p28 = scmp.eq.s32.totalorder %s12, 1
      %p29 = por %p27, %p28
      %p30 = scmp.ne.s32.totalorder %s22, %s25
      %p31 = scmp.eq.s32.totalorder %s12, 0
      %p32 = por %p30, %p31
      %p33 = scmp.ne.s32.totalorder %s22, %s25
      %p34 = scmp.eq.s32.totalorder %s17, 1
      %p35 = por %p33, %p34
      %p36 = scmp.ne.s32.totalorder %s25, %s26
      %p37 = scmp.eq.s32.totalorder %s17, 0
      %p38 = por %p36, %p37
      %p39 = scmp.ne.s32.totalorder %s25, %s26
      %p40 = scmp.eq.s32.totalorder %s18, 1
      %p41 = por %p39, %p40
      %p43 = scmp.ne.s32.totalorder %s26, %s42
      %p44 = scmp.eq.s32.totalorder %s18, 0
      %p45 = por %p43, %p44
      %s46 = ssub.s32 %s12, %s19
      %p47 = scmp.eq.s32.totalorder %s46, 0
      %s49 = sadd.s32 %s48, 1
      %s50 = scalar_select %p47, %s48, %s49
      %p53 = pneg %p47
      %p54 = scmp.eq.s32.totalorder %s12, 1
      %p55 = por %p53, %p54
      %p56 = scmp.ne.s32.totalorder %s48, %s51
      %p57 = scmp.eq.s32.totalorder %s12, 0
      %p58 = por %p56, %p57
      %p59 = scmp.ne.s32.totalorder %s48, %s51
      %p60 = scmp.eq.s32.totalorder %s17, 1
      %p61 = por %p59, %p60
      %p62 = scmp.ne.s32.totalorder %s51, %s52
      %p63 = scmp.eq.s32.totalorder %s17, 0
      %p64 = por %p62, %p63
      %p65 = scmp.ne.s32.totalorder %s51, %s52
      %p66 = scmp.eq.s32.totalorder %s18, 1
      %p67 = por %p65, %p66
      %p69 = scmp.ne.s32.totalorder %s52, %s68
      %p70 = scmp.eq.s32.totalorder %s18, 0
      %p71 = por %p69, %p70
      %s73 = sadd.s32 %s72, 1
      %p76 = scmp.eq.s32.totalorder %s12, 1
      %p77 = scmp.ne.s32.totalorder %s72, %s74
      %p78 = scmp.eq.s32.totalorder %s12, 0
      %p79 = por %p77, %p78
      %p80 = scmp.ne.s32.totalorder %s72, %s74
      %p81 = scmp.eq.s32.totalorder %s17, 1
      %p82 = por %p80, %p81
      %p83 = scmp.ne.s32.totalorder %s74, %s75
      %p84 = scmp.eq.s32.totalorder %s17, 0
      %p85 = por %p83, %p84
      %p86 = scmp.ne.s32.totalorder %s74, %s75
      %p87 = scmp.eq.s32.totalorder %s18, 1
      %p88 = por %p86, %p87
      %p90 = scmp.ne.s32.totalorder %s75, %s89
      %p91 = scmp.eq.s32.totalorder %s18, 0
      %p92 = por %p90, %p91
      %s94 = sadd.s32 %s93, 1
      %p97 = scmp.eq.s32.totalorder %s12, 1
      %p98 = scmp.ne.s32.totalorder %s93, %s95
      %p99 = scmp.eq.s32.totalorder %s12, 0
      %p100 = por %p98, %p99
      %p101 = scmp.ne.s32.totalorder %s93, %s95
      %p102 = scmp.eq.s32.totalorder %s17, 1
      %p103 = por %p101, %p102
      %p104 = scmp.ne.s32.totalorder %s95, %s96
      %p105 = scmp.eq.s32.totalorder %s17, 0
      %p106 = por %p104, %p105
      %p107 = scmp.ne.s32.totalorder %s95, %s96
      %p108 = scmp.eq.s32.totalorder %s18, 1
      %p109 = por %p107, %p108
      %p111 = scmp.ne.s32.totalorder %s96, %s110
      %p112 = scmp.eq.s32.totalorder %s18, 0
      %p113 = por %p111, %p112
      %p114 = scmp.le.s32.totalorder 1, %s12
      %p115 = scmp.lt.s32.totalorder %s12, 3
      %p116 = pnand %p114, %p115
      %p117 = pneg %p116
      // Predicated region
      $region9: #{pair_img_classifier_deepface.4} parent=5 // pred_check
        _
      $region10: #{pair_img_classifier_deepface.4} parent=5 // pred_check_branch
        %119 = sbr.rel (%p116) target = $region12
      $region11: #{pair_img_classifier_deepface.4} parent=5 // pred_region
        %s120 = ssub.s32 %s12, 1
        // Predicated region
        $region13: #{pair_img_classifier_deepface.4} parent=11 // pred_check
          %p121 = pneg %p85
        $region14: #{pair_img_classifier_deepface.4} parent=11 // pred_check_branch
          %123 = sbr.rel (%p121) target = $region16
        $region15: #{pair_img_classifier_deepface.4} parent=11 // pred_region
          _
        $region16: #{pair_img_classifier_deepface.4} parent=11 // pred_fallthru
          _
      $region12: #{pair_img_classifier_deepface.4} parent=5 // pred_fallthru
        _
      %p124 = scmp.lt.s32.totalorder %s12, 2
      // Predicated region
      $region17: #{pair_img_classifier_deepface.4} parent=5 // pred_check
        %p125 = pneg %p124
      $region18: #{pair_img_classifier_deepface.4} parent=5 // pred_check_branch
        %127 = sbr.rel (%p125) target = $region20
      $region19: #{pair_img_classifier_deepface.4} parent=5 // pred_region
        // Predicated region
        $region21: #{pair_img_classifier_deepface.4} parent=19 // pred_check
          %p128 = pneg %p32
        $region22: #{pair_img_classifier_deepface.4} parent=19 // pred_check_branch
          %130 = sbr.rel (%p128) target = $region24
        $region23: #{pair_img_classifier_deepface.4} parent=19 // pred_region
          %s131 = smul.u32 8, %s12
          %p132 = scmp.lt.s32.totalorder %s131, 15
          %s133 = scalar_select %p132, %s131, 15
          %s134 = smul.addr %s133, 2
          %s135 = scalar_lea.vmem %s0, %s134
          %s136 = smul.u32 8, %s12
        $region24: #{pair_img_classifier_deepface.4} parent=19 // pred_fallthru
          _
        // Predicated region
        $region25: #{pair_img_classifier_deepface.4} parent=19 // pred_check
          %p137 = pneg %p58
        $region26: #{pair_img_classifier_deepface.4} parent=19 // pred_check_branch
          %139 = sbr.rel (%p137) target = $region28
        $region27: #{pair_img_classifier_deepface.4} parent=19 // pred_region
          %s140 = sand.u32 %s48, 1
          %s141 = scalar_lea.sflag [#allocation4], %s140
          %s142 = sand.u32 %s48, 1
          %s143 = smul.addr %s142, 1024
          %s144 = scalar_lea.vmem [#allocation3], %s143
          %s145 = smul.u32 128, %s12
          %147 = vsyncadd %s141, 0
          %s148 = smul.addr %s145, 2
          %s149 = smul.addr %s148, 4
          %s150 = scalar_lea.hbm %s1, %s149
          %s151 = sshll.u32 %s150, 4
          %s152 = int_to_ptr.hbm [resolvable:$true] %s151
          %s153 = sshll.u32 %s144, 4
          %s154 = int_to_ptr.vmem [resolvable:$true] %s153
          %159 = dma.hbm_to_vmem [thread:$0]  %s152, 16384, %s154, %s141, 128, 128, 8
        $region28: #{pair_img_classifier_deepface.4} parent=19 // pred_fallthru
          _
      $region20: #{pair_img_classifier_deepface.4} parent=5 // pred_fallthru
        _
      %p160 = scmp.le.s32.totalorder 1, %s12
      %p161 = scmp.lt.s32.totalorder %s12, 3
      %p162 = pnand %p160, %p161
      %p163 = pneg %p162
      // Predicated region
      $region29: #{pair_img_classifier_deepface.4} parent=5 // pred_check
        _
      $region30: #{pair_img_classifier_deepface.4} parent=5 // pred_check_branch
        %165 = sbr.rel (%p162) target = $region32
      $region31: #{pair_img_classifier_deepface.4} parent=5 // pred_region
        %s166 = ssub.s32 %s12, 1
        %s167 = sand.u32 %s51, 1
        %s168 = scalar_lea.sflag [#allocation4], %s167
        %s169 = sand.u32 %s51, 1
        %s170 = smul.addr %s169, 1024
        %s171 = scalar_lea.vmem [#allocation3], %s170
        // Predicated region
        $region33: #{pair_img_classifier_deepface.4} parent=31 // pred_check
          %p172 = pneg %p64
        $region34: #{pair_img_classifier_deepface.4} parent=31 // pred_check_branch
          %174 = sbr.rel (%p172) target = $region36
        $region35: #{pair_img_classifier_deepface.4} parent=31 // pred_region
          %176 = dma.done %s168, 16384
        $region36: #{pair_img_classifier_deepface.4} parent=31 // pred_fallthru
          _
        %s177 = smul.u32 8, %s17
        %p178 = scmp.lt.s32.totalorder %s177, 15
        %s179 = scalar_select %p178, %s177, 15
        %s180 = smul.addr %s179, 2
        %s181 = scalar_lea.vmem %s0, %s180
        %p182 = pneg %p38
        %p183 = pneg %p35
        %s184 = sand.u32 %s51, 1
        %s185 = scalar_lea.sflag [#allocation4], %s184
        %s186 = sand.u32 %s51, 1
        %s187 = smul.addr %s186, 1024
        %s188 = scalar_lea.vmem [#allocation3], %s187
        %p189 = pneg %p64
        %p190 = pneg %p61
        %p191 = pneg %p85
        %p192 = pneg %p82
        %p193 = pneg %p106
        %p194 = pneg %p103
        %s195 = smul.u32 8, %s17
        %p196 = scmp.lt.s32.totalorder %s195, 15
        %s197 = scalar_select %p196, %s195, 15
        %s198 = smul.addr %s197, 2
        %s199 = scalar_lea.vmem %s0, %s198
        %s200 = smul.u32 8, %s17
        %s201 = smul.u32 128, %s17
        %p202 = scmp.eq.s32.totalorder %s17, 0
        // Predicated region
        $region37: #{pair_img_classifier_deepface.4} parent=31 // pred_check
          %p203 = pneg %p202
        $region38: #{pair_img_classifier_deepface.4} parent=31 // pred_check_branch
          %205 = sbr.rel (%p203) target = $region40
        $region39: #{pair_img_classifier_deepface.4} parent=31 // pred_region
          %206 = vst [vmem:[#allocation2] sm:$0xf] 0.0
        $region40: #{pair_img_classifier_deepface.4} parent=31 // pred_fallthru
          _
        %v207 = vld [vmem:[#allocation2] sm:$0xf]
        %v208 = vld [vmem:[%s199] sm:$0xff]
        %v209 = vld [vmem:[%s199 + $0x8] sm:$0xff]
        %212 = vst [vmem:[#allocation1] ss:$4 sm:$0xff] %v208
        %s213 = scalar_lea.vmem [#allocation1], 32
        %214 = vst [vmem:[%s213] ss:$4 sm:$0xff] %v209
        %v215 = vld.sshfl [vmem:[#allocation1] sm:$0xff pattern:$0x73625140]
        %v216 = vld.sshfl [vmem:[#allocation1 + $0x8] sm:$0xff pattern:$0x73625140]
        %v217 = vld.sshfl [vmem:[#allocation1 + $0x10] sm:$0xff pattern:$0x73625140]
        %v218 = vld.sshfl [vmem:[#allocation1 + $0x18] sm:$0xff pattern:$0x73625140]
        %v219 = vld.sshfl [vmem:[#allocation1 + $0x20] sm:$0xff pattern:$0x73625140]
        %v220 = vld.sshfl [vmem:[#allocation1 + $0x28] sm:$0xff pattern:$0x73625140]
        %v221 = vld.sshfl [vmem:[#allocation1 + $0x30] sm:$0xff pattern:$0x73625140]
        %v222 = vld.sshfl [vmem:[#allocation1 + $0x38] sm:$0xff pattern:$0x73625140]
        %v231 = vpack.c.bf16 %v215, %v215
        %v232 = vpack.c.bf16 %v216, %v216
        %v233 = vpack.c.bf16 %v217, %v217
        %v234 = vpack.c.bf16 %v218, %v218
        %v235 = vpack.c.bf16 %v219, %v219
        %v236 = vpack.c.bf16 %v220, %v220
        %v237 = vpack.c.bf16 %v221, %v221
        %v238 = vpack.c.bf16 %v222, %v222
        %v239 = vld [vmem:[%s171] sm:$0xff]
        %v240 = vld [vmem:[%s171 + $0x8] sm:$0xff]
        %v241 = vld [vmem:[%s171 + $0x10] sm:$0xff]
        %v242 = vld [vmem:[%s171 + $0x18] sm:$0xff]
        %v243 = vld [vmem:[%s171 + $0x20] sm:$0xff]
        %v244 = vld [vmem:[%s171 + $0x28] sm:$0xff]
        %v245 = vld [vmem:[%s171 + $0x30] sm:$0xff]
        %v246 = vld [vmem:[%s171 + $0x38] sm:$0xff]
        %v247 = vld [vmem:[%s171 + $0x40] sm:$0xff]
        %v248 = vld [vmem:[%s171 + $0x48] sm:$0xff]
        %v249 = vld [vmem:[%s171 + $0x50] sm:$0xff]
        %v250 = vld [vmem:[%s171 + $0x58] sm:$0xff]
        %v251 = vld [vmem:[%s171 + $0x60] sm:$0xff]
        %v252 = vld [vmem:[%s171 + $0x68] sm:$0xff]
        %v253 = vld [vmem:[%s171 + $0x70] sm:$0xff]
        %v254 = vld [vmem:[%s171 + $0x78] sm:$0xff]
        %v255 = vld [vmem:[%s171 + $0x80] sm:$0xff]
        %v256 = vld [vmem:[%s171 + $0x88] sm:$0xff]
        %v257 = vld [vmem:[%s171 + $0x90] sm:$0xff]
        %v258 = vld [vmem:[%s171 + $0x98] sm:$0xff]
        %v259 = vld [vmem:[%s171 + $0xa0] sm:$0xff]
        %v260 = vld [vmem:[%s171 + $0xa8] sm:$0xff]
        %v261 = vld [vmem:[%s171 + $0xb0] sm:$0xff]
        %v262 = vld [vmem:[%s171 + $0xb8] sm:$0xff]
        %v263 = vld [vmem:[%s171 + $0xc0] sm:$0xff]
        %v264 = vld [vmem:[%s171 + $0xc8] sm:$0xff]
        %v265 = vld [vmem:[%s171 + $0xd0] sm:$0xff]
        %v266 = vld [vmem:[%s171 + $0xd8] sm:$0xff]
        %v267 = vld [vmem:[%s171 + $0xe0] sm:$0xff]
        %v268 = vld [vmem:[%s171 + $0xe8] sm:$0xff]
        %v269 = vld [vmem:[%s171 + $0xf0] sm:$0xff]
        %v270 = vld [vmem:[%s171 + $0xf8] sm:$0xff]
        %v271 = vld [vmem:[%s171 + $0x100] sm:$0xff]
        %v272 = vld [vmem:[%s171 + $0x108] sm:$0xff]
        %v273 = vld [vmem:[%s171 + $0x110] sm:$0xff]
        %v274 = vld [vmem:[%s171 + $0x118] sm:$0xff]
        %v275 = vld [vmem:[%s171 + $0x120] sm:$0xff]
        %v276 = vld [vmem:[%s171 + $0x128] sm:$0xff]
        %v277 = vld [vmem:[%s171 + $0x130] sm:$0xff]
        %v278 = vld [vmem:[%s171 + $0x138] sm:$0xff]
        %v279 = vld [vmem:[%s171 + $0x140] sm:$0xff]
        %v280 = vld [vmem:[%s171 + $0x148] sm:$0xff]
        %v281 = vld [vmem:[%s171 + $0x150] sm:$0xff]
        %v282 = vld [vmem:[%s171 + $0x158] sm:$0xff]
        %v283 = vld [vmem:[%s171 + $0x160] sm:$0xff]
        %v284 = vld [vmem:[%s171 + $0x168] sm:$0xff]
        %v285 = vld [vmem:[%s171 + $0x170] sm:$0xff]
        %v286 = vld [vmem:[%s171 + $0x178] sm:$0xff]
        %v287 = vld [vmem:[%s171 + $0x180] sm:$0xff]
        %v288 = vld [vmem:[%s171 + $0x188] sm:$0xff]
        %v289 = vld [vmem:[%s171 + $0x190] sm:$0xff]
        %v290 = vld [vmem:[%s171 + $0x198] sm:$0xff]
        %v291 = vld [vmem:[%s171 + $0x1a0] sm:$0xff]
        %v292 = vld [vmem:[%s171 + $0x1a8] sm:$0xff]
        %v293 = vld [vmem:[%s171 + $0x1b0] sm:$0xff]
        %v294 = vld [vmem:[%s171 + $0x1b8] sm:$0xff]
        %v295 = vld [vmem:[%s171 + $0x1c0] sm:$0xff]
        %v296 = vld [vmem:[%s171 + $0x1c8] sm:$0xff]
        %v297 = vld [vmem:[%s171 + $0x1d0] sm:$0xff]
        %v298 = vld [vmem:[%s171 + $0x1d8] sm:$0xff]
        %v299 = vld [vmem:[%s171 + $0x1e0] sm:$0xff]
        %v300 = vld [vmem:[%s171 + $0x1e8] sm:$0xff]
        %v301 = vld [vmem:[%s171 + $0x1f0] sm:$0xff]
        %v302 = vld [vmem:[%s171 + $0x1f8] sm:$0xff]
        %v303 = vld [vmem:[%s171 + $0x200] sm:$0xff]
        %v304 = vld [vmem:[%s171 + $0x208] sm:$0xff]
        %v305 = vld [vmem:[%s171 + $0x210] sm:$0xff]
        %v306 = vld [vmem:[%s171 + $0x218] sm:$0xff]
        %v307 = vld [vmem:[%s171 + $0x220] sm:$0xff]
        %v308 = vld [vmem:[%s171 + $0x228] sm:$0xff]
        %v309 = vld [vmem:[%s171 + $0x230] sm:$0xff]
        %v310 = vld [vmem:[%s171 + $0x238] sm:$0xff]
        %v311 = vld [vmem:[%s171 + $0x240] sm:$0xff]
        %v312 = vld [vmem:[%s171 + $0x248] sm:$0xff]
        %v313 = vld [vmem:[%s171 + $0x250] sm:$0xff]
        %v314 = vld [vmem:[%s171 + $0x258] sm:$0xff]
        %v315 = vld [vmem:[%s171 + $0x260] sm:$0xff]
        %v316 = vld [vmem:[%s171 + $0x268] sm:$0xff]
        %v317 = vld [vmem:[%s171 + $0x270] sm:$0xff]
        %v318 = vld [vmem:[%s171 + $0x278] sm:$0xff]
        %v319 = vld [vmem:[%s171 + $0x280] sm:$0xff]
        %v320 = vld [vmem:[%s171 + $0x288] sm:$0xff]
        %v321 = vld [vmem:[%s171 + $0x290] sm:$0xff]
        %v322 = vld [vmem:[%s171 + $0x298] sm:$0xff]
        %v323 = vld [vmem:[%s171 + $0x2a0] sm:$0xff]
        %v324 = vld [vmem:[%s171 + $0x2a8] sm:$0xff]
        %v325 = vld [vmem:[%s171 + $0x2b0] sm:$0xff]
        %v326 = vld [vmem:[%s171 + $0x2b8] sm:$0xff]
        %v327 = vld [vmem:[%s171 + $0x2c0] sm:$0xff]
        %v328 = vld [vmem:[%s171 + $0x2c8] sm:$0xff]
        %v329 = vld [vmem:[%s171 + $0x2d0] sm:$0xff]
        %v330 = vld [vmem:[%s171 + $0x2d8] sm:$0xff]
        %v331 = vld [vmem:[%s171 + $0x2e0] sm:$0xff]
        %v332 = vld [vmem:[%s171 + $0x2e8] sm:$0xff]
        %v333 = vld [vmem:[%s171 + $0x2f0] sm:$0xff]
        %v334 = vld [vmem:[%s171 + $0x2f8] sm:$0xff]
        %v335 = vld [vmem:[%s171 + $0x300] sm:$0xff]
        %v336 = vld [vmem:[%s171 + $0x308] sm:$0xff]
        %v337 = vld [vmem:[%s171 + $0x310] sm:$0xff]
        %v338 = vld [vmem:[%s171 + $0x318] sm:$0xff]
        %v339 = vld [vmem:[%s171 + $0x320] sm:$0xff]
        %v340 = vld [vmem:[%s171 + $0x328] sm:$0xff]
        %v341 = vld [vmem:[%s171 + $0x330] sm:$0xff]
        %v342 = vld [vmem:[%s171 + $0x338] sm:$0xff]
        %v343 = vld [vmem:[%s171 + $0x340] sm:$0xff]
        %v344 = vld [vmem:[%s171 + $0x348] sm:$0xff]
        %v345 = vld [vmem:[%s171 + $0x350] sm:$0xff]
        %v346 = vld [vmem:[%s171 + $0x358] sm:$0xff]
        %v347 = vld [vmem:[%s171 + $0x360] sm:$0xff]
        %v348 = vld [vmem:[%s171 + $0x368] sm:$0xff]
        %v349 = vld [vmem:[%s171 + $0x370] sm:$0xff]
        %v350 = vld [vmem:[%s171 + $0x378] sm:$0xff]
        %v351 = vld [vmem:[%s171 + $0x380] sm:$0xff]
        %v352 = vld [vmem:[%s171 + $0x388] sm:$0xff]
        %v353 = vld [vmem:[%s171 + $0x390] sm:$0xff]
        %v354 = vld [vmem:[%s171 + $0x398] sm:$0xff]
        %v355 = vld [vmem:[%s171 + $0x3a0] sm:$0xff]
        %v356 = vld [vmem:[%s171 + $0x3a8] sm:$0xff]
        %v357 = vld [vmem:[%s171 + $0x3b0] sm:$0xff]
        %v358 = vld [vmem:[%s171 + $0x3b8] sm:$0xff]
        %v359 = vld [vmem:[%s171 + $0x3c0] sm:$0xff]
        %v360 = vld [vmem:[%s171 + $0x3c8] sm:$0xff]
        %v361 = vld [vmem:[%s171 + $0x3d0] sm:$0xff]
        %v362 = vld [vmem:[%s171 + $0x3d8] sm:$0xff]
        %v363 = vld [vmem:[%s171 + $0x3e0] sm:$0xff]
        %v364 = vld [vmem:[%s171 + $0x3e8] sm:$0xff]
        %v365 = vld [vmem:[%s171 + $0x3f0] sm:$0xff]
        %v366 = vld [vmem:[%s171 + $0x3f8] sm:$0xff]
        %v495 = vunpack.c.l.b16 %v239
        %v496 = vunpack.c.h.b16 %v239
        %v497 = vunpack.c.l.b16 %v240
        %v498 = vunpack.c.h.b16 %v240
        %v499 = vunpack.c.l.b16 %v241
        %v500 = vunpack.c.h.b16 %v241
        %v501 = vunpack.c.l.b16 %v242
        %v502 = vunpack.c.h.b16 %v242
        %v503 = vunpack.c.l.b16 %v243
        %v504 = vunpack.c.h.b16 %v243
        %v505 = vunpack.c.l.b16 %v244
        %v506 = vunpack.c.h.b16 %v244
        %v507 = vunpack.c.l.b16 %v245
        %v508 = vunpack.c.h.b16 %v245
        %v509 = vunpack.c.l.b16 %v246
        %v510 = vunpack.c.h.b16 %v246
        %v511 = vunpack.c.l.b16 %v247
        %v512 = vunpack.c.h.b16 %v247
        %v513 = vunpack.c.l.b16 %v248
        %v514 = vunpack.c.h.b16 %v248
        %v515 = vunpack.c.l.b16 %v249
        %v516 = vunpack.c.h.b16 %v249
        %v517 = vunpack.c.l.b16 %v250
        %v518 = vunpack.c.h.b16 %v250
        %v519 = vunpack.c.l.b16 %v251
        %v520 = vunpack.c.h.b16 %v251
        %v521 = vunpack.c.l.b16 %v252
        %v522 = vunpack.c.h.b16 %v252
        %v523 = vunpack.c.l.b16 %v253
        %v524 = vunpack.c.h.b16 %v253
        %v525 = vunpack.c.l.b16 %v254
        %v526 = vunpack.c.h.b16 %v254
        %v527 = vunpack.c.l.b16 %v255
        %v528 = vunpack.c.h.b16 %v255
        %v529 = vunpack.c.l.b16 %v256
        %v530 = vunpack.c.h.b16 %v256
        %v531 = vunpack.c.l.b16 %v257
        %v532 = vunpack.c.h.b16 %v257
        %v533 = vunpack.c.l.b16 %v258
        %v534 = vunpack.c.h.b16 %v258
        %v535 = vunpack.c.l.b16 %v259
        %v536 = vunpack.c.h.b16 %v259
        %v537 = vunpack.c.l.b16 %v260
        %v538 = vunpack.c.h.b16 %v260
        %v539 = vunpack.c.l.b16 %v261
        %v540 = vunpack.c.h.b16 %v261
        %v541 = vunpack.c.l.b16 %v262
        %v542 = vunpack.c.h.b16 %v262
        %v543 = vunpack.c.l.b16 %v263
        %v544 = vunpack.c.h.b16 %v263
        %v545 = vunpack.c.l.b16 %v264
        %v546 = vunpack.c.h.b16 %v264
        %v547 = vunpack.c.l.b16 %v265
        %v548 = vunpack.c.h.b16 %v265
        %v549 = vunpack.c.l.b16 %v266
        %v550 = vunpack.c.h.b16 %v266
        %v551 = vunpack.c.l.b16 %v267
        %v552 = vunpack.c.h.b16 %v267
        %v553 = vunpack.c.l.b16 %v268
        %v554 = vunpack.c.h.b16 %v268
        %v555 = vunpack.c.l.b16 %v269
        %v556 = vunpack.c.h.b16 %v269
        %v557 = vunpack.c.l.b16 %v270
        %v558 = vunpack.c.h.b16 %v270
        %v559 = vunpack.c.l.b16 %v271
        %v560 = vunpack.c.h.b16 %v271
        %v561 = vunpack.c.l.b16 %v272
        %v562 = vunpack.c.h.b16 %v272
        %v563 = vunpack.c.l.b16 %v273
        %v564 = vunpack.c.h.b16 %v273
        %v565 = vunpack.c.l.b16 %v274
        %v566 = vunpack.c.h.b16 %v274
        %v567 = vunpack.c.l.b16 %v275
        %v568 = vunpack.c.h.b16 %v275
        %v569 = vunpack.c.l.b16 %v276
        %v570 = vunpack.c.h.b16 %v276
        %v571 = vunpack.c.l.b16 %v277
        %v572 = vunpack.c.h.b16 %v277
        %v573 = vunpack.c.l.b16 %v278
        %v574 = vunpack.c.h.b16 %v278
        %v575 = vunpack.c.l.b16 %v279
        %v576 = vunpack.c.h.b16 %v279
        %v577 = vunpack.c.l.b16 %v280
        %v578 = vunpack.c.h.b16 %v280
        %v579 = vunpack.c.l.b16 %v281
        %v580 = vunpack.c.h.b16 %v281
        %v581 = vunpack.c.l.b16 %v282
        %v582 = vunpack.c.h.b16 %v282
        %v583 = vunpack.c.l.b16 %v283
        %v584 = vunpack.c.h.b16 %v283
        %v585 = vunpack.c.l.b16 %v284
        %v586 = vunpack.c.h.b16 %v284
        %v587 = vunpack.c.l.b16 %v285
        %v588 = vunpack.c.h.b16 %v285
        %v589 = vunpack.c.l.b16 %v286
        %v590 = vunpack.c.h.b16 %v286
        %v591 = vunpack.c.l.b16 %v287
        %v592 = vunpack.c.h.b16 %v287
        %v593 = vunpack.c.l.b16 %v288
        %v594 = vunpack.c.h.b16 %v288
        %v595 = vunpack.c.l.b16 %v289
        %v596 = vunpack.c.h.b16 %v289
        %v597 = vunpack.c.l.b16 %v290
        %v598 = vunpack.c.h.b16 %v290
        %v599 = vunpack.c.l.b16 %v291
        %v600 = vunpack.c.h.b16 %v291
        %v601 = vunpack.c.l.b16 %v292
        %v602 = vunpack.c.h.b16 %v292
        %v603 = vunpack.c.l.b16 %v293
        %v604 = vunpack.c.h.b16 %v293
        %v605 = vunpack.c.l.b16 %v294
        %v606 = vunpack.c.h.b16 %v294
        %v607 = vunpack.c.l.b16 %v295
        %v608 = vunpack.c.h.b16 %v295
        %v609 = vunpack.c.l.b16 %v296
        %v610 = vunpack.c.h.b16 %v296
        %v611 = vunpack.c.l.b16 %v297
        %v612 = vunpack.c.h.b16 %v297
        %v613 = vunpack.c.l.b16 %v298
        %v614 = vunpack.c.h.b16 %v298
        %v615 = vunpack.c.l.b16 %v299
        %v616 = vunpack.c.h.b16 %v299
        %v617 = vunpack.c.l.b16 %v300
        %v618 = vunpack.c.h.b16 %v300
        %v619 = vunpack.c.l.b16 %v301
        %v620 = vunpack.c.h.b16 %v301
        %v621 = vunpack.c.l.b16 %v302
        %v622 = vunpack.c.h.b16 %v302
        %v623 = vunpack.c.l.b16 %v303
        %v624 = vunpack.c.h.b16 %v303
        %v625 = vunpack.c.l.b16 %v304
        %v626 = vunpack.c.h.b16 %v304
        %v627 = vunpack.c.l.b16 %v305
        %v628 = vunpack.c.h.b16 %v305
        %v629 = vunpack.c.l.b16 %v306
        %v630 = vunpack.c.h.b16 %v306
        %v631 = vunpack.c.l.b16 %v307
        %v632 = vunpack.c.h.b16 %v307
        %v633 = vunpack.c.l.b16 %v308
        %v634 = vunpack.c.h.b16 %v308
        %v635 = vunpack.c.l.b16 %v309
        %v636 = vunpack.c.h.b16 %v309
        %v637 = vunpack.c.l.b16 %v310
        %v638 = vunpack.c.h.b16 %v310
        %v639 = vunpack.c.l.b16 %v311
        %v640 = vunpack.c.h.b16 %v311
        %v641 = vunpack.c.l.b16 %v312
        %v642 = vunpack.c.h.b16 %v312
        %v643 = vunpack.c.l.b16 %v313
        %v644 = vunpack.c.h.b16 %v313
        %v645 = vunpack.c.l.b16 %v314
        %v646 = vunpack.c.h.b16 %v314
        %v647 = vunpack.c.l.b16 %v315
        %v648 = vunpack.c.h.b16 %v315
        %v649 = vunpack.c.l.b16 %v316
        %v650 = vunpack.c.h.b16 %v316
        %v651 = vunpack.c.l.b16 %v317
        %v652 = vunpack.c.h.b16 %v317
        %v653 = vunpack.c.l.b16 %v318
        %v654 = vunpack.c.h.b16 %v318
        %v655 = vunpack.c.l.b16 %v319
        %v656 = vunpack.c.h.b16 %v319
        %v657 = vunpack.c.l.b16 %v320
        %v658 = vunpack.c.h.b16 %v320
        %v659 = vunpack.c.l.b16 %v321
        %v660 = vunpack.c.h.b16 %v321
        %v661 = vunpack.c.l.b16 %v322
        %v662 = vunpack.c.h.b16 %v322
        %v663 = vunpack.c.l.b16 %v323
        %v664 = vunpack.c.h.b16 %v323
        %v665 = vunpack.c.l.b16 %v324
        %v666 = vunpack.c.h.b16 %v324
        %v667 = vunpack.c.l.b16 %v325
        %v668 = vunpack.c.h.b16 %v325
        %v669 = vunpack.c.l.b16 %v326
        %v670 = vunpack.c.h.b16 %v326
        %v671 = vunpack.c.l.b16 %v327
        %v672 = vunpack.c.h.b16 %v327
        %v673 = vunpack.c.l.b16 %v328
        %v674 = vunpack.c.h.b16 %v328
        %v675 = vunpack.c.l.b16 %v329
        %v676 = vunpack.c.h.b16 %v329
        %v677 = vunpack.c.l.b16 %v330
        %v678 = vunpack.c.h.b16 %v330
        %v679 = vunpack.c.l.b16 %v331
        %v680 = vunpack.c.h.b16 %v331
        %v681 = vunpack.c.l.b16 %v332
        %v682 = vunpack.c.h.b16 %v332
        %v683 = vunpack.c.l.b16 %v333
        %v684 = vunpack.c.h.b16 %v333
        %v685 = vunpack.c.l.b16 %v334
        %v686 = vunpack.c.h.b16 %v334
        %v687 = vunpack.c.l.b16 %v335
        %v688 = vunpack.c.h.b16 %v335
        %v689 = vunpack.c.l.b16 %v336
        %v690 = vunpack.c.h.b16 %v336
        %v691 = vunpack.c.l.b16 %v337
        %v692 = vunpack.c.h.b16 %v337
        %v693 = vunpack.c.l.b16 %v338
        %v694 = vunpack.c.h.b16 %v338
        %v695 = vunpack.c.l.b16 %v339
        %v696 = vunpack.c.h.b16 %v339
        %v697 = vunpack.c.l.b16 %v340
        %v698 = vunpack.c.h.b16 %v340
        %v699 = vunpack.c.l.b16 %v341
        %v700 = vunpack.c.h.b16 %v341
        %v701 = vunpack.c.l.b16 %v342
        %v702 = vunpack.c.h.b16 %v342
        %v703 = vunpack.c.l.b16 %v343
        %v704 = vunpack.c.h.b16 %v343
        %v705 = vunpack.c.l.b16 %v344
        %v706 = vunpack.c.h.b16 %v344
        %v707 = vunpack.c.l.b16 %v345
        %v708 = vunpack.c.h.b16 %v345
        %v709 = vunpack.c.l.b16 %v346
        %v710 = vunpack.c.h.b16 %v346
        %v711 = vunpack.c.l.b16 %v347
        %v712 = vunpack.c.h.b16 %v347
        %v713 = vunpack.c.l.b16 %v348
        %v714 = vunpack.c.h.b16 %v348
        %v715 = vunpack.c.l.b16 %v349
        %v716 = vunpack.c.h.b16 %v349
        %v717 = vunpack.c.l.b16 %v350
        %v718 = vunpack.c.h.b16 %v350
        %v719 = vunpack.c.l.b16 %v351
        %v720 = vunpack.c.h.b16 %v351
        %v721 = vunpack.c.l.b16 %v352
        %v722 = vunpack.c.h.b16 %v352
        %v723 = vunpack.c.l.b16 %v353
        %v724 = vunpack.c.h.b16 %v353
        %v725 = vunpack.c.l.b16 %v354
        %v726 = vunpack.c.h.b16 %v354
        %v727 = vunpack.c.l.b16 %v355
        %v728 = vunpack.c.h.b16 %v355
        %v729 = vunpack.c.l.b16 %v356
        %v730 = vunpack.c.h.b16 %v356
        %v731 = vunpack.c.l.b16 %v357
        %v732 = vunpack.c.h.b16 %v357
        %v733 = vunpack.c.l.b16 %v358
        %v734 = vunpack.c.h.b16 %v358
        %v735 = vunpack.c.l.b16 %v359
        %v736 = vunpack.c.h.b16 %v359
        %v737 = vunpack.c.l.b16 %v360
        %v738 = vunpack.c.h.b16 %v360
        %v739 = vunpack.c.l.b16 %v361
        %v740 = vunpack.c.h.b16 %v361
        %v741 = vunpack.c.l.b16 %v362
        %v742 = vunpack.c.h.b16 %v362
        %v743 = vunpack.c.l.b16 %v363
        %v744 = vunpack.c.h.b16 %v363
        %v745 = vunpack.c.l.b16 %v364
        %v746 = vunpack.c.h.b16 %v364
        %v747 = vunpack.c.l.b16 %v365
        %v748 = vunpack.c.h.b16 %v365
        %v749 = vunpack.c.l.b16 %v366
        %v750 = vunpack.c.h.b16 %v366
        %v751 = vpack.c.b16 %v497, %v495
        %v752 = vpack.c.b16 %v498, %v496
        %v753 = vpack.c.b16 %v501, %v499
        %v754 = vpack.c.b16 %v502, %v500
        %v755 = vpack.c.b16 %v505, %v503
        %v756 = vpack.c.b16 %v506, %v504
        %v757 = vpack.c.b16 %v509, %v507
        %v758 = vpack.c.b16 %v510, %v508
        %v759 = vpack.c.b16 %v513, %v511
        %v760 = vpack.c.b16 %v514, %v512
        %v761 = vpack.c.b16 %v517, %v515
        %v762 = vpack.c.b16 %v518, %v516
        %v763 = vpack.c.b16 %v521, %v519
        %v764 = vpack.c.b16 %v522, %v520
        %v765 = vpack.c.b16 %v525, %v523
        %v766 = vpack.c.b16 %v526, %v524
        %v767 = vpack.c.b16 %v529, %v527
        %v768 = vpack.c.b16 %v530, %v528
        %v769 = vpack.c.b16 %v533, %v531
        %v770 = vpack.c.b16 %v534, %v532
        %v771 = vpack.c.b16 %v537, %v535
        %v772 = vpack.c.b16 %v538, %v536
        %v773 = vpack.c.b16 %v541, %v539
        %v774 = vpack.c.b16 %v542, %v540
        %v775 = vpack.c.b16 %v545, %v543
        %v776 = vpack.c.b16 %v546, %v544
        %v777 = vpack.c.b16 %v549, %v547
        %v778 = vpack.c.b16 %v550, %v548
        %v779 = vpack.c.b16 %v553, %v551
        %v780 = vpack.c.b16 %v554, %v552
        %v781 = vpack.c.b16 %v557, %v555
        %v782 = vpack.c.b16 %v558, %v556
        %v783 = vpack.c.b16 %v561, %v559
        %v784 = vpack.c.b16 %v562, %v560
        %v785 = vpack.c.b16 %v565, %v563
        %v786 = vpack.c.b16 %v566, %v564
        %v787 = vpack.c.b16 %v569, %v567
        %v788 = vpack.c.b16 %v570, %v568
        %v789 = vpack.c.b16 %v573, %v571
        %v790 = vpack.c.b16 %v574, %v572
        %v791 = vpack.c.b16 %v577, %v575
        %v792 = vpack.c.b16 %v578, %v576
        %v793 = vpack.c.b16 %v581, %v579
        %v794 = vpack.c.b16 %v582, %v580
        %v795 = vpack.c.b16 %v585, %v583
        %v796 = vpack.c.b16 %v586, %v584
        %v797 = vpack.c.b16 %v589, %v587
        %v798 = vpack.c.b16 %v590, %v588
        %v799 = vpack.c.b16 %v593, %v591
        %v800 = vpack.c.b16 %v594, %v592
        %v801 = vpack.c.b16 %v597, %v595
        %v802 = vpack.c.b16 %v598, %v596
        %v803 = vpack.c.b16 %v601, %v599
        %v804 = vpack.c.b16 %v602, %v600
        %v805 = vpack.c.b16 %v605, %v603
        %v806 = vpack.c.b16 %v606, %v604
        %v807 = vpack.c.b16 %v609, %v607
        %v808 = vpack.c.b16 %v610, %v608
        %v809 = vpack.c.b16 %v613, %v611
        %v810 = vpack.c.b16 %v614, %v612
        %v811 = vpack.c.b16 %v617, %v615
        %v812 = vpack.c.b16 %v618, %v616
        %v813 = vpack.c.b16 %v621, %v619
        %v814 = vpack.c.b16 %v622, %v620
        %v815 = vpack.c.b16 %v625, %v623
        %v816 = vpack.c.b16 %v626, %v624
        %v817 = vpack.c.b16 %v629, %v627
        %v818 = vpack.c.b16 %v630, %v628
        %v819 = vpack.c.b16 %v633, %v631
        %v820 = vpack.c.b16 %v634, %v632
        %v821 = vpack.c.b16 %v637, %v635
        %v822 = vpack.c.b16 %v638, %v636
        %v823 = vpack.c.b16 %v641, %v639
        %v824 = vpack.c.b16 %v642, %v640
        %v825 = vpack.c.b16 %v645, %v643
        %v826 = vpack.c.b16 %v646, %v644
        %v827 = vpack.c.b16 %v649, %v647
        %v828 = vpack.c.b16 %v650, %v648
        %v829 = vpack.c.b16 %v653, %v651
        %v830 = vpack.c.b16 %v654, %v652
        %v831 = vpack.c.b16 %v657, %v655
        %v832 = vpack.c.b16 %v658, %v656
        %v833 = vpack.c.b16 %v661, %v659
        %v834 = vpack.c.b16 %v662, %v660
        %v835 = vpack.c.b16 %v665, %v663
        %v836 = vpack.c.b16 %v666, %v664
        %v837 = vpack.c.b16 %v669, %v667
        %v838 = vpack.c.b16 %v670, %v668
        %v839 = vpack.c.b16 %v673, %v671
        %v840 = vpack.c.b16 %v674, %v672
        %v841 = vpack.c.b16 %v677, %v675
        %v842 = vpack.c.b16 %v678, %v676
        %v843 = vpack.c.b16 %v681, %v679
        %v844 = vpack.c.b16 %v682, %v680
        %v845 = vpack.c.b16 %v685, %v683
        %v846 = vpack.c.b16 %v686, %v684
        %v847 = vpack.c.b16 %v689, %v687
        %v848 = vpack.c.b16 %v690, %v688
        %v849 = vpack.c.b16 %v693, %v691
        %v850 = vpack.c.b16 %v694, %v692
        %v851 = vpack.c.b16 %v697, %v695
        %v852 = vpack.c.b16 %v698, %v696
        %v853 = vpack.c.b16 %v701, %v699
        %v854 = vpack.c.b16 %v702, %v700
        %v855 = vpack.c.b16 %v705, %v703
        %v856 = vpack.c.b16 %v706, %v704
        %v857 = vpack.c.b16 %v709, %v707
        %v858 = vpack.c.b16 %v710, %v708
        %v859 = vpack.c.b16 %v713, %v711
        %v860 = vpack.c.b16 %v714, %v712
        %v861 = vpack.c.b16 %v717, %v715
        %v862 = vpack.c.b16 %v718, %v716
        %v863 = vpack.c.b16 %v721, %v719
        %v864 = vpack.c.b16 %v722, %v720
        %v865 = vpack.c.b16 %v725, %v723
        %v866 = vpack.c.b16 %v726, %v724
        %v867 = vpack.c.b16 %v729, %v727
        %v868 = vpack.c.b16 %v730, %v728
        %v869 = vpack.c.b16 %v733, %v731
        %v870 = vpack.c.b16 %v734, %v732
        %v871 = vpack.c.b16 %v737, %v735
        %v872 = vpack.c.b16 %v738, %v736
        %v873 = vpack.c.b16 %v741, %v739
        %v874 = vpack.c.b16 %v742, %v740
        %v875 = vpack.c.b16 %v745, %v743
        %v876 = vpack.c.b16 %v746, %v744
        %v877 = vpack.c.b16 %v749, %v747
        %v878 = vpack.c.b16 %v750, %v748
        %1007 = vmatpush.bf16.msra.mxu0 %v765
        %1008 = vmatpush.bf16.msra.mxu0 %v763
        %1009 = vmatpush.bf16.msra.mxu0 %v761
        %1010 = vmatpush.bf16.msra.mxu0 %v759
        %1011 = vmatpush.bf16.msra.mxu0 %v757
        %1012 = vmatpush.bf16.msra.mxu0 %v755
        %1013 = vmatpush.bf16.msra.mxu0 %v753
        %1014 = vmatpush.bf16.msra.mxu0 %v751
        %1015 = vmatmul.bf16.gmra.mxu0 %v231
        %v1016 = vpop.f32.mrf.mxu0
        %v1017 = vadd.f32 0.0, %v1016
        %v1018 = vpop.f32.mrf.mxu0
        %1019 = vdwg.mxu0
        %1020 = vmatpush.bf16.msra.mxu0 %v781
        %1021 = vmatpush.bf16.msra.mxu0 %v779
        %1022 = vmatpush.bf16.msra.mxu0 %v777
        %1023 = vmatpush.bf16.msra.mxu0 %v775
        %1024 = vmatpush.bf16.msra.mxu0 %v773
        %1025 = vmatpush.bf16.msra.mxu0 %v771
        %1026 = vmatpush.bf16.msra.mxu0 %v769
        %1027 = vmatpush.bf16.msra.mxu0 %v767
        %1028 = vmatmul.bf16.gmra.mxu0 %v232
        %v1029 = vpop.f32.mrf.mxu0
        %v1030 = vadd.f32 %v1017, %v1029
        %v1031 = vpop.f32.mrf.mxu0
        %1032 = vdwg.mxu0
        %1033 = vmatpush.bf16.msra.mxu0 %v797
        %1034 = vmatpush.bf16.msra.mxu0 %v795
        %1035 = vmatpush.bf16.msra.mxu0 %v793
        %1036 = vmatpush.bf16.msra.mxu0 %v791
        %1037 = vmatpush.bf16.msra.mxu0 %v789
        %1038 = vmatpush.bf16.msra.mxu0 %v787
        %1039 = vmatpush.bf16.msra.mxu0 %v785
        %1040 = vmatpush.bf16.msra.mxu0 %v783
        %1041 = vmatmul.bf16.gmra.mxu0 %v233
        %v1042 = vpop.f32.mrf.mxu0
        %v1043 = vadd.f32 %v1030, %v1042
        %v1044 = vpop.f32.mrf.mxu0
        %1045 = vdwg.mxu0
        %1046 = vmatpush.bf16.msra.mxu0 %v813
        %1047 = vmatpush.bf16.msra.mxu0 %v811
        %1048 = vmatpush.bf16.msra.mxu0 %v809
        %1049 = vmatpush.bf16.msra.mxu0 %v807
        %1050 = vmatpush.bf16.msra.mxu0 %v805
        %1051 = vmatpush.bf16.msra.mxu0 %v803
        %1052 = vmatpush.bf16.msra.mxu0 %v801
        %1053 = vmatpush.bf16.msra.mxu0 %v799
        %1054 = vmatmul.bf16.gmra.mxu0 %v234
        %v1055 = vpop.f32.mrf.mxu0
        %v1056 = vadd.f32 %v1043, %v1055
        %v1057 = vpop.f32.mrf.mxu0
        %1058 = vdwg.mxu0
        %1059 = vmatpush.bf16.msra.mxu0 %v829
        %1060 = vmatpush.bf16.msra.mxu0 %v827
        %1061 = vmatpush.bf16.msra.mxu0 %v825
        %1062 = vmatpush.bf16.msra.mxu0 %v823
        %1063 = vmatpush.bf16.msra.mxu0 %v821
        %1064 = vmatpush.bf16.msra.mxu0 %v819
        %1065 = vmatpush.bf16.msra.mxu0 %v817
        %1066 = vmatpush.bf16.msra.mxu0 %v815
        %1067 = vmatmul.bf16.gmra.mxu0 %v235
        %v1068 = vpop.f32.mrf.mxu0
        %v1069 = vadd.f32 %v1056, %v1068
        %v1070 = vpop.f32.mrf.mxu0
        %1071 = vdwg.mxu0
        %1072 = vmatpush.bf16.msra.mxu0 %v845
        %1073 = vmatpush.bf16.msra.mxu0 %v843
        %1074 = vmatpush.bf16.msra.mxu0 %v841
        %1075 = vmatpush.bf16.msra.mxu0 %v839
        %1076 = vmatpush.bf16.msra.mxu0 %v837
        %1077 = vmatpush.bf16.msra.mxu0 %v835
        %1078 = vmatpush.bf16.msra.mxu0 %v833
        %1079 = vmatpush.bf16.msra.mxu0 %v831
        %1080 = vmatmul.bf16.gmra.mxu0 %v236
        %v1081 = vpop.f32.mrf.mxu0
        %v1082 = vadd.f32 %v1069, %v1081
        %v1083 = vpop.f32.mrf.mxu0
        %1084 = vdwg.mxu0
        %1085 = vmatpush.bf16.msra.mxu0 %v861
        %1086 = vmatpush.bf16.msra.mxu0 %v859
        %1087 = vmatpush.bf16.msra.mxu0 %v857
        %1088 = vmatpush.bf16.msra.mxu0 %v855
        %1089 = vmatpush.bf16.msra.mxu0 %v853
        %1090 = vmatpush.bf16.msra.mxu0 %v851
        %1091 = vmatpush.bf16.msra.mxu0 %v849
        %1092 = vmatpush.bf16.msra.mxu0 %v847
        %1093 = vmatmul.bf16.gmra.mxu0 %v237
        %v1094 = vpop.f32.mrf.mxu0
        %v1095 = vadd.f32 %v1082, %v1094
        %v1096 = vpop.f32.mrf.mxu0
        %1097 = vdwg.mxu0
        %1098 = vmatpush.bf16.msra.mxu0 %v877
        %1099 = vmatpush.bf16.msra.mxu0 %v875
        %1100 = vmatpush.bf16.msra.mxu0 %v873
        %1101 = vmatpush.bf16.msra.mxu0 %v871
        %1102 = vmatpush.bf16.msra.mxu0 %v869
        %1103 = vmatpush.bf16.msra.mxu0 %v867
        %1104 = vmatpush.bf16.msra.mxu0 %v865
        %1105 = vmatpush.bf16.msra.mxu0 %v863
        %1106 = vmatmul.bf16.gmra.mxu0 %v238
        %v1107 = vpop.f32.mrf.mxu0
        %v1108 = vadd.f32 %v1095, %v1107
        %v1109 = vpop.f32.mrf.mxu0
        %1110 = vdwg.mxu0
        %1111 = vmatpush.bf16.msra.mxu0 %v766
        %1112 = vmatpush.bf16.msra.mxu0 %v764
        %1113 = vmatpush.bf16.msra.mxu0 %v762
        %1114 = vmatpush.bf16.msra.mxu0 %v760
        %1115 = vmatpush.bf16.msra.mxu0 %v758
        %1116 = vmatpush.bf16.msra.mxu0 %v756
        %1117 = vmatpush.bf16.msra.mxu0 %v754
        %1118 = vmatpush.bf16.msra.mxu0 %v752
        %1119 = vmatmul.bf16.gmra.mxu0 %v231
        %v1120 = vpop.f32.mrf.mxu0
        %v1121 = vadd.f32 0.0, %v1120
        %v1122 = vpop.f32.mrf.mxu0
        %1123 = vdwg.mxu0
        %1124 = vmatpush.bf16.msra.mxu0 %v782
        %1125 = vmatpush.bf16.msra.mxu0 %v780
        %1126 = vmatpush.bf16.msra.mxu0 %v778
        %1127 = vmatpush.bf16.msra.mxu0 %v776
        %1128 = vmatpush.bf16.msra.mxu0 %v774
        %1129 = vmatpush.bf16.msra.mxu0 %v772
        %1130 = vmatpush.bf16.msra.mxu0 %v770
        %1131 = vmatpush.bf16.msra.mxu0 %v768
        %1132 = vmatmul.bf16.gmra.mxu0 %v232
        %v1133 = vpop.f32.mrf.mxu0
        %v1134 = vadd.f32 %v1121, %v1133
        %v1135 = vpop.f32.mrf.mxu0
        %1136 = vdwg.mxu0
        %1137 = vmatpush.bf16.msra.mxu0 %v798
        %1138 = vmatpush.bf16.msra.mxu0 %v796
        %1139 = vmatpush.bf16.msra.mxu0 %v794
        %1140 = vmatpush.bf16.msra.mxu0 %v792
        %1141 = vmatpush.bf16.msra.mxu0 %v790
        %1142 = vmatpush.bf16.msra.mxu0 %v788
        %1143 = vmatpush.bf16.msra.mxu0 %v786
        %1144 = vmatpush.bf16.msra.mxu0 %v784
        %1145 = vmatmul.bf16.gmra.mxu0 %v233
        %v1146 = vpop.f32.mrf.mxu0
        %v1147 = vadd.f32 %v1134, %v1146
        %v1148 = vpop.f32.mrf.mxu0
        %1149 = vdwg.mxu0
        %1150 = vmatpush.bf16.msra.mxu0 %v814
        %1151 = vmatpush.bf16.msra.mxu0 %v812
        %1152 = vmatpush.bf16.msra.mxu0 %v810
        %1153 = vmatpush.bf16.msra.mxu0 %v808
        %1154 = vmatpush.bf16.msra.mxu0 %v806
        %1155 = vmatpush.bf16.msra.mxu0 %v804
        %1156 = vmatpush.bf16.msra.mxu0 %v802
        %1157 = vmatpush.bf16.msra.mxu0 %v800
        %1158 = vmatmul.bf16.gmra.mxu0 %v234
        %v1159 = vpop.f32.mrf.mxu0
        %v1160 = vadd.f32 %v1147, %v1159
        %v1161 = vpop.f32.mrf.mxu0
        %1162 = vdwg.mxu0
        %1163 = vmatpush.bf16.msra.mxu0 %v830
        %1164 = vmatpush.bf16.msra.mxu0 %v828
        %1165 = vmatpush.bf16.msra.mxu0 %v826
        %1166 = vmatpush.bf16.msra.mxu0 %v824
        %1167 = vmatpush.bf16.msra.mxu0 %v822
        %1168 = vmatpush.bf16.msra.mxu0 %v820
        %1169 = vmatpush.bf16.msra.mxu0 %v818
        %1170 = vmatpush.bf16.msra.mxu0 %v816
        %1171 = vmatmul.bf16.gmra.mxu0 %v235
        %v1172 = vpop.f32.mrf.mxu0
        %v1173 = vadd.f32 %v1160, %v1172
        %v1174 = vpop.f32.mrf.mxu0
        %1175 = vdwg.mxu0
        %1176 = vmatpush.bf16.msra.mxu0 %v846
        %1177 = vmatpush.bf16.msra.mxu0 %v844
        %1178 = vmatpush.bf16.msra.mxu0 %v842
        %1179 = vmatpush.bf16.msra.mxu0 %v840
        %1180 = vmatpush.bf16.msra.mxu0 %v838
        %1181 = vmatpush.bf16.msra.mxu0 %v836
        %1182 = vmatpush.bf16.msra.mxu0 %v834
        %1183 = vmatpush.bf16.msra.mxu0 %v832
        %1184 = vmatmul.bf16.gmra.mxu0 %v236
        %v1185 = vpop.f32.mrf.mxu0
        %v1186 = vadd.f32 %v1173, %v1185
        %v1187 = vpop.f32.mrf.mxu0
        %1188 = vdwg.mxu0
        %1189 = vmatpush.bf16.msra.mxu0 %v862
        %1190 = vmatpush.bf16.msra.mxu0 %v860
        %1191 = vmatpush.bf16.msra.mxu0 %v858
        %1192 = vmatpush.bf16.msra.mxu0 %v856
        %1193 = vmatpush.bf16.msra.mxu0 %v854
        %1194 = vmatpush.bf16.msra.mxu0 %v852
        %1195 = vmatpush.bf16.msra.mxu0 %v850
        %1196 = vmatpush.bf16.msra.mxu0 %v848
        %1197 = vmatmul.bf16.gmra.mxu0 %v237
        %v1198 = vpop.f32.mrf.mxu0
        %v1199 = vadd.f32 %v1186, %v1198
        %v1200 = vpop.f32.mrf.mxu0
        %1201 = vdwg.mxu0
        %1202 = vmatpush.bf16.msra.mxu0 %v878
        %1203 = vmatpush.bf16.msra.mxu0 %v876
        %1204 = vmatpush.bf16.msra.mxu0 %v874
        %1205 = vmatpush.bf16.msra.mxu0 %v872
        %1206 = vmatpush.bf16.msra.mxu0 %v870
        %1207 = vmatpush.bf16.msra.mxu0 %v868
        %1208 = vmatpush.bf16.msra.mxu0 %v866
        %1209 = vmatpush.bf16.msra.mxu0 %v864
        %1210 = vmatmul.bf16.gmra.mxu0 %v238
        %v1211 = vpop.f32.mrf.mxu0
        %v1212 = vadd.f32 %v1199, %v1211
        %v1213 = vpop.f32.mrf.mxu0
        %1214 = vdwg.mxu0
        %v1217 = vrot.slane %v1212, 6
        %vm1218 = vcmask 1041408
        %v1219 = vsel %vm1218, %v1108, %v1217
        %v1221 = vadd.f32 %v207, %v1219
        %1222 = vst [vmem:[#allocation2] sm:$0xf] %v1221
        %p1223 = scmp.eq.s32.totalorder %s17, 1
        // Predicated region
        $region41: #{pair_img_classifier_deepface.4} parent=31 // pred_check
          %p1224 = pneg %p1223
        $region42: #{pair_img_classifier_deepface.4} parent=31 // pred_check_branch
          %1226 = sbr.rel (%p1224) target = $region44
        $region43: #{pair_img_classifier_deepface.4} parent=31 // pred_region
          %v1227 = vld [vmem:[#allocation2] sm:$0xf]
          %v1228 = vld [vmem:[%s2] sm:$0x3]
          %v1230 = vperm.slane %v1228, 0
          %v1231 = vperm.slane %v1228, 1
          %v1232 = vrot.slane %v1231, 6
          %v1233 = vsel %vm1218, %v1230, %v1232
          %v1235 = vadd.f32 %v1227, %v1233
          %v1236 = vmax.f32 %v1235, 0.0
          %1237 = vst [vmem:[%s3] sm:$0xf] %v1236
        $region44: #{pair_img_classifier_deepface.4} parent=31 // pred_fallthru
          _
        // Predicated region
        $region45: #{pair_img_classifier_deepface.4} parent=31 // pred_check
          %p1238 = pneg %p103
        $region46: #{pair_img_classifier_deepface.4} parent=31 // pred_check_branch
          %1240 = sbr.rel (%p1238) target = $region48
        $region47: #{pair_img_classifier_deepface.4} parent=31 // pred_region
          _
        $region48: #{pair_img_classifier_deepface.4} parent=31 // pred_fallthru
          _
        // Predicated region
        $region49: #{pair_img_classifier_deepface.4} parent=31 // pred_check
          %p1241 = pneg %p103
        $region50: #{pair_img_classifier_deepface.4} parent=31 // pred_check_branch
          %1243 = sbr.rel (%p1241) target = $region52
        $region51: #{pair_img_classifier_deepface.4} parent=31 // pred_region
          _
        $region52: #{pair_img_classifier_deepface.4} parent=31 // pred_fallthru
          _
      $region32: #{pair_img_classifier_deepface.4} parent=5 // pred_fallthru
        _
      %p1244 = scmp.le.s32.totalorder 2, %s12
      // Predicated region
      $region53: #{pair_img_classifier_deepface.4} parent=5 // pred_check
        %p1245 = pneg %p1244
      $region54: #{pair_img_classifier_deepface.4} parent=5 // pred_check_branch
        %1247 = sbr.rel (%p1245) target = $region56
      $region55: #{pair_img_classifier_deepface.4} parent=5 // pred_region
        %s1248 = ssub.s32 %s12, 2
      $region56: #{pair_img_classifier_deepface.4} parent=5 // pred_fallthru
        _
    $region6: #{pair_img_classifier_deepface.4} parent=1 // loop_footer
      %s16 = sadd.s32 1, %s12
    $region7: #{pair_img_classifier_deepface.4} parent=1 // loop_footer_branch
      %11 = sbr.rel target = $region3
    $region8: #{pair_img_classifier_deepface.4} parent=1 // loop_exit
      _
    %1249 = vsyncpa [#allocation4], 1
    %s1250 = scalar_lea.sflag [#allocation4], 1
    %1251 = vsyncpa %s1250, 1

// kernel: pair_img_classifier_deepface.5
$region0: #{pair_img_classifier_deepface.5}
  #allocation0 [shape = 'u32[]', space=smem, size = 0x4, offset = 0x4, fixed_abs, tag = 'smem constant byte address 0x4 - core index']
  #allocation1 [shape = 'u32[72,128]{1,0:T(1,128)}', space=vmem, size = 0x9000, scoped, tag = 'internal scratch']
  #allocation2 [shape = 'f32[2,16]{1,0:T(2,128)}', space=vmem, size = 0x400, scoped, tag = 'scratch operand']
  %s0 = inlined_call_operand.vmem [shape: f32[2,2048], index: 0, kind: input, shape index: {}]
  %s1 = inlined_call_operand.vmem [shape: f32[2,256], index: 1, kind: input, shape index: {}]
  %s2 = inlined_call_operand.hbm [shape: bf16[256,2048], index: 2, kind: input, shape index: {}]
  %s3 = inlined_call_operand.vmem [shape: f32[1,2048], index: 3, kind: input, shape index: {}]
  %s4 = inlined_call_operand.vmem [shape: bf16[2048,16], index: 4, kind: input, shape index: {}]
  %s5 = inlined_call_operand.vmem [shape: f32[1,16], index: 5, kind: input, shape index: {}]
  %s6 = inlined_call_operand.vmem [shape: bf16[16,2], index: 6, kind: input, shape index: {}]
  %s7 = inlined_call_operand.vmem [shape: f32[1,2], index: 7, kind: input, shape index: {}]
  %s8 = inlined_call_operand.hbm [shape: f32[2,2], index: 8, kind: output, shape index: {}]
  %s9 = sld [smem:[#allocation0]]
  $region77: #{pair_img_classifier_deepface.5} parent=0
    _
  %s11 = ssub.s32 1, %s9
  %s12 = scalar_select 0, %s11, %s9
  $region1: #{pair_img_classifier_deepface.5} parent=0
    #allocation3 [shape = 'u8[1048576]{0}', space=vmem, size = 0x100000, scoped, tag = 'input window, operand 2']
    #allocation4 [shape = 's32[2]{0}', space=sflag, size = 0x8, scoped, tag = 'scoped memory for pair_img_classifier_deepface.5']
    #allocation5 [shape = 's32[2]{0}', space=sflag, size = 0x8, scoped, tag = 'scoped memory for pair_img_classifier_deepface.5']
    #allocation6 [shape = 'u8[1024]{0}', space=vmem, size = 0x400, scoped, tag = 'output window, operand 0, single buffered']
    %13 = vsyncpa [#allocation4], 0
    %s14 = scalar_lea.sflag [#allocation4], 1
    %15 = vsyncpa %s14, 0
    %16 = vsyncpa [#allocation5], 0
    loop: start=0, step=1, limit=4
    $region2: #{pair_img_classifier_deepface.5} parent=1 // loop_pre_header
      _
    $region3: #{pair_img_classifier_deepface.5} parent=1 // loop_header
      %s18 = sphi 0, %s22
      %p19 = scmp.ge.s32.totalorder %s18, 4
      %s28 = sphi 0, %s30
      %s31 = sphi 0, %s28
      %s32 = sphi 0, %s31
      %s48 = sphi 0, %s32
      %s52 = sphi 0, %s52
      %s54 = sphi 0, %s52
      %s55 = sphi 0, %s54
      %s69 = sphi 0, %s55
      %s75 = sphi 0, %s77
      %s78 = sphi 0, %s75
      %s79 = sphi 0, %s78
      %s95 = sphi 0, %s79
      %s101 = sphi 0, %s103
      %s104 = sphi 0, %s101
      %s105 = sphi 0, %s104
      %s121 = sphi 0, %s105
      %s127 = sphi 0, %s129
      %s130 = sphi 0, %s127
      %s131 = sphi 0, %s130
      %s147 = sphi 0, %s131
      %s151 = sphi 0, %s151
      %s153 = sphi 0, %s151
      %s154 = sphi 0, %s153
      %s168 = sphi 0, %s154
      %s172 = sphi 0, %s172
      %s174 = sphi 0, %s172
      %s175 = sphi 0, %s174
      %s189 = sphi 0, %s175
      %s193 = sphi 0, %s193
      %s195 = sphi 0, %s193
      %s196 = sphi 0, %s195
      %s210 = sphi 0, %s196
      %s214 = sphi 0, %s214
      %s216 = sphi 0, %s214
      %s217 = sphi 0, %s216
      %s231 = sphi 0, %s217
    $region4: #{pair_img_classifier_deepface.5} parent=1 // loop_header_branch
      %21 = sbr.rel (%p19) target = $region8
    $region5: #{pair_img_classifier_deepface.5} parent=1 // loop_body
      %s23 = ssub.s32 %s18, 1
      %s24 = ssub.s32 %s18, 2
      %s25 = sadd.s32 %s18, 1
      %s26 = ssub.s32 %s18, %s25
      %p27 = scmp.eq.s32.totalorder %s26, 0
      %s29 = sadd.s32 %s28, 1
      %s30 = scalar_select %p27, %s28, %s29
      %p33 = pneg %p27
      %p34 = scmp.eq.s32.totalorder %s18, 1
      %p35 = por %p33, %p34
      %p36 = scmp.ne.s32.totalorder %s28, %s31
      %p37 = scmp.eq.s32.totalorder %s18, 0
      %p38 = por %p36, %p37
      %p39 = scmp.ne.s32.totalorder %s28, %s31
      %p40 = scmp.eq.s32.totalorder %s23, 1
      %p41 = por %p39, %p40
      %p42 = scmp.ne.s32.totalorder %s31, %s32
      %p43 = scmp.eq.s32.totalorder %s23, 0
      %p44 = por %p42, %p43
      %p45 = scmp.ne.s32.totalorder %s31, %s32
      %p46 = scmp.eq.s32.totalorder %s24, 1
      %p47 = por %p45, %p46
      %p49 = scmp.ne.s32.totalorder %s32, %s48
      %p50 = scmp.eq.s32.totalorder %s24, 0
      %p51 = por %p49, %p50
      %s53 = sadd.s32 %s52, 1
      %p56 = scmp.eq.s32.totalorder %s18, 1
      %p57 = scmp.ne.s32.totalorder %s52, %s54
      %p58 = scmp.eq.s32.totalorder %s18, 0
      %p59 = por %p57, %p58
      %p60 = scmp.ne.s32.totalorder %s52, %s54
      %p61 = scmp.eq.s32.totalorder %s23, 1
      %p62 = por %p60, %p61
      %p63 = scmp.ne.s32.totalorder %s54, %s55
      %p64 = scmp.eq.s32.totalorder %s23, 0
      %p65 = por %p63, %p64
      %p66 = scmp.ne.s32.totalorder %s54, %s55
      %p67 = scmp.eq.s32.totalorder %s24, 1
      %p68 = por %p66, %p67
      %p70 = scmp.ne.s32.totalorder %s55, %s69
      %p71 = scmp.eq.s32.totalorder %s24, 0
      %p72 = por %p70, %p71
      %s73 = ssub.s32 %s18, %s25
      %p74 = scmp.eq.s32.totalorder %s73, 0
      %s76 = sadd.s32 %s75, 1
      %s77 = scalar_select %p74, %s75, %s76
      %p80 = pneg %p74
      %p81 = scmp.eq.s32.totalorder %s18, 1
      %p82 = por %p80, %p81
      %p83 = scmp.ne.s32.totalorder %s75, %s78
      %p84 = scmp.eq.s32.totalorder %s18, 0
      %p85 = por %p83, %p84
      %p86 = scmp.ne.s32.totalorder %s75, %s78
      %p87 = scmp.eq.s32.totalorder %s23, 1
      %p88 = por %p86, %p87
      %p89 = scmp.ne.s32.totalorder %s78, %s79
      %p90 = scmp.eq.s32.totalorder %s23, 0
      %p91 = por %p89, %p90
      %p92 = scmp.ne.s32.totalorder %s78, %s79
      %p93 = scmp.eq.s32.totalorder %s24, 1
      %p94 = por %p92, %p93
      %p96 = scmp.ne.s32.totalorder %s79, %s95
      %p97 = scmp.eq.s32.totalorder %s24, 0
      %p98 = por %p96, %p97
      %s99 = ssub.s32 %s18, %s25
      %p100 = scmp.eq.s32.totalorder %s99, 0
      %s102 = sadd.s32 %s101, 1
      %s103 = scalar_select %p100, %s101, %s102
      %p106 = pneg %p100
      %p107 = scmp.eq.s32.totalorder %s18, 1
      %p108 = por %p106, %p107
      %p109 = scmp.ne.s32.totalorder %s101, %s104
      %p110 = scmp.eq.s32.totalorder %s18, 0
      %p111 = por %p109, %p110
      %p112 = scmp.ne.s32.totalorder %s101, %s104
      %p113 = scmp.eq.s32.totalorder %s23, 1
      %p114 = por %p112, %p113
      %p115 = scmp.ne.s32.totalorder %s104, %s105
      %p116 = scmp.eq.s32.totalorder %s23, 0
      %p117 = por %p115, %p116
      %p118 = scmp.ne.s32.totalorder %s104, %s105
      %p119 = scmp.eq.s32.totalorder %s24, 1
      %p120 = por %p118, %p119
      %p122 = scmp.ne.s32.totalorder %s105, %s121
      %p123 = scmp.eq.s32.totalorder %s24, 0
      %p124 = por %p122, %p123
      %s125 = ssub.s32 %s18, %s25
      %p126 = scmp.eq.s32.totalorder %s125, 0
      %s128 = sadd.s32 %s127, 1
      %s129 = scalar_select %p126, %s127, %s128
      %p132 = pneg %p126
      %p133 = scmp.eq.s32.totalorder %s18, 1
      %p134 = por %p132, %p133
      %p135 = scmp.ne.s32.totalorder %s127, %s130
      %p136 = scmp.eq.s32.totalorder %s18, 0
      %p137 = por %p135, %p136
      %p138 = scmp.ne.s32.totalorder %s127, %s130
      %p139 = scmp.eq.s32.totalorder %s23, 1
      %p140 = por %p138, %p139
      %p141 = scmp.ne.s32.totalorder %s130, %s131
      %p142 = scmp.eq.s32.totalorder %s23, 0
      %p143 = por %p141, %p142
      %p144 = scmp.ne.s32.totalorder %s130, %s131
      %p145 = scmp.eq.s32.totalorder %s24, 1
      %p146 = por %p144, %p145
      %p148 = scmp.ne.s32.totalorder %s131, %s147
      %p149 = scmp.eq.s32.totalorder %s24, 0
      %p150 = por %p148, %p149
      %s152 = sadd.s32 %s151, 1
      %p155 = scmp.eq.s32.totalorder %s18, 1
      %p156 = scmp.ne.s32.totalorder %s151, %s153
      %p157 = scmp.eq.s32.totalorder %s18, 0
      %p158 = por %p156, %p157
      %p159 = scmp.ne.s32.totalorder %s151, %s153
      %p160 = scmp.eq.s32.totalorder %s23, 1
      %p161 = por %p159, %p160
      %p162 = scmp.ne.s32.totalorder %s153, %s154
      %p163 = scmp.eq.s32.totalorder %s23, 0
      %p164 = por %p162, %p163
      %p165 = scmp.ne.s32.totalorder %s153, %s154
      %p166 = scmp.eq.s32.totalorder %s24, 1
      %p167 = por %p165, %p166
      %p169 = scmp.ne.s32.totalorder %s154, %s168
      %p170 = scmp.eq.s32.totalorder %s24, 0
      %p171 = por %p169, %p170
      %s173 = sadd.s32 %s172, 1
      %p176 = scmp.eq.s32.totalorder %s18, 1
      %p177 = scmp.ne.s32.totalorder %s172, %s174
      %p178 = scmp.eq.s32.totalorder %s18, 0
      %p179 = por %p177, %p178
      %p180 = scmp.ne.s32.totalorder %s172, %s174
      %p181 = scmp.eq.s32.totalorder %s23, 1
      %p182 = por %p180, %p181
      %p183 = scmp.ne.s32.totalorder %s174, %s175
      %p184 = scmp.eq.s32.totalorder %s23, 0
      %p185 = por %p183, %p184
      %p186 = scmp.ne.s32.totalorder %s174, %s175
      %p187 = scmp.eq.s32.totalorder %s24, 1
      %p188 = por %p186, %p187
      %p190 = scmp.ne.s32.totalorder %s175, %s189
      %p191 = scmp.eq.s32.totalorder %s24, 0
      %p192 = por %p190, %p191
      %s194 = sadd.s32 %s193, 1
      %p197 = scmp.eq.s32.totalorder %s18, 1
      %p198 = scmp.ne.s32.totalorder %s193, %s195
      %p199 = scmp.eq.s32.totalorder %s18, 0
      %p200 = por %p198, %p199
      %p201 = scmp.ne.s32.totalorder %s193, %s195
      %p202 = scmp.eq.s32.totalorder %s23, 1
      %p203 = por %p201, %p202
      %p204 = scmp.ne.s32.totalorder %s195, %s196
      %p205 = scmp.eq.s32.totalorder %s23, 0
      %p206 = por %p204, %p205
      %p207 = scmp.ne.s32.totalorder %s195, %s196
      %p208 = scmp.eq.s32.totalorder %s24, 1
      %p209 = por %p207, %p208
      %p211 = scmp.ne.s32.totalorder %s196, %s210
      %p212 = scmp.eq.s32.totalorder %s24, 0
      %p213 = por %p211, %p212
      %s215 = sadd.s32 %s214, 1
      %p218 = scmp.eq.s32.totalorder %s18, 1
      %p219 = scmp.ne.s32.totalorder %s214, %s216
      %p220 = scmp.eq.s32.totalorder %s18, 0
      %p221 = por %p219, %p220
      %p222 = scmp.ne.s32.totalorder %s214, %s216
      %p223 = scmp.eq.s32.totalorder %s23, 1
      %p224 = por %p222, %p223
      %p225 = scmp.ne.s32.totalorder %s216, %s217
      %p226 = scmp.eq.s32.totalorder %s23, 0
      %p227 = por %p225, %p226
      %p228 = scmp.ne.s32.totalorder %s216, %s217
      %p229 = scmp.eq.s32.totalorder %s24, 1
      %p230 = por %p228, %p229
      %p232 = scmp.ne.s32.totalorder %s217, %s231
      %p233 = scmp.eq.s32.totalorder %s24, 0
      %p234 = por %p232, %p233
      %p235 = scmp.le.s32.totalorder 1, %s18
      %p236 = scmp.lt.s32.totalorder %s18, 3
      %p237 = pnand %p235, %p236
      %p238 = pneg %p237
      // Predicated region
      $region9: #{pair_img_classifier_deepface.5} parent=5 // pred_check
        _
      $region10: #{pair_img_classifier_deepface.5} parent=5 // pred_check_branch
        %240 = sbr.rel (%p237) target = $region12
      $region11: #{pair_img_classifier_deepface.5} parent=5 // pred_region
        %s241 = ssub.s32 %s18, 1
        // Predicated region
        $region13: #{pair_img_classifier_deepface.5} parent=11 // pred_check
          %p242 = pneg %p65
        $region14: #{pair_img_classifier_deepface.5} parent=11 // pred_check_branch
          %244 = sbr.rel (%p242) target = $region16
        $region15: #{pair_img_classifier_deepface.5} parent=11 // pred_region
          _
        $region16: #{pair_img_classifier_deepface.5} parent=11 // pred_fallthru
          _
        // Predicated region
        $region17: #{pair_img_classifier_deepface.5} parent=11 // pred_check
          %p245 = pneg %p164
        $region18: #{pair_img_classifier_deepface.5} parent=11 // pred_check_branch
          %247 = sbr.rel (%p245) target = $region20
        $region19: #{pair_img_classifier_deepface.5} parent=11 // pred_region
          _
        $region20: #{pair_img_classifier_deepface.5} parent=11 // pred_fallthru
          _
        // Predicated region
        $region21: #{pair_img_classifier_deepface.5} parent=11 // pred_check
          %p248 = pneg %p185
        $region22: #{pair_img_classifier_deepface.5} parent=11 // pred_check_branch
          %250 = sbr.rel (%p248) target = $region24
        $region23: #{pair_img_classifier_deepface.5} parent=11 // pred_region
          _
        $region24: #{pair_img_classifier_deepface.5} parent=11 // pred_fallthru
          _
        // Predicated region
        $region25: #{pair_img_classifier_deepface.5} parent=11 // pred_check
          %p251 = pneg %p206
        $region26: #{pair_img_classifier_deepface.5} parent=11 // pred_check_branch
          %253 = sbr.rel (%p251) target = $region28
        $region27: #{pair_img_classifier_deepface.5} parent=11 // pred_region
          _
        $region28: #{pair_img_classifier_deepface.5} parent=11 // pred_fallthru
          _
      $region12: #{pair_img_classifier_deepface.5} parent=5 // pred_fallthru
        _
      %p254 = scmp.lt.s32.totalorder %s18, 2
      // Predicated region
      $region29: #{pair_img_classifier_deepface.5} parent=5 // pred_check
        %p255 = pneg %p254
      $region30: #{pair_img_classifier_deepface.5} parent=5 // pred_check_branch
        %257 = sbr.rel (%p255) target = $region32
      $region31: #{pair_img_classifier_deepface.5} parent=5 // pred_region
        // Predicated region
        $region33: #{pair_img_classifier_deepface.5} parent=31 // pred_check
          %p258 = pneg %p38
        $region34: #{pair_img_classifier_deepface.5} parent=31 // pred_check_branch
          %260 = sbr.rel (%p258) target = $region36
        $region35: #{pair_img_classifier_deepface.5} parent=31 // pred_region
          %s261 = smul.u32 8, %s18
          %p262 = scmp.lt.s32.totalorder %s261, 15
          %s263 = scalar_select %p262, %s261, 15
          %s264 = smul.addr %s263, 2
          %s265 = scalar_lea.vmem %s0, %s264
          %s266 = smul.u32 8, %s18
        $region36: #{pair_img_classifier_deepface.5} parent=31 // pred_fallthru
          _
        // Predicated region
        $region37: #{pair_img_classifier_deepface.5} parent=31 // pred_check
          %p267 = pneg %p85
        $region38: #{pair_img_classifier_deepface.5} parent=31 // pred_check_branch
          %269 = sbr.rel (%p267) target = $region40
        $region39: #{pair_img_classifier_deepface.5} parent=31 // pred_region
          %s270 = sand.u32 %s75, 1
          %s271 = scalar_lea.sflag [#allocation4], %s270
          %s272 = sand.u32 %s75, 1
          %s273 = smul.addr %s272, 1024
          %s274 = scalar_lea.vmem [#allocation3], %s273
          %s275 = smul.u32 8, %s18
          %277 = vsyncadd %s271, 0
          %s278 = smul.addr %s275, 4
          %s279 = scalar_lea.hbm %s2, %s278
          %s280 = sshll.u32 %s279, 4
          %s281 = int_to_ptr.hbm [resolvable:$true] %s280
          %s282 = sshll.u32 %s274, 4
          %s283 = int_to_ptr.vmem [resolvable:$true] %s282
          %288 = dma.hbm_to_vmem [thread:$0]  %s281, 16384, %s283, %s271, 1024, 512, 32
        $region40: #{pair_img_classifier_deepface.5} parent=31 // pred_fallthru
          _
        // Predicated region
        $region41: #{pair_img_classifier_deepface.5} parent=31 // pred_check
          %p289 = pneg %p111
        $region42: #{pair_img_classifier_deepface.5} parent=31 // pred_check_branch
          %291 = sbr.rel (%p289) target = $region44
        $region43: #{pair_img_classifier_deepface.5} parent=31 // pred_region
          %s292 = smul.u32 8, %s18
          %p293 = scmp.lt.s32.totalorder %s292, 15
          %s294 = scalar_select %p293, %s292, 15
          %s295 = scalar_lea.vmem %s3, %s294
          %s296 = smul.u32 8, %s18
        $region44: #{pair_img_classifier_deepface.5} parent=31 // pred_fallthru
          _
        // Predicated region
        $region45: #{pair_img_classifier_deepface.5} parent=31 // pred_check
          %p297 = pneg %p137
        $region46: #{pair_img_classifier_deepface.5} parent=31 // pred_check_branch
          %299 = sbr.rel (%p297) target = $region48
        $region47: #{pair_img_classifier_deepface.5} parent=31 // pred_region
          %s300 = smul.u32 128, %s18
          %p301 = scmp.lt.s32.totalorder %s300, 255
          %s302 = scalar_select %p301, %s300, 255
          %s303 = smul.addr %s302, 4
          %s304 = scalar_lea.vmem %s4, %s303
          %s305 = smul.u32 128, %s18
        $region48: #{pair_img_classifier_deepface.5} parent=31 // pred_fallthru
          _
      $region32: #{pair_img_classifier_deepface.5} parent=5 // pred_fallthru
        _
      %p306 = scmp.le.s32.totalorder 1, %s18
      %p307 = scmp.lt.s32.totalorder %s18, 3
      %p308 = pnand %p306, %p307
      %p309 = pneg %p308
      // Predicated region
      $region49: #{pair_img_classifier_deepface.5} parent=5 // pred_check
        _
      $region50: #{pair_img_classifier_deepface.5} parent=5 // pred_check_branch
        %311 = sbr.rel (%p308) target = $region52
      $region51: #{pair_img_classifier_deepface.5} parent=5 // pred_region
        %s312 = ssub.s32 %s18, 1
        %s313 = sand.u32 %s78, 1
        %s314 = scalar_lea.sflag [#allocation4], %s313
        %s315 = sand.u32 %s78, 1
        %s316 = smul.addr %s315, 1024
        %s317 = scalar_lea.vmem [#allocation3], %s316
        // Predicated region
        $region53: #{pair_img_classifier_deepface.5} parent=51 // pred_check
          %p318 = pneg %p91
        $region54: #{pair_img_classifier_deepface.5} parent=51 // pred_check_branch
          %320 = sbr.rel (%p318) target = $region56
        $region55: #{pair_img_classifier_deepface.5} parent=51 // pred_region
          %322 = dma.done %s314, 16384
        $region56: #{pair_img_classifier_deepface.5} parent=51 // pred_fallthru
          _
        %s323 = smul.u32 8, %s23
        %p324 = scmp.lt.s32.totalorder %s323, 15
        %s325 = scalar_select %p324, %s323, 15
        %s326 = smul.addr %s325, 2
        %s327 = scalar_lea.vmem %s0, %s326
        %p328 = pneg %p44
        %p329 = pneg %p41
        %p330 = pneg %p65
        %p331 = pneg %p62
        %s332 = sand.u32 %s78, 1
        %s333 = scalar_lea.sflag [#allocation4], %s332
        %s334 = sand.u32 %s78, 1
        %s335 = smul.addr %s334, 1024
        %s336 = scalar_lea.vmem [#allocation3], %s335
        %p337 = pneg %p91
        %p338 = pneg %p88
        %s339 = smul.u32 8, %s23
        %p340 = scmp.lt.s32.totalorder %s339, 15
        %s341 = scalar_select %p340, %s339, 15
        %s342 = scalar_lea.vmem %s3, %s341
        %p343 = pneg %p117
        %p344 = pneg %p114
        %s345 = smul.u32 128, %s23
        %p346 = scmp.lt.s32.totalorder %s345, 255
        %s347 = scalar_select %p346, %s345, 255
        %s348 = smul.addr %s347, 4
        %s349 = scalar_lea.vmem %s4, %s348
        %p350 = pneg %p143
        %p351 = pneg %p140
        %p352 = pneg %p164
        %p353 = pneg %p161
        %p354 = pneg %p185
        %p355 = pneg %p182
        %p356 = pneg %p206
        %p357 = pneg %p203
        %p358 = pneg %p227
        %p359 = pneg %p224
        %s360 = smul.u32 8, %s23
        %p361 = scmp.lt.s32.totalorder %s360, 15
        %s362 = scalar_select %p361, %s360, 15
        %s363 = smul.addr %s362, 2
        %s364 = scalar_lea.vmem %s0, %s363
        %s365 = smul.u32 8, %s23
        %s366 = smul.u32 8, %s23
        %s367 = smul.u32 8, %s23
        %p368 = scmp.lt.s32.totalorder %s367, 15
        %s369 = scalar_select %p368, %s367, 15
        %s370 = scalar_lea.vmem %s3, %s369
        %s371 = smul.u32 8, %s23
        %s372 = smul.u32 128, %s23
        %p373 = scmp.lt.s32.totalorder %s372, 255
        %s374 = scalar_select %p373, %s372, 255
        %s375 = smul.addr %s374, 4
        %s376 = scalar_lea.vmem %s4, %s375
        %s377 = smul.u32 128, %s23
        %p379 = scmp.eq.s32.totalorder %s23, 0
        // Predicated region
        $region57: #{pair_img_classifier_deepface.5} parent=51 // pred_check
          %p380 = pneg %p379
        $region58: #{pair_img_classifier_deepface.5} parent=51 // pred_check_branch
          %382 = sbr.rel (%p380) target = $region60
        $region59: #{pair_img_classifier_deepface.5} parent=51 // pred_region
          %vm383 = vcmask 123904
          %384 = vst.msk [vmem:[#allocation2] sm:$0x3] %vm383, 0.0
        $region60: #{pair_img_classifier_deepface.5} parent=51 // pred_fallthru
          _
        %v385 = vld [vmem:[%s1] sm:$0xf]
        %387 = vst [vmem:[#allocation1] ss:$4 sm:$0xff] %v385
        %v388 = vld.sshfl [vmem:[#allocation1] sm:$0xff pattern:$0x73625140]
        %v389 = vld.sshfl [vmem:[#allocation1 + $0x8] sm:$0xff pattern:$0x73625140]
        %v392 = vpack.c.bf16 %v388, %v388
        %v393 = vpack.c.bf16 %v389, %v389
        %v394 = vld [vmem:[%s317] sm:$0xff]
        %v395 = vld [vmem:[%s317 + $0x8] sm:$0xff]
        %v396 = vld [vmem:[%s317 + $0x10] sm:$0xff]
        %v397 = vld [vmem:[%s317 + $0x18] sm:$0xff]
        %v398 = vld [vmem:[%s317 + $0x20] sm:$0xff]
        %v399 = vld [vmem:[%s317 + $0x28] sm:$0xff]
        %v400 = vld [vmem:[%s317 + $0x30] sm:$0xff]
        %v401 = vld [vmem:[%s317 + $0x38] sm:$0xff]
        %v402 = vld [vmem:[%s317 + $0x40] sm:$0xff]
        %v403 = vld [vmem:[%s317 + $0x48] sm:$0xff]
        %v404 = vld [vmem:[%s317 + $0x50] sm:$0xff]
        %v405 = vld [vmem:[%s317 + $0x58] sm:$0xff]
        %v406 = vld [vmem:[%s317 + $0x60] sm:$0xff]
        %v407 = vld [vmem:[%s317 + $0x68] sm:$0xff]
        %v408 = vld [vmem:[%s317 + $0x70] sm:$0xff]
        %v409 = vld [vmem:[%s317 + $0x78] sm:$0xff]
        %v410 = vld [vmem:[%s317 + $0x80] sm:$0xff]
        %v411 = vld [vmem:[%s317 + $0x88] sm:$0xff]
        %v412 = vld [vmem:[%s317 + $0x90] sm:$0xff]
        %v413 = vld [vmem:[%s317 + $0x98] sm:$0xff]
        %v414 = vld [vmem:[%s317 + $0xa0] sm:$0xff]
        %v415 = vld [vmem:[%s317 + $0xa8] sm:$0xff]
        %v416 = vld [vmem:[%s317 + $0xb0] sm:$0xff]
        %v417 = vld [vmem:[%s317 + $0xb8] sm:$0xff]
        %v418 = vld [vmem:[%s317 + $0xc0] sm:$0xff]
        %v419 = vld [vmem:[%s317 + $0xc8] sm:$0xff]
        %v420 = vld [vmem:[%s317 + $0xd0] sm:$0xff]
        %v421 = vld [vmem:[%s317 + $0xd8] sm:$0xff]
        %v422 = vld [vmem:[%s317 + $0xe0] sm:$0xff]
        %v423 = vld [vmem:[%s317 + $0xe8] sm:$0xff]
        %v424 = vld [vmem:[%s317 + $0xf0] sm:$0xff]
        %v425 = vld [vmem:[%s317 + $0xf8] sm:$0xff]
        %v426 = vld [vmem:[%s317 + $0x100] sm:$0xff]
        %v427 = vld [vmem:[%s317 + $0x108] sm:$0xff]
        %v428 = vld [vmem:[%s317 + $0x110] sm:$0xff]
        %v429 = vld [vmem:[%s317 + $0x118] sm:$0xff]
        %v430 = vld [vmem:[%s317 + $0x120] sm:$0xff]
        %v431 = vld [vmem:[%s317 + $0x128] sm:$0xff]
        %v432 = vld [vmem:[%s317 + $0x130] sm:$0xff]
        %v433 = vld [vmem:[%s317 + $0x138] sm:$0xff]
        %v434 = vld [vmem:[%s317 + $0x140] sm:$0xff]
        %v435 = vld [vmem:[%s317 + $0x148] sm:$0xff]
        %v436 = vld [vmem:[%s317 + $0x150] sm:$0xff]
        %v437 = vld [vmem:[%s317 + $0x158] sm:$0xff]
        %v438 = vld [vmem:[%s317 + $0x160] sm:$0xff]
        %v439 = vld [vmem:[%s317 + $0x168] sm:$0xff]
        %v440 = vld [vmem:[%s317 + $0x170] sm:$0xff]
        %v441 = vld [vmem:[%s317 + $0x178] sm:$0xff]
        %v442 = vld [vmem:[%s317 + $0x180] sm:$0xff]
        %v443 = vld [vmem:[%s317 + $0x188] sm:$0xff]
        %v444 = vld [vmem:[%s317 + $0x190] sm:$0xff]
        %v445 = vld [vmem:[%s317 + $0x198] sm:$0xff]
        %v446 = vld [vmem:[%s317 + $0x1a0] sm:$0xff]
        %v447 = vld [vmem:[%s317 + $0x1a8] sm:$0xff]
        %v448 = vld [vmem:[%s317 + $0x1b0] sm:$0xff]
        %v449 = vld [vmem:[%s317 + $0x1b8] sm:$0xff]
        %v450 = vld [vmem:[%s317 + $0x1c0] sm:$0xff]
        %v451 = vld [vmem:[%s317 + $0x1c8] sm:$0xff]
        %v452 = vld [vmem:[%s317 + $0x1d0] sm:$0xff]
        %v453 = vld [vmem:[%s317 + $0x1d8] sm:$0xff]
        %v454 = vld [vmem:[%s317 + $0x1e0] sm:$0xff]
        %v455 = vld [vmem:[%s317 + $0x1e8] sm:$0xff]
        %v456 = vld [vmem:[%s317 + $0x1f0] sm:$0xff]
        %v457 = vld [vmem:[%s317 + $0x1f8] sm:$0xff]
        %v458 = vld [vmem:[%s317 + $0x200] sm:$0xff]
        %v459 = vld [vmem:[%s317 + $0x208] sm:$0xff]
        %v460 = vld [vmem:[%s317 + $0x210] sm:$0xff]
        %v461 = vld [vmem:[%s317 + $0x218] sm:$0xff]
        %v462 = vld [vmem:[%s317 + $0x220] sm:$0xff]
        %v463 = vld [vmem:[%s317 + $0x228] sm:$0xff]
        %v464 = vld [vmem:[%s317 + $0x230] sm:$0xff]
        %v465 = vld [vmem:[%s317 + $0x238] sm:$0xff]
        %v466 = vld [vmem:[%s317 + $0x240] sm:$0xff]
        %v467 = vld [vmem:[%s317 + $0x248] sm:$0xff]
        %v468 = vld [vmem:[%s317 + $0x250] sm:$0xff]
        %v469 = vld [vmem:[%s317 + $0x258] sm:$0xff]
        %v470 = vld [vmem:[%s317 + $0x260] sm:$0xff]
        %v471 = vld [vmem:[%s317 + $0x268] sm:$0xff]
        %v472 = vld [vmem:[%s317 + $0x270] sm:$0xff]
        %v473 = vld [vmem:[%s317 + $0x278] sm:$0xff]
        %v474 = vld [vmem:[%s317 + $0x280] sm:$0xff]
        %v475 = vld [vmem:[%s317 + $0x288] sm:$0xff]
        %v476 = vld [vmem:[%s317 + $0x290] sm:$0xff]
        %v477 = vld [vmem:[%s317 + $0x298] sm:$0xff]
        %v478 = vld [vmem:[%s317 + $0x2a0] sm:$0xff]
        %v479 = vld [vmem:[%s317 + $0x2a8] sm:$0xff]
        %v480 = vld [vmem:[%s317 + $0x2b0] sm:$0xff]
        %v481 = vld [vmem:[%s317 + $0x2b8] sm:$0xff]
        %v482 = vld [vmem:[%s317 + $0x2c0] sm:$0xff]
        %v483 = vld [vmem:[%s317 + $0x2c8] sm:$0xff]
        %v484 = vld [vmem:[%s317 + $0x2d0] sm:$0xff]
        %v485 = vld [vmem:[%s317 + $0x2d8] sm:$0xff]
        %v486 = vld [vmem:[%s317 + $0x2e0] sm:$0xff]
        %v487 = vld [vmem:[%s317 + $0x2e8] sm:$0xff]
        %v488 = vld [vmem:[%s317 + $0x2f0] sm:$0xff]
        %v489 = vld [vmem:[%s317 + $0x2f8] sm:$0xff]
        %v490 = vld [vmem:[%s317 + $0x300] sm:$0xff]
        %v491 = vld [vmem:[%s317 + $0x308] sm:$0xff]
        %v492 = vld [vmem:[%s317 + $0x310] sm:$0xff]
        %v493 = vld [vmem:[%s317 + $0x318] sm:$0xff]
        %v494 = vld [vmem:[%s317 + $0x320] sm:$0xff]
        %v495 = vld [vmem:[%s317 + $0x328] sm:$0xff]
        %v496 = vld [vmem:[%s317 + $0x330] sm:$0xff]
        %v497 = vld [vmem:[%s317 + $0x338] sm:$0xff]
        %v498 = vld [vmem:[%s317 + $0x340] sm:$0xff]
        %v499 = vld [vmem:[%s317 + $0x348] sm:$0xff]
        %v500 = vld [vmem:[%s317 + $0x350] sm:$0xff]
        %v501 = vld [vmem:[%s317 + $0x358] sm:$0xff]
        %v502 = vld [vmem:[%s317 + $0x360] sm:$0xff]
        %v503 = vld [vmem:[%s317 + $0x368] sm:$0xff]
        %v504 = vld [vmem:[%s317 + $0x370] sm:$0xff]
        %v505 = vld [vmem:[%s317 + $0x378] sm:$0xff]
        %v506 = vld [vmem:[%s317 + $0x380] sm:$0xff]
        %v507 = vld [vmem:[%s317 + $0x388] sm:$0xff]
        %v508 = vld [vmem:[%s317 + $0x390] sm:$0xff]
        %v509 = vld [vmem:[%s317 + $0x398] sm:$0xff]
        %v510 = vld [vmem:[%s317 + $0x3a0] sm:$0xff]
        %v511 = vld [vmem:[%s317 + $0x3a8] sm:$0xff]
        %v512 = vld [vmem:[%s317 + $0x3b0] sm:$0xff]
        %v513 = vld [vmem:[%s317 + $0x3b8] sm:$0xff]
        %v514 = vld [vmem:[%s317 + $0x3c0] sm:$0xff]
        %v515 = vld [vmem:[%s317 + $0x3c8] sm:$0xff]
        %v516 = vld [vmem:[%s317 + $0x3d0] sm:$0xff]
        %v517 = vld [vmem:[%s317 + $0x3d8] sm:$0xff]
        %v518 = vld [vmem:[%s317 + $0x3e0] sm:$0xff]
        %v519 = vld [vmem:[%s317 + $0x3e8] sm:$0xff]
        %v520 = vld [vmem:[%s317 + $0x3f0] sm:$0xff]
        %v521 = vld [vmem:[%s317 + $0x3f8] sm:$0xff]
        %v522 = vld [vmem:[%s370] sm:$0xff]
        %v524 = vperm.slane %v522, 0
        %v525 = vperm.slane %v522, 1
        %v526 = vperm.slane %v522, 2
        %v527 = vperm.slane %v522, 3
        %v528 = vperm.slane %v522, 4
        %v529 = vperm.slane %v522, 5
        %v530 = vperm.slane %v522, 6
        %v531 = vperm.slane %v522, 7
        %v668 = vunpack.c.l.b16 %v394
        %v669 = vunpack.c.h.b16 %v394
        %v670 = vunpack.c.l.b16 %v395
        %v671 = vunpack.c.h.b16 %v395
        %v672 = vunpack.c.l.b16 %v396
        %v673 = vunpack.c.h.b16 %v396
        %v674 = vunpack.c.l.b16 %v397
        %v675 = vunpack.c.h.b16 %v397
        %v676 = vunpack.c.l.b16 %v398
        %v677 = vunpack.c.h.b16 %v398
        %v678 = vunpack.c.l.b16 %v399
        %v679 = vunpack.c.h.b16 %v399
        %v680 = vunpack.c.l.b16 %v400
        %v681 = vunpack.c.h.b16 %v400
        %v682 = vunpack.c.l.b16 %v401
        %v683 = vunpack.c.h.b16 %v401
        %v684 = vunpack.c.l.b16 %v402
        %v685 = vunpack.c.h.b16 %v402
        %v686 = vunpack.c.l.b16 %v403
        %v687 = vunpack.c.h.b16 %v403
        %v688 = vunpack.c.l.b16 %v404
        %v689 = vunpack.c.h.b16 %v404
        %v690 = vunpack.c.l.b16 %v405
        %v691 = vunpack.c.h.b16 %v405
        %v692 = vunpack.c.l.b16 %v406
        %v693 = vunpack.c.h.b16 %v406
        %v694 = vunpack.c.l.b16 %v407
        %v695 = vunpack.c.h.b16 %v407
        %v696 = vunpack.c.l.b16 %v408
        %v697 = vunpack.c.h.b16 %v408
        %v698 = vunpack.c.l.b16 %v409
        %v699 = vunpack.c.h.b16 %v409
        %v700 = vunpack.c.l.b16 %v410
        %v701 = vunpack.c.h.b16 %v410
        %v702 = vunpack.c.l.b16 %v411
        %v703 = vunpack.c.h.b16 %v411
        %v704 = vunpack.c.l.b16 %v412
        %v705 = vunpack.c.h.b16 %v412
        %v706 = vunpack.c.l.b16 %v413
        %v707 = vunpack.c.h.b16 %v413
        %v708 = vunpack.c.l.b16 %v414
        %v709 = vunpack.c.h.b16 %v414
        %v710 = vunpack.c.l.b16 %v415
        %v711 = vunpack.c.h.b16 %v415
        %v712 = vunpack.c.l.b16 %v416
        %v713 = vunpack.c.h.b16 %v416
        %v714 = vunpack.c.l.b16 %v417
        %v715 = vunpack.c.h.b16 %v417
        %v716 = vunpack.c.l.b16 %v418
        %v717 = vunpack.c.h.b16 %v418
        %v718 = vunpack.c.l.b16 %v419
        %v719 = vunpack.c.h.b16 %v419
        %v720 = vunpack.c.l.b16 %v420
        %v721 = vunpack.c.h.b16 %v420
        %v722 = vunpack.c.l.b16 %v421
        %v723 = vunpack.c.h.b16 %v421
        %v724 = vunpack.c.l.b16 %v422
        %v725 = vunpack.c.h.b16 %v422
        %v726 = vunpack.c.l.b16 %v423
        %v727 = vunpack.c.h.b16 %v423
        %v728 = vunpack.c.l.b16 %v424
        %v729 = vunpack.c.h.b16 %v424
        %v730 = vunpack.c.l.b16 %v425
        %v731 = vunpack.c.h.b16 %v425
        %v732 = vunpack.c.l.b16 %v426
        %v733 = vunpack.c.h.b16 %v426
        %v734 = vunpack.c.l.b16 %v427
        %v735 = vunpack.c.h.b16 %v427
        %v736 = vunpack.c.l.b16 %v428
        %v737 = vunpack.c.h.b16 %v428
        %v738 = vunpack.c.l.b16 %v429
        %v739 = vunpack.c.h.b16 %v429
        %v740 = vunpack.c.l.b16 %v430
        %v741 = vunpack.c.h.b16 %v430
        %v742 = vunpack.c.l.b16 %v431
        %v743 = vunpack.c.h.b16 %v431
        %v744 = vunpack.c.l.b16 %v432
        %v745 = vunpack.c.h.b16 %v432
        %v746 = vunpack.c.l.b16 %v433
        %v747 = vunpack.c.h.b16 %v433
        %v748 = vunpack.c.l.b16 %v434
        %v749 = vunpack.c.h.b16 %v434
        %v750 = vunpack.c.l.b16 %v435
        %v751 = vunpack.c.h.b16 %v435
        %v752 = vunpack.c.l.b16 %v436
        %v753 = vunpack.c.h.b16 %v436
        %v754 = vunpack.c.l.b16 %v437
        %v755 = vunpack.c.h.b16 %v437
        %v756 = vunpack.c.l.b16 %v438
        %v757 = vunpack.c.h.b16 %v438
        %v758 = vunpack.c.l.b16 %v439
        %v759 = vunpack.c.h.b16 %v439
        %v760 = vunpack.c.l.b16 %v440
        %v761 = vunpack.c.h.b16 %v440
        %v762 = vunpack.c.l.b16 %v441
        %v763 = vunpack.c.h.b16 %v441
        %v764 = vunpack.c.l.b16 %v442
        %v765 = vunpack.c.h.b16 %v442
        %v766 = vunpack.c.l.b16 %v443
        %v767 = vunpack.c.h.b16 %v443
        %v768 = vunpack.c.l.b16 %v444
        %v769 = vunpack.c.h.b16 %v444
        %v770 = vunpack.c.l.b16 %v445
        %v771 = vunpack.c.h.b16 %v445
        %v772 = vunpack.c.l.b16 %v446
        %v773 = vunpack.c.h.b16 %v446
        %v774 = vunpack.c.l.b16 %v447
        %v775 = vunpack.c.h.b16 %v447
        %v776 = vunpack.c.l.b16 %v448
        %v777 = vunpack.c.h.b16 %v448
        %v778 = vunpack.c.l.b16 %v449
        %v779 = vunpack.c.h.b16 %v449
        %v780 = vunpack.c.l.b16 %v450
        %v781 = vunpack.c.h.b16 %v450
        %v782 = vunpack.c.l.b16 %v451
        %v783 = vunpack.c.h.b16 %v451
        %v784 = vunpack.c.l.b16 %v452
        %v785 = vunpack.c.h.b16 %v452
        %v786 = vunpack.c.l.b16 %v453
        %v787 = vunpack.c.h.b16 %v453
        %v788 = vunpack.c.l.b16 %v454
        %v789 = vunpack.c.h.b16 %v454
        %v790 = vunpack.c.l.b16 %v455
        %v791 = vunpack.c.h.b16 %v455
        %v792 = vunpack.c.l.b16 %v456
        %v793 = vunpack.c.h.b16 %v456
        %v794 = vunpack.c.l.b16 %v457
        %v795 = vunpack.c.h.b16 %v457
        %v796 = vunpack.c.l.b16 %v458
        %v797 = vunpack.c.h.b16 %v458
        %v798 = vunpack.c.l.b16 %v459
        %v799 = vunpack.c.h.b16 %v459
        %v800 = vunpack.c.l.b16 %v460
        %v801 = vunpack.c.h.b16 %v460
        %v802 = vunpack.c.l.b16 %v461
        %v803 = vunpack.c.h.b16 %v461
        %v804 = vunpack.c.l.b16 %v462
        %v805 = vunpack.c.h.b16 %v462
        %v806 = vunpack.c.l.b16 %v463
        %v807 = vunpack.c.h.b16 %v463
        %v808 = vunpack.c.l.b16 %v464
        %v809 = vunpack.c.h.b16 %v464
        %v810 = vunpack.c.l.b16 %v465
        %v811 = vunpack.c.h.b16 %v465
        %v812 = vunpack.c.l.b16 %v466
        %v813 = vunpack.c.h.b16 %v466
        %v814 = vunpack.c.l.b16 %v467
        %v815 = vunpack.c.h.b16 %v467
        %v816 = vunpack.c.l.b16 %v468
        %v817 = vunpack.c.h.b16 %v468
        %v818 = vunpack.c.l.b16 %v469
        %v819 = vunpack.c.h.b16 %v469
        %v820 = vunpack.c.l.b16 %v470
        %v821 = vunpack.c.h.b16 %v470
        %v822 = vunpack.c.l.b16 %v471
        %v823 = vunpack.c.h.b16 %v471
        %v824 = vunpack.c.l.b16 %v472
        %v825 = vunpack.c.h.b16 %v472
        %v826 = vunpack.c.l.b16 %v473
        %v827 = vunpack.c.h.b16 %v473
        %v828 = vunpack.c.l.b16 %v474
        %v829 = vunpack.c.h.b16 %v474
        %v830 = vunpack.c.l.b16 %v475
        %v831 = vunpack.c.h.b16 %v475
        %v832 = vunpack.c.l.b16 %v476
        %v833 = vunpack.c.h.b16 %v476
        %v834 = vunpack.c.l.b16 %v477
        %v835 = vunpack.c.h.b16 %v477
        %v836 = vunpack.c.l.b16 %v478
        %v837 = vunpack.c.h.b16 %v478
        %v838 = vunpack.c.l.b16 %v479
        %v839 = vunpack.c.h.b16 %v479
        %v840 = vunpack.c.l.b16 %v480
        %v841 = vunpack.c.h.b16 %v480
        %v842 = vunpack.c.l.b16 %v481
        %v843 = vunpack.c.h.b16 %v481
        %v844 = vunpack.c.l.b16 %v482
        %v845 = vunpack.c.h.b16 %v482
        %v846 = vunpack.c.l.b16 %v483
        %v847 = vunpack.c.h.b16 %v483
        %v848 = vunpack.c.l.b16 %v484
        %v849 = vunpack.c.h.b16 %v484
        %v850 = vunpack.c.l.b16 %v485
        %v851 = vunpack.c.h.b16 %v485
        %v852 = vunpack.c.l.b16 %v486
        %v853 = vunpack.c.h.b16 %v486
        %v854 = vunpack.c.l.b16 %v487
        %v855 = vunpack.c.h.b16 %v487
        %v856 = vunpack.c.l.b16 %v488
        %v857 = vunpack.c.h.b16 %v488
        %v858 = vunpack.c.l.b16 %v489
        %v859 = vunpack.c.h.b16 %v489
        %v860 = vunpack.c.l.b16 %v490
        %v861 = vunpack.c.h.b16 %v490
        %v862 = vunpack.c.l.b16 %v491
        %v863 = vunpack.c.h.b16 %v491
        %v864 = vunpack.c.l.b16 %v492
        %v865 = vunpack.c.h.b16 %v492
        %v866 = vunpack.c.l.b16 %v493
        %v867 = vunpack.c.h.b16 %v493
        %v868 = vunpack.c.l.b16 %v494
        %v869 = vunpack.c.h.b16 %v494
        %v870 = vunpack.c.l.b16 %v495
        %v871 = vunpack.c.h.b16 %v495
        %v872 = vunpack.c.l.b16 %v496
        %v873 = vunpack.c.h.b16 %v496
        %v874 = vunpack.c.l.b16 %v497
        %v875 = vunpack.c.h.b16 %v497
        %v876 = vunpack.c.l.b16 %v498
        %v877 = vunpack.c.h.b16 %v498
        %v878 = vunpack.c.l.b16 %v499
        %v879 = vunpack.c.h.b16 %v499
        %v880 = vunpack.c.l.b16 %v500
        %v881 = vunpack.c.h.b16 %v500
        %v882 = vunpack.c.l.b16 %v501
        %v883 = vunpack.c.h.b16 %v501
        %v884 = vunpack.c.l.b16 %v502
        %v885 = vunpack.c.h.b16 %v502
        %v886 = vunpack.c.l.b16 %v503
        %v887 = vunpack.c.h.b16 %v503
        %v888 = vunpack.c.l.b16 %v504
        %v889 = vunpack.c.h.b16 %v504
        %v890 = vunpack.c.l.b16 %v505
        %v891 = vunpack.c.h.b16 %v505
        %v892 = vunpack.c.l.b16 %v506
        %v893 = vunpack.c.h.b16 %v506
        %v894 = vunpack.c.l.b16 %v507
        %v895 = vunpack.c.h.b16 %v507
        %v896 = vunpack.c.l.b16 %v508
        %v897 = vunpack.c.h.b16 %v508
        %v898 = vunpack.c.l.b16 %v509
        %v899 = vunpack.c.h.b16 %v509
        %v900 = vunpack.c.l.b16 %v510
        %v901 = vunpack.c.h.b16 %v510
        %v902 = vunpack.c.l.b16 %v511
        %v903 = vunpack.c.h.b16 %v511
        %v904 = vunpack.c.l.b16 %v512
        %v905 = vunpack.c.h.b16 %v512
        %v906 = vunpack.c.l.b16 %v513
        %v907 = vunpack.c.h.b16 %v513
        %v908 = vunpack.c.l.b16 %v514
        %v909 = vunpack.c.h.b16 %v514
        %v910 = vunpack.c.l.b16 %v515
        %v911 = vunpack.c.h.b16 %v515
        %v912 = vunpack.c.l.b16 %v516
        %v913 = vunpack.c.h.b16 %v516
        %v914 = vunpack.c.l.b16 %v517
        %v915 = vunpack.c.h.b16 %v517
        %v916 = vunpack.c.l.b16 %v518
        %v917 = vunpack.c.h.b16 %v518
        %v918 = vunpack.c.l.b16 %v519
        %v919 = vunpack.c.h.b16 %v519
        %v920 = vunpack.c.l.b16 %v520
        %v921 = vunpack.c.h.b16 %v520
        %v922 = vunpack.c.l.b16 %v521
        %v923 = vunpack.c.h.b16 %v521
        %v924 = vpack.c.b16 %v676, %v668
        %v925 = vpack.c.b16 %v677, %v669
        %v926 = vpack.c.b16 %v678, %v670
        %v927 = vpack.c.b16 %v679, %v671
        %v928 = vpack.c.b16 %v680, %v672
        %v929 = vpack.c.b16 %v681, %v673
        %v930 = vpack.c.b16 %v682, %v674
        %v931 = vpack.c.b16 %v683, %v675
        %v932 = vpack.c.b16 %v692, %v684
        %v933 = vpack.c.b16 %v693, %v685
        %v934 = vpack.c.b16 %v694, %v686
        %v935 = vpack.c.b16 %v695, %v687
        %v936 = vpack.c.b16 %v696, %v688
        %v937 = vpack.c.b16 %v697, %v689
        %v938 = vpack.c.b16 %v698, %v690
        %v939 = vpack.c.b16 %v699, %v691
        %v940 = vpack.c.b16 %v708, %v700
        %v941 = vpack.c.b16 %v709, %v701
        %v942 = vpack.c.b16 %v710, %v702
        %v943 = vpack.c.b16 %v711, %v703
        %v944 = vpack.c.b16 %v712, %v704
        %v945 = vpack.c.b16 %v713, %v705
        %v946 = vpack.c.b16 %v714, %v706
        %v947 = vpack.c.b16 %v715, %v707
        %v948 = vpack.c.b16 %v724, %v716
        %v949 = vpack.c.b16 %v725, %v717
        %v950 = vpack.c.b16 %v726, %v718
        %v951 = vpack.c.b16 %v727, %v719
        %v952 = vpack.c.b16 %v728, %v720
        %v953 = vpack.c.b16 %v729, %v721
        %v954 = vpack.c.b16 %v730, %v722
        %v955 = vpack.c.b16 %v731, %v723
        %v956 = vpack.c.b16 %v740, %v732
        %v957 = vpack.c.b16 %v741, %v733
        %v958 = vpack.c.b16 %v742, %v734
        %v959 = vpack.c.b16 %v743, %v735
        %v960 = vpack.c.b16 %v744, %v736
        %v961 = vpack.c.b16 %v745, %v737
        %v962 = vpack.c.b16 %v746, %v738
        %v963 = vpack.c.b16 %v747, %v739
        %v964 = vpack.c.b16 %v756, %v748
        %v965 = vpack.c.b16 %v757, %v749
        %v966 = vpack.c.b16 %v758, %v750
        %v967 = vpack.c.b16 %v759, %v751
        %v968 = vpack.c.b16 %v760, %v752
        %v969 = vpack.c.b16 %v761, %v753
        %v970 = vpack.c.b16 %v762, %v754
        %v971 = vpack.c.b16 %v763, %v755
        %v972 = vpack.c.b16 %v772, %v764
        %v973 = vpack.c.b16 %v773, %v765
        %v974 = vpack.c.b16 %v774, %v766
        %v975 = vpack.c.b16 %v775, %v767
        %v976 = vpack.c.b16 %v776, %v768
        %v977 = vpack.c.b16 %v777, %v769
        %v978 = vpack.c.b16 %v778, %v770
        %v979 = vpack.c.b16 %v779, %v771
        %v980 = vpack.c.b16 %v788, %v780
        %v981 = vpack.c.b16 %v789, %v781
        %v982 = vpack.c.b16 %v790, %v782
        %v983 = vpack.c.b16 %v791, %v783
        %v984 = vpack.c.b16 %v792, %v784
        %v985 = vpack.c.b16 %v793, %v785
        %v986 = vpack.c.b16 %v794, %v786
        %v987 = vpack.c.b16 %v795, %v787
        %v988 = vpack.c.b16 %v804, %v796
        %v989 = vpack.c.b16 %v805, %v797
        %v990 = vpack.c.b16 %v806, %v798
        %v991 = vpack.c.b16 %v807, %v799
        %v992 = vpack.c.b16 %v808, %v800
        %v993 = vpack.c.b16 %v809, %v801
        %v994 = vpack.c.b16 %v810, %v802
        %v995 = vpack.c.b16 %v811, %v803
        %v996 = vpack.c.b16 %v820, %v812
        %v997 = vpack.c.b16 %v821, %v813
        %v998 = vpack.c.b16 %v822, %v814
        %v999 = vpack.c.b16 %v823, %v815
        %v1000 = vpack.c.b16 %v824, %v816
        %v1001 = vpack.c.b16 %v825, %v817
        %v1002 = vpack.c.b16 %v826, %v818
        %v1003 = vpack.c.b16 %v827, %v819
        %v1004 = vpack.c.b16 %v836, %v828
        %v1005 = vpack.c.b16 %v837, %v829
        %v1006 = vpack.c.b16 %v838, %v830
        %v1007 = vpack.c.b16 %v839, %v831
        %v1008 = vpack.c.b16 %v840, %v832
        %v1009 = vpack.c.b16 %v841, %v833
        %v1010 = vpack.c.b16 %v842, %v834
        %v1011 = vpack.c.b16 %v843, %v835
        %v1012 = vpack.c.b16 %v852, %v844
        %v1013 = vpack.c.b16 %v853, %v845
        %v1014 = vpack.c.b16 %v854, %v846
        %v1015 = vpack.c.b16 %v855, %v847
        %v1016 = vpack.c.b16 %v856, %v848
        %v1017 = vpack.c.b16 %v857, %v849
        %v1018 = vpack.c.b16 %v858, %v850
        %v1019 = vpack.c.b16 %v859, %v851
        %v1020 = vpack.c.b16 %v868, %v860
        %v1021 = vpack.c.b16 %v869, %v861
        %v1022 = vpack.c.b16 %v870, %v862
        %v1023 = vpack.c.b16 %v871, %v863
        %v1024 = vpack.c.b16 %v872, %v864
        %v1025 = vpack.c.b16 %v873, %v865
        %v1026 = vpack.c.b16 %v874, %v866
        %v1027 = vpack.c.b16 %v875, %v867
        %v1028 = vpack.c.b16 %v884, %v876
        %v1029 = vpack.c.b16 %v885, %v877
        %v1030 = vpack.c.b16 %v886, %v878
        %v1031 = vpack.c.b16 %v887, %v879
        %v1032 = vpack.c.b16 %v888, %v880
        %v1033 = vpack.c.b16 %v889, %v881
        %v1034 = vpack.c.b16 %v890, %v882
        %v1035 = vpack.c.b16 %v891, %v883
        %v1036 = vpack.c.b16 %v900, %v892
        %v1037 = vpack.c.b16 %v901, %v893
        %v1038 = vpack.c.b16 %v902, %v894
        %v1039 = vpack.c.b16 %v903, %v895
        %v1040 = vpack.c.b16 %v904, %v896
        %v1041 = vpack.c.b16 %v905, %v897
        %v1042 = vpack.c.b16 %v906, %v898
        %v1043 = vpack.c.b16 %v907, %v899
        %v1044 = vpack.c.b16 %v916, %v908
        %v1045 = vpack.c.b16 %v917, %v909
        %v1046 = vpack.c.b16 %v918, %v910
        %v1047 = vpack.c.b16 %v919, %v911
        %v1048 = vpack.c.b16 %v920, %v912
        %v1049 = vpack.c.b16 %v921, %v913
        %v1050 = vpack.c.b16 %v922, %v914
        %v1051 = vpack.c.b16 %v923, %v915
        %1180 = vmatpush.bf16.msra.mxu0 %v980
        %1181 = vmatpush.bf16.msra.mxu0 %v972
        %1182 = vmatpush.bf16.msra.mxu0 %v964
        %1183 = vmatpush.bf16.msra.mxu0 %v956
        %1184 = vmatpush.bf16.msra.mxu0 %v948
        %1185 = vmatpush.bf16.msra.mxu0 %v940
        %1186 = vmatpush.bf16.msra.mxu0 %v932
        %1187 = vmatpush.bf16.msra.mxu0 %v924
        %1188 = vmatmul.bf16.gmra.mxu0 %v392
        %v1189 = vpop.f32.mrf.mxu0
        %v1190 = vadd.f32 %v524, %v1189
        %v1191 = vpop.f32.mrf.mxu0
        %1192 = vdwg.mxu0
        %1193 = vmatpush.bf16.msra.mxu0 %v1044
        %1194 = vmatpush.bf16.msra.mxu0 %v1036
        %1195 = vmatpush.bf16.msra.mxu0 %v1028
        %1196 = vmatpush.bf16.msra.mxu0 %v1020
        %1197 = vmatpush.bf16.msra.mxu0 %v1012
        %1198 = vmatpush.bf16.msra.mxu0 %v1004
        %1199 = vmatpush.bf16.msra.mxu0 %v996
        %1200 = vmatpush.bf16.msra.mxu0 %v988
        %1201 = vmatmul.bf16.gmra.mxu0 %v393
        %v1202 = vpop.f32.mrf.mxu0
        %v1203 = vadd.f32 %v1190, %v1202
        %v1204 = vpop.f32.mrf.mxu0
        %1205 = vdwg.mxu0
        %1206 = vmatpush.bf16.msra.mxu0 %v981
        %1207 = vmatpush.bf16.msra.mxu0 %v973
        %1208 = vmatpush.bf16.msra.mxu0 %v965
        %1209 = vmatpush.bf16.msra.mxu0 %v957
        %1210 = vmatpush.bf16.msra.mxu0 %v949
        %1211 = vmatpush.bf16.msra.mxu0 %v941
        %1212 = vmatpush.bf16.msra.mxu0 %v933
        %1213 = vmatpush.bf16.msra.mxu0 %v925
        %1214 = vmatmul.bf16.gmra.mxu0 %v392
        %v1215 = vpop.f32.mrf.mxu0
        %v1216 = vadd.f32 %v525, %v1215
        %v1217 = vpop.f32.mrf.mxu0
        %1218 = vdwg.mxu0
        %1219 = vmatpush.bf16.msra.mxu0 %v1045
        %1220 = vmatpush.bf16.msra.mxu0 %v1037
        %1221 = vmatpush.bf16.msra.mxu0 %v1029
        %1222 = vmatpush.bf16.msra.mxu0 %v1021
        %1223 = vmatpush.bf16.msra.mxu0 %v1013
        %1224 = vmatpush.bf16.msra.mxu0 %v1005
        %1225 = vmatpush.bf16.msra.mxu0 %v997
        %1226 = vmatpush.bf16.msra.mxu0 %v989
        %1227 = vmatmul.bf16.gmra.mxu0 %v393
        %v1228 = vpop.f32.mrf.mxu0
        %v1229 = vadd.f32 %v1216, %v1228
        %v1230 = vpop.f32.mrf.mxu0
        %1231 = vdwg.mxu0
        %1232 = vmatpush.bf16.msra.mxu0 %v982
        %1233 = vmatpush.bf16.msra.mxu0 %v974
        %1234 = vmatpush.bf16.msra.mxu0 %v966
        %1235 = vmatpush.bf16.msra.mxu0 %v958
        %1236 = vmatpush.bf16.msra.mxu0 %v950
        %1237 = vmatpush.bf16.msra.mxu0 %v942
        %1238 = vmatpush.bf16.msra.mxu0 %v934
        %1239 = vmatpush.bf16.msra.mxu0 %v926
        %1240 = vmatmul.bf16.gmra.mxu0 %v392
        %v1241 = vpop.f32.mrf.mxu0
        %v1242 = vadd.f32 %v526, %v1241
        %v1243 = vpop.f32.mrf.mxu0
        %1244 = vdwg.mxu0
        %1245 = vmatpush.bf16.msra.mxu0 %v1046
        %1246 = vmatpush.bf16.msra.mxu0 %v1038
        %1247 = vmatpush.bf16.msra.mxu0 %v1030
        %1248 = vmatpush.bf16.msra.mxu0 %v1022
        %1249 = vmatpush.bf16.msra.mxu0 %v1014
        %1250 = vmatpush.bf16.msra.mxu0 %v1006
        %1251 = vmatpush.bf16.msra.mxu0 %v998
        %1252 = vmatpush.bf16.msra.mxu0 %v990
        %1253 = vmatmul.bf16.gmra.mxu0 %v393
        %v1254 = vpop.f32.mrf.mxu0
        %v1255 = vadd.f32 %v1242, %v1254
        %v1256 = vpop.f32.mrf.mxu0
        %1257 = vdwg.mxu0
        %1258 = vmatpush.bf16.msra.mxu0 %v983
        %1259 = vmatpush.bf16.msra.mxu0 %v975
        %1260 = vmatpush.bf16.msra.mxu0 %v967
        %1261 = vmatpush.bf16.msra.mxu0 %v959
        %1262 = vmatpush.bf16.msra.mxu0 %v951
        %1263 = vmatpush.bf16.msra.mxu0 %v943
        %1264 = vmatpush.bf16.msra.mxu0 %v935
        %1265 = vmatpush.bf16.msra.mxu0 %v927
        %1266 = vmatmul.bf16.gmra.mxu0 %v392
        %v1267 = vpop.f32.mrf.mxu0
        %v1268 = vadd.f32 %v527, %v1267
        %v1269 = vpop.f32.mrf.mxu0
        %1270 = vdwg.mxu0
        %1271 = vmatpush.bf16.msra.mxu0 %v1047
        %1272 = vmatpush.bf16.msra.mxu0 %v1039
        %1273 = vmatpush.bf16.msra.mxu0 %v1031
        %1274 = vmatpush.bf16.msra.mxu0 %v1023
        %1275 = vmatpush.bf16.msra.mxu0 %v1015
        %1276 = vmatpush.bf16.msra.mxu0 %v1007
        %1277 = vmatpush.bf16.msra.mxu0 %v999
        %1278 = vmatpush.bf16.msra.mxu0 %v991
        %1279 = vmatmul.bf16.gmra.mxu0 %v393
        %v1280 = vpop.f32.mrf.mxu0
        %v1281 = vadd.f32 %v1268, %v1280
        %v1282 = vpop.f32.mrf.mxu0
        %1283 = vdwg.mxu0
        %1284 = vmatpush.bf16.msra.mxu0 %v984
        %1285 = vmatpush.bf16.msra.mxu0 %v976
        %1286 = vmatpush.bf16.msra.mxu0 %v968
        %1287 = vmatpush.bf16.msra.mxu0 %v960
        %1288 = vmatpush.bf16.msra.mxu0 %v952
        %1289 = vmatpush.bf16.msra.mxu0 %v944
        %1290 = vmatpush.bf16.msra.mxu0 %v936
        %1291 = vmatpush.bf16.msra.mxu0 %v928
        %1292 = vmatmul.bf16.gmra.mxu0 %v392
        %v1293 = vpop.f32.mrf.mxu0
        %v1294 = vadd.f32 %v528, %v1293
        %v1295 = vpop.f32.mrf.mxu0
        %1296 = vdwg.mxu0
        %1297 = vmatpush.bf16.msra.mxu0 %v1048
        %1298 = vmatpush.bf16.msra.mxu0 %v1040
        %1299 = vmatpush.bf16.msra.mxu0 %v1032
        %1300 = vmatpush.bf16.msra.mxu0 %v1024
        %1301 = vmatpush.bf16.msra.mxu0 %v1016
        %1302 = vmatpush.bf16.msra.mxu0 %v1008
        %1303 = vmatpush.bf16.msra.mxu0 %v1000
        %1304 = vmatpush.bf16.msra.mxu0 %v992
        %1305 = vmatmul.bf16.gmra.mxu0 %v393
        %v1306 = vpop.f32.mrf.mxu0
        %v1307 = vadd.f32 %v1294, %v1306
        %v1308 = vpop.f32.mrf.mxu0
        %1309 = vdwg.mxu0
        %1310 = vmatpush.bf16.msra.mxu0 %v985
        %1311 = vmatpush.bf16.msra.mxu0 %v977
        %1312 = vmatpush.bf16.msra.mxu0 %v969
        %1313 = vmatpush.bf16.msra.mxu0 %v961
        %1314 = vmatpush.bf16.msra.mxu0 %v953
        %1315 = vmatpush.bf16.msra.mxu0 %v945
        %1316 = vmatpush.bf16.msra.mxu0 %v937
        %1317 = vmatpush.bf16.msra.mxu0 %v929
        %1318 = vmatmul.bf16.gmra.mxu0 %v392
        %v1319 = vpop.f32.mrf.mxu0
        %v1320 = vadd.f32 %v529, %v1319
        %v1321 = vpop.f32.mrf.mxu0
        %1322 = vdwg.mxu0
        %1323 = vmatpush.bf16.msra.mxu0 %v1049
        %1324 = vmatpush.bf16.msra.mxu0 %v1041
        %1325 = vmatpush.bf16.msra.mxu0 %v1033
        %1326 = vmatpush.bf16.msra.mxu0 %v1025
        %1327 = vmatpush.bf16.msra.mxu0 %v1017
        %1328 = vmatpush.bf16.msra.mxu0 %v1009
        %1329 = vmatpush.bf16.msra.mxu0 %v1001
        %1330 = vmatpush.bf16.msra.mxu0 %v993
        %1331 = vmatmul.bf16.gmra.mxu0 %v393
        %v1332 = vpop.f32.mrf.mxu0
        %v1333 = vadd.f32 %v1320, %v1332
        %v1334 = vpop.f32.mrf.mxu0
        %1335 = vdwg.mxu0
        %1336 = vmatpush.bf16.msra.mxu0 %v986
        %1337 = vmatpush.bf16.msra.mxu0 %v978
        %1338 = vmatpush.bf16.msra.mxu0 %v970
        %1339 = vmatpush.bf16.msra.mxu0 %v962
        %1340 = vmatpush.bf16.msra.mxu0 %v954
        %1341 = vmatpush.bf16.msra.mxu0 %v946
        %1342 = vmatpush.bf16.msra.mxu0 %v938
        %1343 = vmatpush.bf16.msra.mxu0 %v930
        %1344 = vmatmul.bf16.gmra.mxu0 %v392
        %v1345 = vpop.f32.mrf.mxu0
        %v1346 = vadd.f32 %v530, %v1345
        %v1347 = vpop.f32.mrf.mxu0
        %1348 = vdwg.mxu0
        %1349 = vmatpush.bf16.msra.mxu0 %v1050
        %1350 = vmatpush.bf16.msra.mxu0 %v1042
        %1351 = vmatpush.bf16.msra.mxu0 %v1034
        %1352 = vmatpush.bf16.msra.mxu0 %v1026
        %1353 = vmatpush.bf16.msra.mxu0 %v1018
        %1354 = vmatpush.bf16.msra.mxu0 %v1010
        %1355 = vmatpush.bf16.msra.mxu0 %v1002
        %1356 = vmatpush.bf16.msra.mxu0 %v994
        %1357 = vmatmul.bf16.gmra.mxu0 %v393
        %v1358 = vpop.f32.mrf.mxu0
        %v1359 = vadd.f32 %v1346, %v1358
        %v1360 = vpop.f32.mrf.mxu0
        %1361 = vdwg.mxu0
        %1362 = vmatpush.bf16.msra.mxu0 %v987
        %1363 = vmatpush.bf16.msra.mxu0 %v979
        %1364 = vmatpush.bf16.msra.mxu0 %v971
        %1365 = vmatpush.bf16.msra.mxu0 %v963
        %1366 = vmatpush.bf16.msra.mxu0 %v955
        %1367 = vmatpush.bf16.msra.mxu0 %v947
        %1368 = vmatpush.bf16.msra.mxu0 %v939
        %1369 = vmatpush.bf16.msra.mxu0 %v931
        %1370 = vmatmul.bf16.gmra.mxu0 %v392
        %v1371 = vpop.f32.mrf.mxu0
        %v1372 = vadd.f32 %v531, %v1371
        %v1373 = vpop.f32.mrf.mxu0
        %1374 = vdwg.mxu0
        %1375 = vmatpush.bf16.msra.mxu0 %v1051
        %1376 = vmatpush.bf16.msra.mxu0 %v1043
        %1377 = vmatpush.bf16.msra.mxu0 %v1035
        %1378 = vmatpush.bf16.msra.mxu0 %v1027
        %1379 = vmatpush.bf16.msra.mxu0 %v1019
        %1380 = vmatpush.bf16.msra.mxu0 %v1011
        %1381 = vmatpush.bf16.msra.mxu0 %v1003
        %1382 = vmatpush.bf16.msra.mxu0 %v995
        %1383 = vmatmul.bf16.gmra.mxu0 %v393
        %v1384 = vpop.f32.mrf.mxu0
        %v1385 = vadd.f32 %v1372, %v1384
        %v1386 = vpop.f32.mrf.mxu0
        %1387 = vdwg.mxu0
        %v1388 = vxor.u32 %v1203, 2147483648
        %v1389 = vxor.u32 %v1229, 2147483648
        %v1390 = vxor.u32 %v1255, 2147483648
        %v1391 = vxor.u32 %v1281, 2147483648
        %v1392 = vxor.u32 %v1307, 2147483648
        %v1393 = vxor.u32 %v1333, 2147483648
        %v1394 = vxor.u32 %v1359, 2147483648
        %v1395 = vxor.u32 %v1385, 2147483648
        %v1396 = vmul.f32 %v1388, 1.442695
        %v1397 = vpow.pop %v1396
        %v1398 = vmul.f32 %v1389, 1.442695
        %v1399 = vpow.pop %v1398
        %v1400 = vmul.f32 %v1390, 1.442695
        %v1401 = vpow.pop %v1400
        %v1402 = vmul.f32 %v1391, 1.442695
        %v1403 = vpow.pop %v1402
        %v1404 = vmul.f32 %v1392, 1.442695
        %v1405 = vpow.pop %v1404
        %v1406 = vmul.f32 %v1393, 1.442695
        %v1407 = vpow.pop %v1406
        %v1408 = vmul.f32 %v1394, 1.442695
        %v1409 = vpow.pop %v1408
        %v1410 = vmul.f32 %v1395, 1.442695
        %v1411 = vpow.pop %v1410
        %v1412 = vadd.f32 %v1397, 1.0
        %v1413 = vadd.f32 %v1399, 1.0
        %v1414 = vadd.f32 %v1401, 1.0
        %v1415 = vadd.f32 %v1403, 1.0
        %v1416 = vadd.f32 %v1405, 1.0
        %v1417 = vadd.f32 %v1407, 1.0
        %v1418 = vadd.f32 %v1409, 1.0
        %v1419 = vadd.f32 %v1411, 1.0
        %v1420 = vrcp.pop %v1412
        %v1421 = vmul.f32 %v1412, %v1420
        %v1422 = vsub.f32 1.0, %v1421
        %v1423 = vmul.f32 %v1420, %v1422
        %v1424 = vadd.f32 %v1420, %v1423
        %vm1425 = vweird.f32 %v1412
        %vm1426 = vweird.f32 %v1420
        %vm1427 = vmor %vm1425, %vm1426
        %v1428 = vsel %vm1427, %v1420, %v1424
        %v1429 = vand.u32 2147483647, %v1412
        %vm1430 = vcmp.eq.f32.partialorder %v1429, 8.507059e+37
        %v1431 = vand.u32 %v1412, 2147483648
        %v1432 = vor.u32 1.1754944e-38, %v1431
        %v1433 = vsel %vm1430, %v1432, %v1428
        %v1434 = vmul.f32 1.0, %v1433
        %v1435 = vrcp.pop %v1413
        %v1436 = vmul.f32 %v1413, %v1435
        %v1437 = vsub.f32 1.0, %v1436
        %v1438 = vmul.f32 %v1435, %v1437
        %v1439 = vadd.f32 %v1435, %v1438
        %vm1440 = vweird.f32 %v1413
        %vm1441 = vweird.f32 %v1435
        %vm1442 = vmor %vm1440, %vm1441
        %v1443 = vsel %vm1442, %v1435, %v1439
        %v1444 = vand.u32 2147483647, %v1413
        %vm1445 = vcmp.eq.f32.partialorder %v1444, 8.507059e+37
        %v1446 = vand.u32 %v1413, 2147483648
        %v1447 = vor.u32 1.1754944e-38, %v1446
        %v1448 = vsel %vm1445, %v1447, %v1443
        %v1449 = vmul.f32 1.0, %v1448
        %v1450 = vrcp.pop %v1414
        %v1451 = vmul.f32 %v1414, %v1450
        %v1452 = vsub.f32 1.0, %v1451
        %v1453 = vmul.f32 %v1450, %v1452
        %v1454 = vadd.f32 %v1450, %v1453
        %vm1455 = vweird.f32 %v1414
        %vm1456 = vweird.f32 %v1450
        %vm1457 = vmor %vm1455, %vm1456
        %v1458 = vsel %vm1457, %v1450, %v1454
        %v1459 = vand.u32 2147483647, %v1414
        %vm1460 = vcmp.eq.f32.partialorder %v1459, 8.507059e+37
        %v1461 = vand.u32 %v1414, 2147483648
        %v1462 = vor.u32 1.1754944e-38, %v1461
        %v1463 = vsel %vm1460, %v1462, %v1458
        %v1464 = vmul.f32 1.0, %v1463
        %v1465 = vrcp.pop %v1415
        %v1466 = vmul.f32 %v1415, %v1465
        %v1467 = vsub.f32 1.0, %v1466
        %v1468 = vmul.f32 %v1465, %v1467
        %v1469 = vadd.f32 %v1465, %v1468
        %vm1470 = vweird.f32 %v1415
        %vm1471 = vweird.f32 %v1465
        %vm1472 = vmor %vm1470, %vm1471
        %v1473 = vsel %vm1472, %v1465, %v1469
        %v1474 = vand.u32 2147483647, %v1415
        %vm1475 = vcmp.eq.f32.partialorder %v1474, 8.507059e+37
        %v1476 = vand.u32 %v1415, 2147483648
        %v1477 = vor.u32 1.1754944e-38, %v1476
        %v1478 = vsel %vm1475, %v1477, %v1473
        %v1479 = vmul.f32 1.0, %v1478
        %v1480 = vrcp.pop %v1416
        %v1481 = vmul.f32 %v1416, %v1480
        %v1482 = vsub.f32 1.0, %v1481
        %v1483 = vmul.f32 %v1480, %v1482
        %v1484 = vadd.f32 %v1480, %v1483
        %vm1485 = vweird.f32 %v1416
        %vm1486 = vweird.f32 %v1480
        %vm1487 = vmor %vm1485, %vm1486
        %v1488 = vsel %vm1487, %v1480, %v1484
        %v1489 = vand.u32 2147483647, %v1416
        %vm1490 = vcmp.eq.f32.partialorder %v1489, 8.507059e+37
        %v1491 = vand.u32 %v1416, 2147483648
        %v1492 = vor.u32 1.1754944e-38, %v1491
        %v1493 = vsel %vm1490, %v1492, %v1488
        %v1494 = vmul.f32 1.0, %v1493
        %v1495 = vrcp.pop %v1417
        %v1496 = vmul.f32 %v1417, %v1495
        %v1497 = vsub.f32 1.0, %v1496
        %v1498 = vmul.f32 %v1495, %v1497
        %v1499 = vadd.f32 %v1495, %v1498
        %vm1500 = vweird.f32 %v1417
        %vm1501 = vweird.f32 %v1495
        %vm1502 = vmor %vm1500, %vm1501
        %v1503 = vsel %vm1502, %v1495, %v1499
        %v1504 = vand.u32 2147483647, %v1417
        %vm1505 = vcmp.eq.f32.partialorder %v1504, 8.507059e+37
        %v1506 = vand.u32 %v1417, 2147483648
        %v1507 = vor.u32 1.1754944e-38, %v1506
        %v1508 = vsel %vm1505, %v1507, %v1503
        %v1509 = vmul.f32 1.0, %v1508
        %v1510 = vrcp.pop %v1418
        %v1511 = vmul.f32 %v1418, %v1510
        %v1512 = vsub.f32 1.0, %v1511
        %v1513 = vmul.f32 %v1510, %v1512
        %v1514 = vadd.f32 %v1510, %v1513
        %vm1515 = vweird.f32 %v1418
        %vm1516 = vweird.f32 %v1510
        %vm1517 = vmor %vm1515, %vm1516
        %v1518 = vsel %vm1517, %v1510, %v1514
        %v1519 = vand.u32 2147483647, %v1418
        %vm1520 = vcmp.eq.f32.partialorder %v1519, 8.507059e+37
        %v1521 = vand.u32 %v1418, 2147483648
        %v1522 = vor.u32 1.1754944e-38, %v1521
        %v1523 = vsel %vm1520, %v1522, %v1518
        %v1524 = vmul.f32 1.0, %v1523
        %v1525 = vrcp.pop %v1419
        %v1526 = vmul.f32 %v1419, %v1525
        %v1527 = vsub.f32 1.0, %v1526
        %v1528 = vmul.f32 %v1525, %v1527
        %v1529 = vadd.f32 %v1525, %v1528
        %vm1530 = vweird.f32 %v1419
        %vm1531 = vweird.f32 %v1525
        %vm1532 = vmor %vm1530, %vm1531
        %v1533 = vsel %vm1532, %v1525, %v1529
        %v1534 = vand.u32 2147483647, %v1419
        %vm1535 = vcmp.eq.f32.partialorder %v1534, 8.507059e+37
        %v1536 = vand.u32 %v1419, 2147483648
        %v1537 = vor.u32 1.1754944e-38, %v1536
        %v1538 = vsel %vm1535, %v1537, %v1533
        %v1539 = vmul.f32 1.0, %v1538
        %v1540 = vld [vmem:[%s364] sm:$0xff]
        %v1541 = vld [vmem:[%s364 + $0x8] sm:$0xff]
        %v1550 = vrot.slane %v1449, 6
        %v1551 = vrot.slane %v1464, 4
        %v1552 = vrot.slane %v1479, 2
        %v1553 = vrot.slane %v1509, 6
        %v1554 = vrot.slane %v1524, 4
        %v1555 = vrot.slane %v1539, 2
        %vm1556 = vcmask 1041408
        %v1557 = vsel %vm1556, %v1434, %v1550
        %vm1558 = vcmask 1045508
        %v1559 = vsel %vm1558, %v1551, %v1552
        %vm1560 = vcmask 1043456
        %v1561 = vsel %vm1560, %v1557, %v1559
        %v1562 = vsel %vm1556, %v1494, %v1553
        %v1563 = vsel %vm1558, %v1554, %v1555
        %v1564 = vsel %vm1560, %v1562, %v1563
        %v1567 = vmul.f32 %v1540, %v1561
        %v1568 = vmul.f32 %v1541, %v1564
        %v1569 = vld [vmem:[#allocation2] sm:$0x3]
        %1572 = vst [vmem:[#allocation1] ss:$4 sm:$0xff] %v1567
        %s1573 = scalar_lea.vmem [#allocation1], 32
        %1574 = vst [vmem:[%s1573] ss:$4 sm:$0xff] %v1568
        %v1575 = vld.sshfl [vmem:[#allocation1] sm:$0xff pattern:$0x73625140]
        %v1576 = vld.sshfl [vmem:[#allocation1 + $0x8] sm:$0xff pattern:$0x73625140]
        %v1577 = vld.sshfl [vmem:[#allocation1 + $0x10] sm:$0xff pattern:$0x73625140]
        %v1578 = vld.sshfl [vmem:[#allocation1 + $0x18] sm:$0xff pattern:$0x73625140]
        %v1579 = vld.sshfl [vmem:[#allocation1 + $0x20] sm:$0xff pattern:$0x73625140]
        %v1580 = vld.sshfl [vmem:[#allocation1 + $0x28] sm:$0xff pattern:$0x73625140]
        %v1581 = vld.sshfl [vmem:[#allocation1 + $0x30] sm:$0xff pattern:$0x73625140]
        %v1582 = vld.sshfl [vmem:[#allocation1 + $0x38] sm:$0xff pattern:$0x73625140]
        %v1591 = vpack.c.bf16 %v1575, %v1575
        %v1592 = vpack.c.bf16 %v1576, %v1576
        %v1593 = vpack.c.bf16 %v1577, %v1577
        %v1594 = vpack.c.bf16 %v1578, %v1578
        %v1595 = vpack.c.bf16 %v1579, %v1579
        %v1596 = vpack.c.bf16 %v1580, %v1580
        %v1597 = vpack.c.bf16 %v1581, %v1581
        %v1598 = vpack.c.bf16 %v1582, %v1582
        %v1599 = vld [vmem:[%s376] sm:$0xf]
        %v1600 = vld [vmem:[%s376 + $0x4] sm:$0xf]
        %v1601 = vld [vmem:[%s376 + $0x8] sm:$0xf]
        %v1602 = vld [vmem:[%s376 + $0xc] sm:$0xf]
        %v1603 = vld [vmem:[%s376 + $0x10] sm:$0xf]
        %v1604 = vld [vmem:[%s376 + $0x14] sm:$0xf]
        %v1605 = vld [vmem:[%s376 + $0x18] sm:$0xf]
        %v1606 = vld [vmem:[%s376 + $0x1c] sm:$0xf]
        %v1607 = vld [vmem:[%s376 + $0x20] sm:$0xf]
        %v1608 = vld [vmem:[%s376 + $0x24] sm:$0xf]
        %v1609 = vld [vmem:[%s376 + $0x28] sm:$0xf]
        %v1610 = vld [vmem:[%s376 + $0x2c] sm:$0xf]
        %v1611 = vld [vmem:[%s376 + $0x30] sm:$0xf]
        %v1612 = vld [vmem:[%s376 + $0x34] sm:$0xf]
        %v1613 = vld [vmem:[%s376 + $0x38] sm:$0xf]
        %v1614 = vld [vmem:[%s376 + $0x3c] sm:$0xf]
        %v1615 = vld [vmem:[%s376 + $0x40] sm:$0xf]
        %v1616 = vld [vmem:[%s376 + $0x44] sm:$0xf]
        %v1617 = vld [vmem:[%s376 + $0x48] sm:$0xf]
        %v1618 = vld [vmem:[%s376 + $0x4c] sm:$0xf]
        %v1619 = vld [vmem:[%s376 + $0x50] sm:$0xf]
        %v1620 = vld [vmem:[%s376 + $0x54] sm:$0xf]
        %v1621 = vld [vmem:[%s376 + $0x58] sm:$0xf]
        %v1622 = vld [vmem:[%s376 + $0x5c] sm:$0xf]
        %v1623 = vld [vmem:[%s376 + $0x60] sm:$0xf]
        %v1624 = vld [vmem:[%s376 + $0x64] sm:$0xf]
        %v1625 = vld [vmem:[%s376 + $0x68] sm:$0xf]
        %v1626 = vld [vmem:[%s376 + $0x6c] sm:$0xf]
        %v1627 = vld [vmem:[%s376 + $0x70] sm:$0xf]
        %v1628 = vld [vmem:[%s376 + $0x74] sm:$0xf]
        %v1629 = vld [vmem:[%s376 + $0x78] sm:$0xf]
        %v1630 = vld [vmem:[%s376 + $0x7c] sm:$0xf]
        %v1631 = vld [vmem:[%s376 + $0x80] sm:$0xf]
        %v1632 = vld [vmem:[%s376 + $0x84] sm:$0xf]
        %v1633 = vld [vmem:[%s376 + $0x88] sm:$0xf]
        %v1634 = vld [vmem:[%s376 + $0x8c] sm:$0xf]
        %v1635 = vld [vmem:[%s376 + $0x90] sm:$0xf]
        %v1636 = vld [vmem:[%s376 + $0x94] sm:$0xf]
        %v1637 = vld [vmem:[%s376 + $0x98] sm:$0xf]
        %v1638 = vld [vmem:[%s376 + $0x9c] sm:$0xf]
        %v1639 = vld [vmem:[%s376 + $0xa0] sm:$0xf]
        %v1640 = vld [vmem:[%s376 + $0xa4] sm:$0xf]
        %v1641 = vld [vmem:[%s376 + $0xa8] sm:$0xf]
        %v1642 = vld [vmem:[%s376 + $0xac] sm:$0xf]
        %v1643 = vld [vmem:[%s376 + $0xb0] sm:$0xf]
        %v1644 = vld [vmem:[%s376 + $0xb4] sm:$0xf]
        %v1645 = vld [vmem:[%s376 + $0xb8] sm:$0xf]
        %v1646 = vld [vmem:[%s376 + $0xbc] sm:$0xf]
        %v1647 = vld [vmem:[%s376 + $0xc0] sm:$0xf]
        %v1648 = vld [vmem:[%s376 + $0xc4] sm:$0xf]
        %v1649 = vld [vmem:[%s376 + $0xc8] sm:$0xf]
        %v1650 = vld [vmem:[%s376 + $0xcc] sm:$0xf]
        %v1651 = vld [vmem:[%s376 + $0xd0] sm:$0xf]
        %v1652 = vld [vmem:[%s376 + $0xd4] sm:$0xf]
        %v1653 = vld [vmem:[%s376 + $0xd8] sm:$0xf]
        %v1654 = vld [vmem:[%s376 + $0xdc] sm:$0xf]
        %v1655 = vld [vmem:[%s376 + $0xe0] sm:$0xf]
        %v1656 = vld [vmem:[%s376 + $0xe4] sm:$0xf]
        %v1657 = vld [vmem:[%s376 + $0xe8] sm:$0xf]
        %v1658 = vld [vmem:[%s376 + $0xec] sm:$0xf]
        %v1659 = vld [vmem:[%s376 + $0xf0] sm:$0xf]
        %v1660 = vld [vmem:[%s376 + $0xf4] sm:$0xf]
        %v1661 = vld [vmem:[%s376 + $0xf8] sm:$0xf]
        %v1662 = vld [vmem:[%s376 + $0xfc] sm:$0xf]
        %v1663 = vld [vmem:[%s376 + $0x100] sm:$0xf]
        %v1664 = vld [vmem:[%s376 + $0x104] sm:$0xf]
        %v1665 = vld [vmem:[%s376 + $0x108] sm:$0xf]
        %v1666 = vld [vmem:[%s376 + $0x10c] sm:$0xf]
        %v1667 = vld [vmem:[%s376 + $0x110] sm:$0xf]
        %v1668 = vld [vmem:[%s376 + $0x114] sm:$0xf]
        %v1669 = vld [vmem:[%s376 + $0x118] sm:$0xf]
        %v1670 = vld [vmem:[%s376 + $0x11c] sm:$0xf]
        %v1671 = vld [vmem:[%s376 + $0x120] sm:$0xf]
        %v1672 = vld [vmem:[%s376 + $0x124] sm:$0xf]
        %v1673 = vld [vmem:[%s376 + $0x128] sm:$0xf]
        %v1674 = vld [vmem:[%s376 + $0x12c] sm:$0xf]
        %v1675 = vld [vmem:[%s376 + $0x130] sm:$0xf]
        %v1676 = vld [vmem:[%s376 + $0x134] sm:$0xf]
        %v1677 = vld [vmem:[%s376 + $0x138] sm:$0xf]
        %v1678 = vld [vmem:[%s376 + $0x13c] sm:$0xf]
        %v1679 = vld [vmem:[%s376 + $0x140] sm:$0xf]
        %v1680 = vld [vmem:[%s376 + $0x144] sm:$0xf]
        %v1681 = vld [vmem:[%s376 + $0x148] sm:$0xf]
        %v1682 = vld [vmem:[%s376 + $0x14c] sm:$0xf]
        %v1683 = vld [vmem:[%s376 + $0x150] sm:$0xf]
        %v1684 = vld [vmem:[%s376 + $0x154] sm:$0xf]
        %v1685 = vld [vmem:[%s376 + $0x158] sm:$0xf]
        %v1686 = vld [vmem:[%s376 + $0x15c] sm:$0xf]
        %v1687 = vld [vmem:[%s376 + $0x160] sm:$0xf]
        %v1688 = vld [vmem:[%s376 + $0x164] sm:$0xf]
        %v1689 = vld [vmem:[%s376 + $0x168] sm:$0xf]
        %v1690 = vld [vmem:[%s376 + $0x16c] sm:$0xf]
        %v1691 = vld [vmem:[%s376 + $0x170] sm:$0xf]
        %v1692 = vld [vmem:[%s376 + $0x174] sm:$0xf]
        %v1693 = vld [vmem:[%s376 + $0x178] sm:$0xf]
        %v1694 = vld [vmem:[%s376 + $0x17c] sm:$0xf]
        %v1695 = vld [vmem:[%s376 + $0x180] sm:$0xf]
        %v1696 = vld [vmem:[%s376 + $0x184] sm:$0xf]
        %v1697 = vld [vmem:[%s376 + $0x188] sm:$0xf]
        %v1698 = vld [vmem:[%s376 + $0x18c] sm:$0xf]
        %v1699 = vld [vmem:[%s376 + $0x190] sm:$0xf]
        %v1700 = vld [vmem:[%s376 + $0x194] sm:$0xf]
        %v1701 = vld [vmem:[%s376 + $0x198] sm:$0xf]
        %v1702 = vld [vmem:[%s376 + $0x19c] sm:$0xf]
        %v1703 = vld [vmem:[%s376 + $0x1a0] sm:$0xf]
        %v1704 = vld [vmem:[%s376 + $0x1a4] sm:$0xf]
        %v1705 = vld [vmem:[%s376 + $0x1a8] sm:$0xf]
        %v1706 = vld [vmem:[%s376 + $0x1ac] sm:$0xf]
        %v1707 = vld [vmem:[%s376 + $0x1b0] sm:$0xf]
        %v1708 = vld [vmem:[%s376 + $0x1b4] sm:$0xf]
        %v1709 = vld [vmem:[%s376 + $0x1b8] sm:$0xf]
        %v1710 = vld [vmem:[%s376 + $0x1bc] sm:$0xf]
        %v1711 = vld [vmem:[%s376 + $0x1c0] sm:$0xf]
        %v1712 = vld [vmem:[%s376 + $0x1c4] sm:$0xf]
        %v1713 = vld [vmem:[%s376 + $0x1c8] sm:$0xf]
        %v1714 = vld [vmem:[%s376 + $0x1cc] sm:$0xf]
        %v1715 = vld [vmem:[%s376 + $0x1d0] sm:$0xf]
        %v1716 = vld [vmem:[%s376 + $0x1d4] sm:$0xf]
        %v1717 = vld [vmem:[%s376 + $0x1d8] sm:$0xf]
        %v1718 = vld [vmem:[%s376 + $0x1dc] sm:$0xf]
        %v1719 = vld [vmem:[%s376 + $0x1e0] sm:$0xf]
        %v1720 = vld [vmem:[%s376 + $0x1e4] sm:$0xf]
        %v1721 = vld [vmem:[%s376 + $0x1e8] sm:$0xf]
        %v1722 = vld [vmem:[%s376 + $0x1ec] sm:$0xf]
        %v1723 = vld [vmem:[%s376 + $0x1f0] sm:$0xf]
        %v1724 = vld [vmem:[%s376 + $0x1f4] sm:$0xf]
        %v1725 = vld [vmem:[%s376 + $0x1f8] sm:$0xf]
        %v1726 = vld [vmem:[%s376 + $0x1fc] sm:$0xf]
        %v1855 = vunpack.c.l.b16 %v1599
        %v1856 = vunpack.c.l.b16 %v1600
        %v1857 = vunpack.c.l.b16 %v1601
        %v1858 = vunpack.c.l.b16 %v1602
        %v1859 = vunpack.c.l.b16 %v1603
        %v1860 = vunpack.c.l.b16 %v1604
        %v1861 = vunpack.c.l.b16 %v1605
        %v1862 = vunpack.c.l.b16 %v1606
        %v1863 = vunpack.c.l.b16 %v1607
        %v1864 = vunpack.c.l.b16 %v1608
        %v1865 = vunpack.c.l.b16 %v1609
        %v1866 = vunpack.c.l.b16 %v1610
        %v1867 = vunpack.c.l.b16 %v1611
        %v1868 = vunpack.c.l.b16 %v1612
        %v1869 = vunpack.c.l.b16 %v1613
        %v1870 = vunpack.c.l.b16 %v1614
        %v1871 = vunpack.c.l.b16 %v1615
        %v1872 = vunpack.c.l.b16 %v1616
        %v1873 = vunpack.c.l.b16 %v1617
        %v1874 = vunpack.c.l.b16 %v1618
        %v1875 = vunpack.c.l.b16 %v1619
        %v1876 = vunpack.c.l.b16 %v1620
        %v1877 = vunpack.c.l.b16 %v1621
        %v1878 = vunpack.c.l.b16 %v1622
        %v1879 = vunpack.c.l.b16 %v1623
        %v1880 = vunpack.c.l.b16 %v1624
        %v1881 = vunpack.c.l.b16 %v1625
        %v1882 = vunpack.c.l.b16 %v1626
        %v1883 = vunpack.c.l.b16 %v1627
        %v1884 = vunpack.c.l.b16 %v1628
        %v1885 = vunpack.c.l.b16 %v1629
        %v1886 = vunpack.c.l.b16 %v1630
        %v1887 = vunpack.c.l.b16 %v1631
        %v1888 = vunpack.c.l.b16 %v1632
        %v1889 = vunpack.c.l.b16 %v1633
        %v1890 = vunpack.c.l.b16 %v1634
        %v1891 = vunpack.c.l.b16 %v1635
        %v1892 = vunpack.c.l.b16 %v1636
        %v1893 = vunpack.c.l.b16 %v1637
        %v1894 = vunpack.c.l.b16 %v1638
        %v1895 = vunpack.c.l.b16 %v1639
        %v1896 = vunpack.c.l.b16 %v1640
        %v1897 = vunpack.c.l.b16 %v1641
        %v1898 = vunpack.c.l.b16 %v1642
        %v1899 = vunpack.c.l.b16 %v1643
        %v1900 = vunpack.c.l.b16 %v1644
        %v1901 = vunpack.c.l.b16 %v1645
        %v1902 = vunpack.c.l.b16 %v1646
        %v1903 = vunpack.c.l.b16 %v1647
        %v1904 = vunpack.c.l.b16 %v1648
        %v1905 = vunpack.c.l.b16 %v1649
        %v1906 = vunpack.c.l.b16 %v1650
        %v1907 = vunpack.c.l.b16 %v1651
        %v1908 = vunpack.c.l.b16 %v1652
        %v1909 = vunpack.c.l.b16 %v1653
        %v1910 = vunpack.c.l.b16 %v1654
        %v1911 = vunpack.c.l.b16 %v1655
        %v1912 = vunpack.c.l.b16 %v1656
        %v1913 = vunpack.c.l.b16 %v1657
        %v1914 = vunpack.c.l.b16 %v1658
        %v1915 = vunpack.c.l.b16 %v1659
        %v1916 = vunpack.c.l.b16 %v1660
        %v1917 = vunpack.c.l.b16 %v1661
        %v1918 = vunpack.c.l.b16 %v1662
        %v1919 = vunpack.c.l.b16 %v1663
        %v1920 = vunpack.c.l.b16 %v1664
        %v1921 = vunpack.c.l.b16 %v1665
        %v1922 = vunpack.c.l.b16 %v1666
        %v1923 = vunpack.c.l.b16 %v1667
        %v1924 = vunpack.c.l.b16 %v1668
        %v1925 = vunpack.c.l.b16 %v1669
        %v1926 = vunpack.c.l.b16 %v1670
        %v1927 = vunpack.c.l.b16 %v1671
        %v1928 = vunpack.c.l.b16 %v1672
        %v1929 = vunpack.c.l.b16 %v1673
        %v1930 = vunpack.c.l.b16 %v1674
        %v1931 = vunpack.c.l.b16 %v1675
        %v1932 = vunpack.c.l.b16 %v1676
        %v1933 = vunpack.c.l.b16 %v1677
        %v1934 = vunpack.c.l.b16 %v1678
        %v1935 = vunpack.c.l.b16 %v1679
        %v1936 = vunpack.c.l.b16 %v1680
        %v1937 = vunpack.c.l.b16 %v1681
        %v1938 = vunpack.c.l.b16 %v1682
        %v1939 = vunpack.c.l.b16 %v1683
        %v1940 = vunpack.c.l.b16 %v1684
        %v1941 = vunpack.c.l.b16 %v1685
        %v1942 = vunpack.c.l.b16 %v1686
        %v1943 = vunpack.c.l.b16 %v1687
        %v1944 = vunpack.c.l.b16 %v1688
        %v1945 = vunpack.c.l.b16 %v1689
        %v1946 = vunpack.c.l.b16 %v1690
        %v1947 = vunpack.c.l.b16 %v1691
        %v1948 = vunpack.c.l.b16 %v1692
        %v1949 = vunpack.c.l.b16 %v1693
        %v1950 = vunpack.c.l.b16 %v1694
        %v1951 = vunpack.c.l.b16 %v1695
        %v1952 = vunpack.c.l.b16 %v1696
        %v1953 = vunpack.c.l.b16 %v1697
        %v1954 = vunpack.c.l.b16 %v1698
        %v1955 = vunpack.c.l.b16 %v1699
        %v1956 = vunpack.c.l.b16 %v1700
        %v1957 = vunpack.c.l.b16 %v1701
        %v1958 = vunpack.c.l.b16 %v1702
        %v1959 = vunpack.c.l.b16 %v1703
        %v1960 = vunpack.c.l.b16 %v1704
        %v1961 = vunpack.c.l.b16 %v1705
        %v1962 = vunpack.c.l.b16 %v1706
        %v1963 = vunpack.c.l.b16 %v1707
        %v1964 = vunpack.c.l.b16 %v1708
        %v1965 = vunpack.c.l.b16 %v1709
        %v1966 = vunpack.c.l.b16 %v1710
        %v1967 = vunpack.c.l.b16 %v1711
        %v1968 = vunpack.c.l.b16 %v1712
        %v1969 = vunpack.c.l.b16 %v1713
        %v1970 = vunpack.c.l.b16 %v1714
        %v1971 = vunpack.c.l.b16 %v1715
        %v1972 = vunpack.c.l.b16 %v1716
        %v1973 = vunpack.c.l.b16 %v1717
        %v1974 = vunpack.c.l.b16 %v1718
        %v1975 = vunpack.c.l.b16 %v1719
        %v1976 = vunpack.c.l.b16 %v1720
        %v1977 = vunpack.c.l.b16 %v1721
        %v1978 = vunpack.c.l.b16 %v1722
        %v1979 = vunpack.c.l.b16 %v1723
        %v1980 = vunpack.c.l.b16 %v1724
        %v1981 = vunpack.c.l.b16 %v1725
        %v1982 = vunpack.c.l.b16 %v1726
        %v1983 = vpack.c.b16 %v1856, %v1855
        %v1984 = vpack.c.b16 %v1858, %v1857
        %v1985 = vpack.c.b16 %v1860, %v1859
        %v1986 = vpack.c.b16 %v1862, %v1861
        %v1987 = vpack.c.b16 %v1864, %v1863
        %v1988 = vpack.c.b16 %v1866, %v1865
        %v1989 = vpack.c.b16 %v1868, %v1867
        %v1990 = vpack.c.b16 %v1870, %v1869
        %v1991 = vpack.c.b16 %v1872, %v1871
        %v1992 = vpack.c.b16 %v1874, %v1873
        %v1993 = vpack.c.b16 %v1876, %v1875
        %v1994 = vpack.c.b16 %v1878, %v1877
        %v1995 = vpack.c.b16 %v1880, %v1879
        %v1996 = vpack.c.b16 %v1882, %v1881
        %v1997 = vpack.c.b16 %v1884, %v1883
        %v1998 = vpack.c.b16 %v1886, %v1885
        %v1999 = vpack.c.b16 %v1888, %v1887
        %v2000 = vpack.c.b16 %v1890, %v1889
        %v2001 = vpack.c.b16 %v1892, %v1891
        %v2002 = vpack.c.b16 %v1894, %v1893
        %v2003 = vpack.c.b16 %v1896, %v1895
        %v2004 = vpack.c.b16 %v1898, %v1897
        %v2005 = vpack.c.b16 %v1900, %v1899
        %v2006 = vpack.c.b16 %v1902, %v1901
        %v2007 = vpack.c.b16 %v1904, %v1903
        %v2008 = vpack.c.b16 %v1906, %v1905
        %v2009 = vpack.c.b16 %v1908, %v1907
        %v2010 = vpack.c.b16 %v1910, %v1909
        %v2011 = vpack.c.b16 %v1912, %v1911
        %v2012 = vpack.c.b16 %v1914, %v1913
        %v2013 = vpack.c.b16 %v1916, %v1915
        %v2014 = vpack.c.b16 %v1918, %v1917
        %v2015 = vpack.c.b16 %v1920, %v1919
        %v2016 = vpack.c.b16 %v1922, %v1921
        %v2017 = vpack.c.b16 %v1924, %v1923
        %v2018 = vpack.c.b16 %v1926, %v1925
        %v2019 = vpack.c.b16 %v1928, %v1927
        %v2020 = vpack.c.b16 %v1930, %v1929
        %v2021 = vpack.c.b16 %v1932, %v1931
        %v2022 = vpack.c.b16 %v1934, %v1933
        %v2023 = vpack.c.b16 %v1936, %v1935
        %v2024 = vpack.c.b16 %v1938, %v1937
        %v2025 = vpack.c.b16 %v1940, %v1939
        %v2026 = vpack.c.b16 %v1942, %v1941
        %v2027 = vpack.c.b16 %v1944, %v1943
        %v2028 = vpack.c.b16 %v1946, %v1945
        %v2029 = vpack.c.b16 %v1948, %v1947
        %v2030 = vpack.c.b16 %v1950, %v1949
        %v2031 = vpack.c.b16 %v1952, %v1951
        %v2032 = vpack.c.b16 %v1954, %v1953
        %v2033 = vpack.c.b16 %v1956, %v1955
        %v2034 = vpack.c.b16 %v1958, %v1957
        %v2035 = vpack.c.b16 %v1960, %v1959
        %v2036 = vpack.c.b16 %v1962, %v1961
        %v2037 = vpack.c.b16 %v1964, %v1963
        %v2038 = vpack.c.b16 %v1966, %v1965
        %v2039 = vpack.c.b16 %v1968, %v1967
        %v2040 = vpack.c.b16 %v1970, %v1969
        %v2041 = vpack.c.b16 %v1972, %v1971
        %v2042 = vpack.c.b16 %v1974, %v1973
        %v2043 = vpack.c.b16 %v1976, %v1975
        %v2044 = vpack.c.b16 %v1978, %v1977
        %v2045 = vpack.c.b16 %v1980, %v1979
        %v2046 = vpack.c.b16 %v1982, %v1981
        %2111 = vmatpush.bf16.msra.mxu0 %v1990
        %2112 = vmatpush.bf16.msra.mxu0 %v1989
        %2113 = vmatpush.bf16.msra.mxu0 %v1988
        %2114 = vmatpush.bf16.msra.mxu0 %v1987
        %2115 = vmatpush.bf16.msra.mxu0 %v1986
        %2116 = vmatpush.bf16.msra.mxu0 %v1985
        %2117 = vmatpush.bf16.msra.mxu0 %v1984
        %2118 = vmatpush.bf16.msra.mxu0 %v1983
        %2119 = vmatmul.bf16.gmra.mxu0 %v1591
        %v2120 = vpop.f32.mrf.mxu0
        %v2121 = vadd.f32 0.0, %v2120
        %v2122 = vpop.f32.mrf.mxu0
        %2123 = vdwg.mxu0
        %2124 = vmatpush.bf16.msra.mxu0 %v1998
        %2125 = vmatpush.bf16.msra.mxu0 %v1997
        %2126 = vmatpush.bf16.msra.mxu0 %v1996
        %2127 = vmatpush.bf16.msra.mxu0 %v1995
        %2128 = vmatpush.bf16.msra.mxu0 %v1994
        %2129 = vmatpush.bf16.msra.mxu0 %v1993
        %2130 = vmatpush.bf16.msra.mxu0 %v1992
        %2131 = vmatpush.bf16.msra.mxu0 %v1991
        %2132 = vmatmul.bf16.gmra.mxu0 %v1592
        %v2133 = vpop.f32.mrf.mxu0
        %v2134 = vadd.f32 %v2121, %v2133
        %v2135 = vpop.f32.mrf.mxu0
        %2136 = vdwg.mxu0
        %2137 = vmatpush.bf16.msra.mxu0 %v2006
        %2138 = vmatpush.bf16.msra.mxu0 %v2005
        %2139 = vmatpush.bf16.msra.mxu0 %v2004
        %2140 = vmatpush.bf16.msra.mxu0 %v2003
        %2141 = vmatpush.bf16.msra.mxu0 %v2002
        %2142 = vmatpush.bf16.msra.mxu0 %v2001
        %2143 = vmatpush.bf16.msra.mxu0 %v2000
        %2144 = vmatpush.bf16.msra.mxu0 %v1999
        %2145 = vmatmul.bf16.gmra.mxu0 %v1593
        %v2146 = vpop.f32.mrf.mxu0
        %v2147 = vadd.f32 %v2134, %v2146
        %v2148 = vpop.f32.mrf.mxu0
        %2149 = vdwg.mxu0
        %2150 = vmatpush.bf16.msra.mxu0 %v2014
        %2151 = vmatpush.bf16.msra.mxu0 %v2013
        %2152 = vmatpush.bf16.msra.mxu0 %v2012
        %2153 = vmatpush.bf16.msra.mxu0 %v2011
        %2154 = vmatpush.bf16.msra.mxu0 %v2010
        %2155 = vmatpush.bf16.msra.mxu0 %v2009
        %2156 = vmatpush.bf16.msra.mxu0 %v2008
        %2157 = vmatpush.bf16.msra.mxu0 %v2007
        %2158 = vmatmul.bf16.gmra.mxu0 %v1594
        %v2159 = vpop.f32.mrf.mxu0
        %v2160 = vadd.f32 %v2147, %v2159
        %v2161 = vpop.f32.mrf.mxu0
        %2162 = vdwg.mxu0
        %2163 = vmatpush.bf16.msra.mxu0 %v2022
        %2164 = vmatpush.bf16.msra.mxu0 %v2021
        %2165 = vmatpush.bf16.msra.mxu0 %v2020
        %2166 = vmatpush.bf16.msra.mxu0 %v2019
        %2167 = vmatpush.bf16.msra.mxu0 %v2018
        %2168 = vmatpush.bf16.msra.mxu0 %v2017
        %2169 = vmatpush.bf16.msra.mxu0 %v2016
        %2170 = vmatpush.bf16.msra.mxu0 %v2015
        %2171 = vmatmul.bf16.gmra.mxu0 %v1595
        %v2172 = vpop.f32.mrf.mxu0
        %v2173 = vadd.f32 %v2160, %v2172
        %v2174 = vpop.f32.mrf.mxu0
        %2175 = vdwg.mxu0
        %2176 = vmatpush.bf16.msra.mxu0 %v2030
        %2177 = vmatpush.bf16.msra.mxu0 %v2029
        %2178 = vmatpush.bf16.msra.mxu0 %v2028
        %2179 = vmatpush.bf16.msra.mxu0 %v2027
        %2180 = vmatpush.bf16.msra.mxu0 %v2026
        %2181 = vmatpush.bf16.msra.mxu0 %v2025
        %2182 = vmatpush.bf16.msra.mxu0 %v2024
        %2183 = vmatpush.bf16.msra.mxu0 %v2023
        %2184 = vmatmul.bf16.gmra.mxu0 %v1596
        %v2185 = vpop.f32.mrf.mxu0
        %v2186 = vadd.f32 %v2173, %v2185
        %v2187 = vpop.f32.mrf.mxu0
        %2188 = vdwg.mxu0
        %2189 = vmatpush.bf16.msra.mxu0 %v2038
        %2190 = vmatpush.bf16.msra.mxu0 %v2037
        %2191 = vmatpush.bf16.msra.mxu0 %v2036
        %2192 = vmatpush.bf16.msra.mxu0 %v2035
        %2193 = vmatpush.bf16.msra.mxu0 %v2034
        %2194 = vmatpush.bf16.msra.mxu0 %v2033
        %2195 = vmatpush.bf16.msra.mxu0 %v2032
        %2196 = vmatpush.bf16.msra.mxu0 %v2031
        %2197 = vmatmul.bf16.gmra.mxu0 %v1597
        %v2198 = vpop.f32.mrf.mxu0
        %v2199 = vadd.f32 %v2186, %v2198
        %v2200 = vpop.f32.mrf.mxu0
        %2201 = vdwg.mxu0
        %2202 = vmatpush.bf16.msra.mxu0 %v2046
        %2203 = vmatpush.bf16.msra.mxu0 %v2045
        %2204 = vmatpush.bf16.msra.mxu0 %v2044
        %2205 = vmatpush.bf16.msra.mxu0 %v2043
        %2206 = vmatpush.bf16.msra.mxu0 %v2042
        %2207 = vmatpush.bf16.msra.mxu0 %v2041
        %2208 = vmatpush.bf16.msra.mxu0 %v2040
        %2209 = vmatpush.bf16.msra.mxu0 %v2039
        %2210 = vmatmul.bf16.gmra.mxu0 %v1598
        %v2211 = vpop.f32.mrf.mxu0
        %v2212 = vadd.f32 %v2199, %v2211
        %v2213 = vpop.f32.mrf.mxu0
        %2214 = vdwg.mxu0
        %v2215 = vadd.f32 %v1569, %v2212
        %vm2216 = vcmask 123904
        %2217 = vst.msk [vmem:[#allocation2] sm:$0x3] %vm2216, %v2215
        %p2218 = scmp.eq.s32.totalorder %s23, 1
        // Predicated region
        $region61: #{pair_img_classifier_deepface.5} parent=51 // pred_check
          %p2219 = pneg %p2218
        $region62: #{pair_img_classifier_deepface.5} parent=51 // pred_check_branch
          %2221 = sbr.rel (%p2219) target = $region64
        $region63: #{pair_img_classifier_deepface.5} parent=51 // pred_region
          %v2222 = vld [vmem:[#allocation2] sm:$0x3]
          %v2223 = vld [vmem:[%s5] sm:$0x1]
          %v2225 = vperm.slane %v2223, 0
          %v2227 = vadd.f32 %v2222, %v2225
          %v2228 = vpack.c.bf16 %v2227, %v2227
          %v2229 = vld [vmem:[%s6] sm:$0xf]
          %v2230 = vld [vmem:[%s6 + $0x4] sm:$0xf]
          %v2231 = vld [vmem:[%s7] sm:$0x1]
          %v2233 = vperm.slane %v2231, 0
          %v2237 = vunpack.c.l.b16 %v2229
          %v2238 = vunpack.c.l.b16 %v2230
          %v2239 = vpack.c.b16 %v2238, %v2237
          %vm2241 = vcmask 130048
          %v2243 = vsel %vm2241, %v2228, 0
          %2245 = vmatpush.bf16.msra.mxu0 0
          %2246 = vmatpush.bf16.msra.mxu0 0
          %2247 = vmatpush.bf16.msra.mxu0 0
          %2248 = vmatpush.bf16.msra.mxu0 0
          %2249 = vmatpush.bf16.msra.mxu0 0
          %2250 = vmatpush.bf16.msra.mxu0 0
          %2251 = vmatpush.bf16.msra.mxu0 0
          %2252 = vmatpush.bf16.msra.mxu0 %v2239
          %2253 = vmatmul.bf16.gmra.mxu0 %v2243
          %v2254 = vpop.f32.mrf.mxu0
          %v2255 = vadd.f32 %v2233, %v2254
          %v2256 = vpop.f32.mrf.mxu0
          %2257 = vdwg.mxu0
          %v2258 = vxor.u32 %v2255, 2147483648
          %v2259 = vmul.f32 %v2258, 1.442695
          %v2260 = vpow.pop %v2259
          %v2261 = vadd.f32 %v2260, 1.0
          %v2262 = vrcp.pop %v2261
          %v2263 = vmul.f32 %v2261, %v2262
          %v2264 = vsub.f32 1.0, %v2263
          %v2265 = vmul.f32 %v2262, %v2264
          %v2266 = vadd.f32 %v2262, %v2265
          %vm2267 = vweird.f32 %v2261
          %vm2268 = vweird.f32 %v2262
          %vm2269 = vmor %vm2267, %vm2268
          %v2270 = vsel %vm2269, %v2262, %v2266
          %v2271 = vand.u32 2147483647, %v2261
          %vm2272 = vcmp.eq.f32.partialorder %v2271, 8.507059e+37
          %v2273 = vand.u32 %v2261, 2147483648
          %v2274 = vor.u32 1.1754944e-38, %v2273
          %v2275 = vsel %vm2272, %v2274, %v2270
          %v2276 = vmul.f32 1.0, %v2275
          %vm2277 = vcmask 9216
          %2278 = vst.msk [vmem:[#allocation6] sm:$0x3] %vm2277, %v2276
        $region64: #{pair_img_classifier_deepface.5} parent=51 // pred_fallthru
          _
        // Predicated region
        $region65: #{pair_img_classifier_deepface.5} parent=51 // pred_check
          %p2279 = pneg %p224
        $region66: #{pair_img_classifier_deepface.5} parent=51 // pred_check_branch
          %2281 = sbr.rel (%p2279) target = $region68
        $region67: #{pair_img_classifier_deepface.5} parent=51 // pred_region
          %2283 = vsyncadd [#allocation5], 0
          %s2285 = sshll.u32 [#allocation6], 4
          %s2286 = int_to_ptr.vmem [resolvable:$true] %s2285
          %s2287 = sshll.u32 %s8, 4
          %s2288 = int_to_ptr.hbm [resolvable:$true] %s2287
          %2290 = dma.vmem_to_hbm [thread:$0]  %s2286, 32, %s2288, [#allocation5]
        $region68: #{pair_img_classifier_deepface.5} parent=51 // pred_fallthru
          _
        // Predicated region
        $region69: #{pair_img_classifier_deepface.5} parent=51 // pred_check
          %p2291 = pneg %p224
        $region70: #{pair_img_classifier_deepface.5} parent=51 // pred_check_branch
          %2293 = sbr.rel (%p2291) target = $region72
        $region71: #{pair_img_classifier_deepface.5} parent=51 // pred_region
          %2295 = dma.done [#allocation5], 32
        $region72: #{pair_img_classifier_deepface.5} parent=51 // pred_fallthru
          _
      $region52: #{pair_img_classifier_deepface.5} parent=5 // pred_fallthru
        _
      %p2296 = scmp.le.s32.totalorder 2, %s18
      // Predicated region
      $region73: #{pair_img_classifier_deepface.5} parent=5 // pred_check
        %p2297 = pneg %p2296
      $region74: #{pair_img_classifier_deepface.5} parent=5 // pred_check_branch
        %2299 = sbr.rel (%p2297) target = $region76
      $region75: #{pair_img_classifier_deepface.5} parent=5 // pred_region
        %s2300 = ssub.s32 %s18, 2
      $region76: #{pair_img_classifier_deepface.5} parent=5 // pred_fallthru
        _
    $region6: #{pair_img_classifier_deepface.5} parent=1 // loop_footer
      %s22 = sadd.s32 1, %s18
    $region7: #{pair_img_classifier_deepface.5} parent=1 // loop_footer_branch
      %17 = sbr.rel target = $region3
    $region8: #{pair_img_classifier_deepface.5} parent=1 // loop_exit
      _
    %2301 = vsyncpa [#allocation4], 1
    %s2302 = scalar_lea.sflag [#allocation4], 1
    %2303 = vsyncpa %s2302, 1
    %2304 = vsyncpa [#allocation5], 1
    %s2305 = scalar_lea.sflag [#allocation5], 1
    %2306 = vsyncpa %s2305, 1

</llo_original>
